<compile_context>
chip_gen: v6e
topology: v6e:2x2x1
jax: 0.10.0
libtpu: 0.0.40
codegen_flags: <defaults>
</compile_context>

<pallas_src>
import jax
import jax.numpy as jnp
from jax.experimental import pallas as pl
from jax.experimental.pallas import tpu as pltpu

LATENT_DIM = 2
NUM_CLASSES = 20
HIDDEN = (512, 256)
IN_DIM = 784
IN_PAD = 896                       # 7 * 128: lane-dense x / recon path
STATS_W = 4 * LATENT_DIM           # [mu(2) | log_var(2) | z(2) | pad(2)]


def _round_up(n, m):
    return ((n + m - 1) // m) * m


# ----- packed-bias layout: every segment starts on a 128-lane boundary --------
_BIAS_SEGMENTS = (
    ("eb1", HIDDEN[0]),            # 512
    ("eb2", HIDDEN[1]),            # 256
    ("eb3", 2 * LATENT_DIM),       # 4   (fused mu|log_var bias)
    ("cb1", 128),
    ("db1", HIDDEN[1]),            # 256 (includes folded cb2 @ dw1b)
    ("db2", HIDDEN[0]),            # 512
    ("db3", IN_PAD),               # 896 (zero-padded past 784)
)
_BIAS_OFF = {}
_off = 0
for _name, _w in _BIAS_SEGMENTS:
    _BIAS_OFF[_name] = (_off, _w)
    _off += _round_up(_w, 128)
_BIAS_TOTAL = _off                 # 2688


# ------------------------------ kernel ----------------------------------------
def _vae_kernel(x_ref, ew1, ew2, ew3, cw1, cdw, dw1a, dw2, dw3, bias_ref,
                recon_ref, stats_ref):
    f32, bf16 = jnp.float32, jnp.bfloat16

    def bias(name):
        off, w = _BIAS_OFF[name]
        return bias_ref[:, off:off + w]            # static, lane-aligned ref slice

    # eps rides in columns 784:786 of the padded x tile (f32, exact).
    eps = x_ref[:, IN_DIM:IN_DIM + LATENT_DIM]     # (tb, 2)

    # ---- encoder (bf16 weights + activations, f32 MXU accumulate) ----
    x = x_ref[...].astype(bf16)                    # (tb, 896); pad cols hit zero rows of ew1
    h = jnp.maximum(
        (jnp.dot(x, ew1[...], preferred_element_type=f32) + bias("eb1")).astype(bf16), 0.0)
    h = jnp.maximum(
        (jnp.dot(h, ew2[...], preferred_element_type=f32) + bias("eb2")).astype(bf16), 0.0)
    # fused mu|log_var projection: one (256,4) matmul
    mulv = jnp.dot(h, ew3[...], preferred_element_type=f32) + bias("eb3")     # (tb, 4) f32
    mu = mulv[:, :LATENT_DIM]
    lv = mulv[:, LATENT_DIM:]

    # ---- reparameterize ----
    z = mu + eps * jnp.exp(0.5 * lv)               # (tb, 2) f32
    indep_z = z[:, 0:1]                            # -> decoder
    class_z = z[:, 1:2]                            # -> classifier

    # ---- classifier hidden (Linear(1,128) == broadcast outer product) ----
    ch = jnp.maximum((class_z * cw1[...] + bias("cb1")).astype(bf16), 0.0)    # (tb, 128)

    # ---- decoder; classifier head folded: cdw = cw2 @ dw1b, cb2@dw1b in db1 ----
    d = (indep_z * dw1a[...]
         + jnp.dot(ch, cdw[...], preferred_element_type=f32)
         + bias("db1"))
    d = jnp.maximum(d.astype(bf16), 0.0)                                      # (tb, 256)
    d = jnp.maximum(
        (jnp.dot(d, dw2[...], preferred_element_type=f32) + bias("db2")).astype(bf16), 0.0)
    logits = jnp.dot(d, dw3[...], preferred_element_type=f32) + bias("db3")   # (tb, 896)

    recon_ref[...] = jax.nn.sigmoid(logits)        # padded cols sliced off by wrapper

    # stats via static slices (no concat / relayout)
    stats_ref[:, :2 * LATENT_DIM] = mulv                       # [mu | log_var]
    stats_ref[:, 2 * LATENT_DIM:3 * LATENT_DIM] = z
    stats_ref[:, 3 * LATENT_DIM:] = jnp.zeros_like(z)          # keep pad deterministic


# ------------------------------ params ----------------------------------------
def _init_linear(key, fan_in, fan_out):
    """Deterministic PyTorch-style Linear init: U(-1/sqrt(fan_in), 1/sqrt(fan_in))."""
    kw, kb = jax.random.split(key)
    bound = 1.0 / jnp.sqrt(jnp.float32(fan_in))
    w = jax.random.uniform(kw, (fan_in, fan_out), jnp.float32, -bound, bound)
    b = jax.random.uniform(kb, (1, fan_out), jnp.float32, -bound, bound)
    return w, b


def make_params(key):
    """Raw f32 module parameters (exactly the PyTorch layer shapes)."""
    keys = jax.random.split(key, 7)
    ew1, eb1 = _init_linear(keys[0], IN_DIM, HIDDEN[0])
    ew2, eb2 = _init_linear(keys[1], HIDDEN[0], HIDDEN[1])
    ew3, eb3 = _init_linear(keys[2], HIDDEN[1], 2 * LATENT_DIM)   # [mu | log_var]
    cls_in = LATENT_DIM // 2
    cw1, cb1 = _init_linear(keys[3], cls_in, 128)
    cw2, cb2 = _init_linear(keys[4], 128, NUM_CLASSES)
    dec_in = LATENT_DIM - cls_in + NUM_CLASSES
    dw1, db1 = _init_linear(keys[5], dec_in, HIDDEN[1])
    k6a, k6b = jax.random.split(keys[6])
    dw2, db2 = _init_linear(k6a, HIDDEN[1], HIDDEN[0])
    dw3, db3 = _init_linear(k6b, HIDDEN[0], IN_DIM)
    return dict(ew1=ew1, eb1=eb1, ew2=ew2, eb2=eb2, ew3=ew3, eb3=eb3,
                cw1=cw1, cb1=cb1, cw2=cw2, cb2=cb2,
                dw1=dw1, db1=db1, dw2=dw2, db2=db2, dw3=dw3, db3=db3)


def pack_params(named):
    """Kernel weights (bf16, padded, classifier head folded) + packed f32 bias."""
    f32, bf16 = jnp.float32, jnp.bfloat16
    cls_in = LATENT_DIM // 2

    ew1 = jnp.zeros((IN_PAD, HIDDEN[0]), f32).at[:IN_DIM].set(named["ew1"]).astype(bf16)
    ew2 = named["ew2"].astype(bf16)
    ew3 = named["ew3"].astype(bf16)
    cw1 = named["cw1"].astype(f32)                                 # (1,128), elementwise use
    dw1a = named["dw1"][:cls_in, :].astype(f32)                    # (1,256), elementwise use
    dw1b = named["dw1"][cls_in:, :]                                # (20,256)
    cdw = jnp.dot(named["cw2"], dw1b).astype(bf16)                 # (128,256) folded head
    dw2 = named["dw2"].astype(bf16)
    dw3 = jnp.zeros((HIDDEN[0], IN_PAD), f32).at[:, :IN_DIM].set(named["dw3"]).astype(bf16)

    db1_eff = named["db1"] + jnp.dot(named["cb2"], dw1b)           # fold cb2 through dw1b
    db3_pad = jnp.zeros((1, IN_PAD), f32).at[:, :IN_DIM].set(named["db3"])

    bias_vals = dict(eb1=named["eb1"], eb2=named["eb2"], eb3=named["eb3"],
                     cb1=named["cb1"], db1=db1_eff, db2=named["db2"], db3=db3_pad)
    bias = jnp.zeros((1, _BIAS_TOTAL), f32)
    for name, _ in _BIAS_SEGMENTS:
        off, w = _BIAS_OFF[name]
        bias = bias.at[:, off:off + w].set(bias_vals[name].reshape(1, -1).astype(f32))

    return (ew1, ew2, ew3, cw1, cdw, dw1a, dw2, dw3, bias)


# ------------------------------ wrapper ----------------------------------------
def _choose_tile_b(B):
    cap = 512
    if B <= 128:
        return _round_up(max(B, 8), 8)            # tiny batches: no padding waste
    # >= 2 grid steps so the "parallel" batch axis shards across v7x's 2 TCs.
    nsteps = max(2, pl.cdiv(B, cap))
    per = pl.cdiv(B, nsteps)
    t128 = _round_up(per, 128)                    # MXU-aligned rows when cheap
    if t128 * nsteps - B <= max(B // 8, 64):
        return min(t128, cap)
    return _round_up(per, 8)                      # otherwise minimize batch padding


def vae_forward(x, eps, kernel_args, *, tile_b=None):
    """x: any shape reshapable to (-1, 784); eps: (B, latent_dim) standard normal."""
    x2 = jnp.reshape(x, (-1, IN_DIM)).astype(jnp.float32)
    eps2 = jnp.reshape(eps, (-1, LATENT_DIM)).astype(jnp.float32)
    B = x2.shape[0]

    tile_b = _choose_tile_b(B) if tile_b is None else _round_up(max(tile_b, 8), 8)
    B_pad = _round_up(B, tile_b)

    # One lane-dense 896-wide input tile: [x(784) | eps(2) | zero pad(110)].
    xe = jnp.zeros((B_pad, IN_PAD), jnp.float32)
    xe = xe.at[:B, :IN_DIM].set(x2).at[:B, IN_DIM:IN_DIM + LATENT_DIM].set(eps2)

    grid = (B_pad // tile_b,)

    def batch_spec(ncols):
        return pl.BlockSpec((tile_b, ncols), lambda i: (i, 0))

    def const_spec(arr):
        # full-array block, constant index -> fetched once, VMEM-resident across grid
        return pl.BlockSpec(tuple(arr.shape), lambda i: (0, 0))

    in_specs = [batch_spec(IN_PAD)] + [const_spec(a) for a in kernel_args]
    out_specs = (batch_spec(IN_PAD), batch_spec(STATS_W))
    out_shape = (jax.ShapeDtypeStruct((B_pad, IN_PAD), jnp.float32),
                 jax.ShapeDtypeStruct((B_pad, STATS_W), jnp.float32))

    # advisory cost estimate for XLA scheduling around this short, mem-bound call
    macs_per_row = (IN_PAD * HIDDEN[0] + HIDDEN[0] * HIDDEN[1] + HIDDEN[1] * 2 * LATENT_DIM
                    + 128 + 128 * HIDDEN[1]
                    + HIDDEN[1] + HIDDEN[1] * HIDDEN[0] + HIDDEN[0] * IN_PAD)
    weight_bytes = sum(int(a.size) * a.dtype.itemsize for a in kernel_args)
    cost = pl.CostEstimate(
        flops=2 * B_pad * macs_per_row,
        transcendentals=B_pad * (LATENT_DIM + IN_PAD),
        bytes_accessed=weight_bytes + B_pad * (IN_PAD * 4 * 2 + STATS_W * 4),
    )

    recon, stats = pl.pallas_call(
        _vae_kernel,
        grid=grid,
        in_specs=in_specs,
        out_specs=out_specs,
        out_shape=out_shape,
        compiler_params=pltpu.CompilerParams(
            dimension_semantics=("parallel",),     # megacore-shardable batch axis
            # ~2.3 MB bf16 weights x2 buffers + 2x(x,recon) tiles + activation
            # scratch at tile_b=512 stays well inside 32 MiB on every generation.
            vmem_limit_bytes=32 << 20,
        ),
        cost_estimate=cost,
    )(xe, *kernel_args)

    recon = recon[:B, :IN_DIM]
    stats = stats[:B]
    mu = stats[:, :LATENT_DIM]
    log_var = stats[:, LATENT_DIM:2 * LATENT_DIM]
    z = stats[:, 2 * LATENT_DIM:3 * LATENT_DIM]
    return recon, mu, log_var, z


# ------------------------------ reference --------------------------------------
def _reference(x, eps, named):
    """Pure-JAX f32 reference with the original (un-fused) module semantics."""
    x = jnp.reshape(x, (-1, IN_DIM)).astype(jnp.float32)
    h = jax.nn.relu(jnp.dot(x, named["ew1"]) + named["eb1"])
    h = jax.nn.relu(jnp.dot(h, named["ew2"]) + named["eb2"])
    mulv = jnp.dot(h, named["ew3"]) + named["eb3"]
    mu, lv = mulv[:, :LATENT_DIM], mulv[:, LATENT_DIM:]
    z = mu + eps * jnp.exp(0.5 * lv)
    indep_z, class_z = z[:, :1], z[:, 1:]
    ch = jax.nn.relu(jnp.dot(class_z, named["cw1"]) + named["cb1"])
    c = jnp.dot(ch, named["cw2"]) + named["cb2"]
    zc = jnp.concatenate([indep_z, c], axis=-1)
    d = jax.nn.relu(jnp.dot(zc, named["dw1"]) + named["db1"])
    d = jax.nn.relu(jnp.dot(d, named["dw2"]) + named["db2"])
    recon = jax.nn.sigmoid(jnp.dot(d, named["dw3"]) + named["db3"])
    return recon, mu, lv, z


if __name__ == "__main__":
    key = jax.random.PRNGKey(0)
    kx, keps, kp = jax.random.split(key, 3)

    B = 16
    x = jax.random.uniform(kx, (B, 1, 28, 28), jnp.float32)          # MNIST-like input
    eps = jax.random.normal(keps, (B, LATENT_DIM), jnp.float32)      # reparam noise

    named = make_params(kp)
    kernel_args = pack_params(named)

    # tile_b=8 -> grid=(2,) so the batch pipeline / parallel axis is exercised
    outs = jax.block_until_ready(vae_forward(x, eps, kernel_args, tile_b=8))
    recon_x, mu, log_var, z = outs

    ref = _reference(x, eps, named)
    for got, want in zip(outs, ref):
        assert got.shape == want.shape, (got.shape, want.shape)
        err = float(jnp.max(jnp.abs(got - want)))
        assert err < 3e-2, err   # bf16-weight kernel vs full-precision reference

    print("KERNEL_OK")
</pallas_src>

<mosaic_0001>
module attributes {stable_mosaic.version = 11 : i64} {
  func.func @_vae_kernel(%arg0: i32, %arg1: memref<8x896xf32, #tpu.memory_space<vmem>>, %arg2: memref<896x512xbf16, #tpu.memory_space<vmem>>, %arg3: memref<512x256xbf16, #tpu.memory_space<vmem>>, %arg4: memref<256x4xbf16, #tpu.memory_space<vmem>>, %arg5: memref<1x128xf32, #tpu.memory_space<vmem>>, %arg6: memref<128x256xbf16, #tpu.memory_space<vmem>>, %arg7: memref<1x256xf32, #tpu.memory_space<vmem>>, %arg8: memref<256x512xbf16, #tpu.memory_space<vmem>>, %arg9: memref<512x896xbf16, #tpu.memory_space<vmem>>, %arg10: memref<1x2688xf32, #tpu.memory_space<vmem>>, %arg11: memref<8x896xf32, #tpu.memory_space<vmem>>, %arg12: memref<8x8xf32, #tpu.memory_space<vmem>>) attributes {dimension_semantics = [#tpu.dimension_semantics<parallel>], iteration_bounds = array<i64: 2>, scalar_prefetch = 0 : i64, scratch_operands = 0 : i64, tpu.core_type = #tpu.core_type<tc>, window_params = [{transform_indices = @transform_0, window_bounds = array<i64: 8, 896>}, {pipeline_mode = #tpu.pipeline_mode<synchronous>, transform_indices = @transform_1, window_bounds = array<i64: 896, 512>}, {pipeline_mode = #tpu.pipeline_mode<synchronous>, transform_indices = @transform_2, window_bounds = array<i64: 512, 256>}, {pipeline_mode = #tpu.pipeline_mode<synchronous>, transform_indices = @transform_3, window_bounds = array<i64: 256, 4>}, {pipeline_mode = #tpu.pipeline_mode<synchronous>, transform_indices = @transform_4, window_bounds = array<i64: 1, 128>}, {pipeline_mode = #tpu.pipeline_mode<synchronous>, transform_indices = @transform_5, window_bounds = array<i64: 128, 256>}, {pipeline_mode = #tpu.pipeline_mode<synchronous>, transform_indices = @transform_6, window_bounds = array<i64: 1, 256>}, {pipeline_mode = #tpu.pipeline_mode<synchronous>, transform_indices = @transform_7, window_bounds = array<i64: 256, 512>}, {pipeline_mode = #tpu.pipeline_mode<synchronous>, transform_indices = @transform_8, window_bounds = array<i64: 512, 896>}, {pipeline_mode = #tpu.pipeline_mode<synchronous>, transform_indices = @transform_9, window_bounds = array<i64: 1, 2688>}, {transform_indices = @transform_10, window_bounds = array<i64: 8, 896>}, {transform_indices = @transform_11, window_bounds = array<i64: 8, 8>}]} {
    %c0 = arith.constant 0 : index
    %c784 = arith.constant 784 : index
    %0 = vector.load %arg1[%c0, %c784] : memref<8x896xf32, #tpu.memory_space<vmem>>, vector<8x2xf32>
    %c0_0 = arith.constant 0 : index
    %c0_1 = arith.constant 0 : index
    %1 = vector.load %arg1[%c0_0, %c0_1] : memref<8x896xf32, #tpu.memory_space<vmem>>, vector<8x896xf32>
    %2 = arith.truncf %1 : vector<8x896xf32> to vector<8x896xbf16>
    %c0_2 = arith.constant 0 : index
    %c0_3 = arith.constant 0 : index
    %3 = vector.load %arg2[%c0_2, %c0_3] : memref<896x512xbf16, #tpu.memory_space<vmem>>, vector<896x512xbf16>
    %cst = arith.constant dense<0.000000e+00> : vector<8x512xf32>
    %4 = tpu.matmul %2, %3, %cst {dimension_numbers = #tpu.dot_dimension_numbers<[1], [0], [0], [1], [0, 0, 1, 1], [], []>} : vector<8x896xbf16>, vector<896x512xbf16>, vector<8x512xf32> -> vector<8x512xf32>
    %c0_4 = arith.constant 0 : index
    %c0_5 = arith.constant 0 : index
    %5 = vector.load %arg10[%c0_4, %c0_5] : memref<1x2688xf32, #tpu.memory_space<vmem>>, vector<1x512xf32>
    %6 = vector.broadcast %5 : vector<1x512xf32> to vector<8x512xf32>
    %7 = arith.addf %4, %6 : vector<8x512xf32>
    %8 = arith.truncf %7 : vector<8x512xf32> to vector<8x512xbf16>
    %cst_6 = arith.constant 0.000000e+00 : bf16
    %9 = vector.broadcast %cst_6 : bf16 to vector<8x512xbf16>
    %10 = arith.maximumf %8, %9 : vector<8x512xbf16>
    %c0_7 = arith.constant 0 : index
    %c0_8 = arith.constant 0 : index
    %11 = vector.load %arg3[%c0_7, %c0_8] : memref<512x256xbf16, #tpu.memory_space<vmem>>, vector<512x256xbf16>
    %cst_9 = arith.constant dense<0.000000e+00> : vector<8x256xf32>
    %12 = tpu.matmul %10, %11, %cst_9 {dimension_numbers = #tpu.dot_dimension_numbers<[1], [0], [0], [1], [0, 0, 1, 1], [], []>} : vector<8x512xbf16>, vector<512x256xbf16>, vector<8x256xf32> -> vector<8x256xf32>
    %c0_10 = arith.constant 0 : index
    %c512 = arith.constant 512 : index
    %13 = vector.load %arg10[%c0_10, %c512] : memref<1x2688xf32, #tpu.memory_space<vmem>>, vector<1x256xf32>
    %14 = vector.broadcast %13 : vector<1x256xf32> to vector<8x256xf32>
    %15 = arith.addf %12, %14 : vector<8x256xf32>
    %16 = arith.truncf %15 : vector<8x256xf32> to vector<8x256xbf16>
    %cst_11 = arith.constant 0.000000e+00 : bf16
    %17 = vector.broadcast %cst_11 : bf16 to vector<8x256xbf16>
    %18 = arith.maximumf %16, %17 : vector<8x256xbf16>
    %c0_12 = arith.constant 0 : index
    %c0_13 = arith.constant 0 : index
    %19 = vector.load %arg4[%c0_12, %c0_13] : memref<256x4xbf16, #tpu.memory_space<vmem>>, vector<256x4xbf16>
    %cst_14 = arith.constant dense<0.000000e+00> : vector<8x4xf32>
    %20 = tpu.matmul %18, %19, %cst_14 {dimension_numbers = #tpu.dot_dimension_numbers<[1], [0], [0], [1], [0, 0, 1, 1], [], []>} : vector<8x256xbf16>, vector<256x4xbf16>, vector<8x4xf32> -> vector<8x4xf32>
    %c0_15 = arith.constant 0 : index
    %c768 = arith.constant 768 : index
    %21 = vector.load %arg10[%c0_15, %c768] : memref<1x2688xf32, #tpu.memory_space<vmem>>, vector<1x4xf32>
    %22 = vector.broadcast %21 : vector<1x4xf32> to vector<8x4xf32>
    %23 = arith.addf %20, %22 : vector<8x4xf32>
    %24 = vector.extract_strided_slice %23 {offsets = [0, 0], sizes = [8, 2], strides = [1, 1]} : vector<8x4xf32> to vector<8x2xf32>
    %25 = vector.extract_strided_slice %23 {offsets = [0, 2], sizes = [8, 2], strides = [1, 1]} : vector<8x4xf32> to vector<8x2xf32>
    %cst_16 = arith.constant 5.000000e-01 : f32
    %26 = vector.broadcast %cst_16 : f32 to vector<8x2xf32>
    %27 = arith.mulf %26, %25 : vector<8x2xf32>
    %28 = math.exp %27 : vector<8x2xf32>
    %29 = arith.mulf %0, %28 : vector<8x2xf32>
    %30 = arith.addf %24, %29 : vector<8x2xf32>
    %31 = vector.extract_strided_slice %30 {offsets = [0, 0], sizes = [8, 1], strides = [1, 1]} : vector<8x2xf32> to vector<8x1xf32>
    %32 = vector.extract_strided_slice %30 {offsets = [0, 1], sizes = [8, 1], strides = [1, 1]} : vector<8x2xf32> to vector<8x1xf32>
    %c0_17 = arith.constant 0 : index
    %c0_18 = arith.constant 0 : index
    %33 = vector.load %arg5[%c0_17, %c0_18] : memref<1x128xf32, #tpu.memory_space<vmem>>, vector<1x128xf32>
    %34 = vector.broadcast %32 : vector<8x1xf32> to vector<8x128xf32>
    %35 = vector.broadcast %33 : vector<1x128xf32> to vector<8x128xf32>
    %36 = arith.mulf %34, %35 : vector<8x128xf32>
    %c0_19 = arith.constant 0 : index
    %c896 = arith.constant 896 : index
    %37 = vector.load %arg10[%c0_19, %c896] : memref<1x2688xf32, #tpu.memory_space<vmem>>, vector<1x128xf32>
    %38 = vector.broadcast %37 : vector<1x128xf32> to vector<8x128xf32>
    %39 = arith.addf %36, %38 : vector<8x128xf32>
    %40 = arith.truncf %39 : vector<8x128xf32> to vector<8x128xbf16>
    %cst_20 = arith.constant 0.000000e+00 : bf16
    %41 = vector.broadcast %cst_20 : bf16 to vector<8x128xbf16>
    %42 = arith.maximumf %40, %41 : vector<8x128xbf16>
    %c0_21 = arith.constant 0 : index
    %c0_22 = arith.constant 0 : index
    %43 = vector.load %arg7[%c0_21, %c0_22] : memref<1x256xf32, #tpu.memory_space<vmem>>, vector<1x256xf32>
    %44 = vector.broadcast %31 : vector<8x1xf32> to vector<8x256xf32>
    %45 = vector.broadcast %43 : vector<1x256xf32> to vector<8x256xf32>
    %46 = arith.mulf %44, %45 : vector<8x256xf32>
    %c0_23 = arith.constant 0 : index
    %c0_24 = arith.constant 0 : index
    %47 = vector.load %arg6[%c0_23, %c0_24] : memref<128x256xbf16, #tpu.memory_space<vmem>>, vector<128x256xbf16>
    %cst_25 = arith.constant dense<0.000000e+00> : vector<8x256xf32>
    %48 = tpu.matmul %42, %47, %cst_25 {dimension_numbers = #tpu.dot_dimension_numbers<[1], [0], [0], [1], [0, 0, 1, 1], [], []>} : vector<8x128xbf16>, vector<128x256xbf16>, vector<8x256xf32> -> vector<8x256xf32>
    %49 = arith.addf %46, %48 : vector<8x256xf32>
    %c0_26 = arith.constant 0 : index
    %c1024 = arith.constant 1024 : index
    %50 = vector.load %arg10[%c0_26, %c1024] : memref<1x2688xf32, #tpu.memory_space<vmem>>, vector<1x256xf32>
    %51 = vector.broadcast %50 : vector<1x256xf32> to vector<8x256xf32>
    %52 = arith.addf %49, %51 : vector<8x256xf32>
    %53 = arith.truncf %52 : vector<8x256xf32> to vector<8x256xbf16>
    %cst_27 = arith.constant 0.000000e+00 : bf16
    %54 = vector.broadcast %cst_27 : bf16 to vector<8x256xbf16>
    %55 = arith.maximumf %53, %54 : vector<8x256xbf16>
    %c0_28 = arith.constant 0 : index
    %c0_29 = arith.constant 0 : index
    %56 = vector.load %arg8[%c0_28, %c0_29] : memref<256x512xbf16, #tpu.memory_space<vmem>>, vector<256x512xbf16>
    %cst_30 = arith.constant dense<0.000000e+00> : vector<8x512xf32>
    %57 = tpu.matmul %55, %56, %cst_30 {dimension_numbers = #tpu.dot_dimension_numbers<[1], [0], [0], [1], [0, 0, 1, 1], [], []>} : vector<8x256xbf16>, vector<256x512xbf16>, vector<8x512xf32> -> vector<8x512xf32>
    %c0_31 = arith.constant 0 : index
    %c1280 = arith.constant 1280 : index
    %58 = vector.load %arg10[%c0_31, %c1280] : memref<1x2688xf32, #tpu.memory_space<vmem>>, vector<1x512xf32>
    %59 = vector.broadcast %58 : vector<1x512xf32> to vector<8x512xf32>
    %60 = arith.addf %57, %59 : vector<8x512xf32>
    %61 = arith.truncf %60 : vector<8x512xf32> to vector<8x512xbf16>
    %cst_32 = arith.constant 0.000000e+00 : bf16
    %62 = vector.broadcast %cst_32 : bf16 to vector<8x512xbf16>
    %63 = arith.maximumf %61, %62 : vector<8x512xbf16>
    %c0_33 = arith.constant 0 : index
    %c0_34 = arith.constant 0 : index
    %64 = vector.load %arg9[%c0_33, %c0_34] : memref<512x896xbf16, #tpu.memory_space<vmem>>, vector<512x896xbf16>
    %cst_35 = arith.constant dense<0.000000e+00> : vector<8x896xf32>
    %65 = tpu.matmul %63, %64, %cst_35 {dimension_numbers = #tpu.dot_dimension_numbers<[1], [0], [0], [1], [0, 0, 1, 1], [], []>} : vector<8x512xbf16>, vector<512x896xbf16>, vector<8x896xf32> -> vector<8x896xf32>
    %c0_36 = arith.constant 0 : index
    %c1792 = arith.constant 1792 : index
    %66 = vector.load %arg10[%c0_36, %c1792] : memref<1x2688xf32, #tpu.memory_space<vmem>>, vector<1x896xf32>
    %67 = vector.broadcast %66 : vector<1x896xf32> to vector<8x896xf32>
    %68 = arith.addf %65, %67 : vector<8x896xf32>
    %69 = arith.negf %68 : vector<8x896xf32>
    %70 = math.exp %69 : vector<8x896xf32>
    %cst_37 = arith.constant 1.000000e+00 : f32
    %71 = vector.broadcast %cst_37 : f32 to vector<8x896xf32>
    %72 = arith.addf %71, %70 : vector<8x896xf32>
    %73 = arith.divf %71, %72 : vector<8x896xf32>
    %c0_38 = arith.constant 0 : index
    %c0_39 = arith.constant 0 : index
    %74 = vector.load %arg11[%c0_38, %c0_39] : memref<8x896xf32, #tpu.memory_space<vmem>>, vector<8x896xf32>
    tpu.vector_store %arg11[%c0_38, %c0_39], %73 {strides = array<i32>} : memref<8x896xf32, #tpu.memory_space<vmem>>, vector<8x896xf32>,
    %c0_40 = arith.constant 0 : index
    %c0_41 = arith.constant 0 : index
    %75 = vector.load %arg12[%c0_40, %c0_41] : memref<8x8xf32, #tpu.memory_space<vmem>>, vector<8x4xf32>
    tpu.vector_store %arg12[%c0_40, %c0_41], %23 {strides = array<i32>} : memref<8x8xf32, #tpu.memory_space<vmem>>, vector<8x4xf32>,
    %c0_42 = arith.constant 0 : index
    %c4 = arith.constant 4 : index
    %76 = vector.load %arg12[%c0_42, %c4] : memref<8x8xf32, #tpu.memory_space<vmem>>, vector<8x2xf32>
    tpu.vector_store %arg12[%c0_42, %c4], %30 {strides = array<i32>} : memref<8x8xf32, #tpu.memory_space<vmem>>, vector<8x2xf32>,
    %cst_43 = arith.constant 0.000000e+00 : f32
    %77 = vector.broadcast %cst_43 : f32 to vector<8x2xf32>
    %c0_44 = arith.constant 0 : index
    %c6 = arith.constant 6 : index
    %78 = vector.load %arg12[%c0_44, %c6] : memref<8x8xf32, #tpu.memory_space<vmem>>, vector<8x2xf32>
    tpu.vector_store %arg12[%c0_44, %c6], %77 {strides = array<i32>} : memref<8x8xf32, #tpu.memory_space<vmem>>, vector<8x2xf32>,
    return
  }
  func.func @transform_0(%arg0: i32) -> (i32, i32) {
    %c0_i32 = arith.constant 0 : i32
    %c0_i32_0 = arith.constant 0 : i32
    return %arg0, %c0_i32 : i32, i32
  }
  func.func @transform_1(%arg0: i32) -> (i32, i32) {
    %c0_i32 = arith.constant 0 : i32
    %c0_i32_0 = arith.constant 0 : i32
    %c0_i32_1 = arith.constant 0 : i32
    return %c0_i32, %c0_i32_0 : i32, i32
  }
  func.func @transform_2(%arg0: i32) -> (i32, i32) {
    %c0_i32 = arith.constant 0 : i32
    %c0_i32_0 = arith.constant 0 : i32
    %c0_i32_1 = arith.constant 0 : i32
    return %c0_i32, %c0_i32_0 : i32, i32
  }
  func.func @transform_3(%arg0: i32) -> (i32, i32) {
    %c0_i32 = arith.constant 0 : i32
    %c0_i32_0 = arith.constant 0 : i32
    %c0_i32_1 = arith.constant 0 : i32
    return %c0_i32, %c0_i32_0 : i32, i32
  }
  func.func @transform_4(%arg0: i32) -> (i32, i32) {
    %c0_i32 = arith.constant 0 : i32
    %c0_i32_0 = arith.constant 0 : i32
    %c0_i32_1 = arith.constant 0 : i32
    return %c0_i32, %c0_i32_0 : i32, i32
  }
  func.func @transform_5(%arg0: i32) -> (i32, i32) {
    %c0_i32 = arith.constant 0 : i32
    %c0_i32_0 = arith.constant 0 : i32
    %c0_i32_1 = arith.constant 0 : i32
    return %c0_i32, %c0_i32_0 : i32, i32
  }
  func.func @transform_6(%arg0: i32) -> (i32, i32) {
    %c0_i32 = arith.constant 0 : i32
    %c0_i32_0 = arith.constant 0 : i32
    %c0_i32_1 = arith.constant 0 : i32
    return %c0_i32, %c0_i32_0 : i32, i32
  }
  func.func @transform_7(%arg0: i32) -> (i32, i32) {
    %c0_i32 = arith.constant 0 : i32
    %c0_i32_0 = arith.constant 0 : i32
    %c0_i32_1 = arith.constant 0 : i32
    return %c0_i32, %c0_i32_0 : i32, i32
  }
  func.func @transform_8(%arg0: i32) -> (i32, i32) {
    %c0_i32 = arith.constant 0 : i32
    %c0_i32_0 = arith.constant 0 : i32
    %c0_i32_1 = arith.constant 0 : i32
    return %c0_i32, %c0_i32_0 : i32, i32
  }
  func.func @transform_9(%arg0: i32) -> (i32, i32) {
    %c0_i32 = arith.constant 0 : i32
    %c0_i32_0 = arith.constant 0 : i32
    %c0_i32_1 = arith.constant 0 : i32
    return %c0_i32, %c0_i32_0 : i32, i32
  }
  func.func @transform_10(%arg0: i32) -> (i32, i32) {
    %c0_i32 = arith.constant 0 : i32
    %c0_i32_0 = arith.constant 0 : i32
    return %arg0, %c0_i32 : i32, i32
  }
  func.func @transform_11(%arg0: i32) -> (i32, i32) {
    %c0_i32 = arith.constant 0 : i32
    %c0_i32_0 = arith.constant 0 : i32
    return %arg0, %c0_i32 : i32, i32
  }
}

</mosaic_0001>

<llo_original>
// kernel: tpu_custom_call.1
$region0: #{tpu_custom_call.1}
  #allocation0 [shape = 'u32[]', space=smem, size = 0x4, offset = 0x4, fixed_abs, tag = 'smem constant byte address 0x4 - core index']
  #allocation1 [shape = 'u32[144,128]{1,0:T(1,128)}', space=vmem, size = 0x12000, scoped, tag = 'internal scratch']
  %s0 = inlined_call_operand.hbm [shape: f32[16,896], index: 0, kind: input, shape index: {}]
  %s1 = inlined_call_operand.hbm [shape: bf16[896,512], index: 1, kind: input, shape index: {}]
  %s2 = inlined_call_operand.hbm [shape: bf16[512,256], index: 2, kind: input, shape index: {}]
  %s3 = inlined_call_operand.vmem [shape: bf16[256,4], index: 3, kind: input, shape index: {}]
  %s4 = inlined_call_operand.vmem [shape: f32[1,128], index: 4, kind: input, shape index: {}]
  %s5 = inlined_call_operand.vmem [shape: bf16[128,256], index: 5, kind: input, shape index: {}]
  %s6 = inlined_call_operand.vmem [shape: f32[1,256], index: 6, kind: input, shape index: {}]
  %s7 = inlined_call_operand.hbm [shape: bf16[256,512], index: 7, kind: input, shape index: {}]
  %s8 = inlined_call_operand.hbm [shape: bf16[512,896], index: 8, kind: input, shape index: {}]
  %s9 = inlined_call_operand.hbm [shape: f32[1,2688], index: 9, kind: input, shape index: {}]
  %s10 = inlined_call_operand.hbm [shape: f32[16,896], index: 10, kind: output, shape index: {0}]
  %s11 = inlined_call_operand.vmem [shape: f32[16,8], index: 11, kind: output, shape index: {1}]
  %12 = xla_tuple %s10, %s11
  %s13 = sld [smem:[#allocation0]]
  $region105: #{tpu_custom_call.1} parent=0
    _
  %s15 = ssub.s32 1, %s13
  %s16 = scalar_select 0, %s15, %s13
  $region1: #{tpu_custom_call.1} parent=0
    #allocation2 [shape = 'u8[57344]{0}', space=vmem, size = 0xe000, scoped, tag = 'input window, operand 0']
    #allocation3 [shape = 's32[2]{0}', space=sflag, size = 0x8, scoped, tag = 'scoped memory for tpu_custom_call.1']
    #allocation4 [shape = 's32[2]{0}', space=sflag, size = 0x8, scoped, tag = 'scoped memory for tpu_custom_call.1']
    #allocation5 [shape = 'u8[917504]{0}', space=vmem, size = 0xe0000, scoped, tag = 'input window, operand 1, single buffered']
    #allocation6 [shape = 's32[1]{0}', space=sflag, size = 0x4, scoped, tag = 'scoped memory for tpu_custom_call.1']
    #allocation7 [shape = 'u8[262144]{0}', space=vmem, size = 0x40000, scoped, tag = 'input window, operand 2, single buffered']
    #allocation8 [shape = 'u8[262144]{0}', space=vmem, size = 0x40000, scoped, tag = 'input window, operand 7, single buffered']
    #allocation9 [shape = 's32[1]{0}', space=sflag, size = 0x4, scoped, tag = 'scoped memory for tpu_custom_call.1']
    #allocation10 [shape = 'u8[917504]{0}', space=vmem, size = 0xe0000, scoped, tag = 'input window, operand 8, single buffered']
    #allocation11 [shape = 'u8[10752]{0}', space=vmem, size = 0x2c00, scoped, tag = 'input window, operand 9, single buffered']
    #allocation12 [shape = 's32[1]{0}', space=sflag, size = 0x4, scoped, tag = 'scoped memory for tpu_custom_call.1']
    #allocation13 [shape = 'u8[57344]{0}', space=vmem, size = 0xe000, scoped, tag = 'output window, operand 0']
    %17 = vsyncpa [#allocation3], 0
    %s18 = scalar_lea.sflag [#allocation3], 1
    %19 = vsyncpa %s18, 0
    %20 = vsyncpa [#allocation6], 0
    %21 = vsyncpa [#allocation9], 0
    %22 = vsyncpa [#allocation12], 0
    %23 = vsyncpa [#allocation4], 0
    %s24 = scalar_lea.sflag [#allocation4], 1
    %25 = vsyncpa %s24, 0
    loop: start=0, step=1, limit=4
    $region2: #{tpu_custom_call.1} parent=1 // loop_pre_header
      _
    $region3: #{tpu_custom_call.1} parent=1 // loop_header
      %s27 = sphi 0, %s31
      %p28 = scmp.ge.s32.totalorder %s27, 4
      %s37 = sphi 0, %s39
      %s40 = sphi 0, %s37
      %s41 = sphi 0, %s40
      %s57 = sphi 0, %s41
      %s61 = sphi 0, %s61
      %s63 = sphi 0, %s61
      %s64 = sphi 0, %s63
      %s78 = sphi 0, %s64
      %s82 = sphi 0, %s82
      %s84 = sphi 0, %s82
      %s85 = sphi 0, %s84
      %s99 = sphi 0, %s85
      %s103 = sphi 0, %s103
      %s105 = sphi 0, %s103
      %s106 = sphi 0, %s105
      %s120 = sphi 0, %s106
      %s124 = sphi 0, %s124
      %s126 = sphi 0, %s124
      %s127 = sphi 0, %s126
      %s141 = sphi 0, %s127
      %s145 = sphi 0, %s145
      %s147 = sphi 0, %s145
      %s148 = sphi 0, %s147
      %s162 = sphi 0, %s148
      %s166 = sphi 0, %s166
      %s168 = sphi 0, %s166
      %s169 = sphi 0, %s168
      %s183 = sphi 0, %s169
      %s187 = sphi 0, %s187
      %s189 = sphi 0, %s187
      %s190 = sphi 0, %s189
      %s204 = sphi 0, %s190
      %s208 = sphi 0, %s208
      %s210 = sphi 0, %s208
      %s211 = sphi 0, %s210
      %s225 = sphi 0, %s211
      %s229 = sphi 0, %s229
      %s231 = sphi 0, %s229
      %s232 = sphi 0, %s231
      %s246 = sphi 0, %s232
      %s252 = sphi 0, %s254
      %s255 = sphi 0, %s252
      %s256 = sphi 0, %s255
      %s272 = sphi 0, %s256
      %s278 = sphi 0, %s280
      %s281 = sphi 0, %s278
      %s282 = sphi 0, %s281
      %s298 = sphi 0, %s282
    $region4: #{tpu_custom_call.1} parent=1 // loop_header_branch
      %30 = sbr.rel (%p28) target = $region8
    $region5: #{tpu_custom_call.1} parent=1 // loop_body
      %s32 = ssub.s32 %s27, 1
      %s33 = ssub.s32 %s27, 2
      %s34 = sadd.s32 %s27, 1
      %s35 = ssub.s32 %s27, %s34
      %p36 = scmp.eq.s32.totalorder %s35, 0
      %s38 = sadd.s32 %s37, 1
      %s39 = scalar_select %p36, %s37, %s38
      %p42 = pneg %p36
      %p43 = scmp.eq.s32.totalorder %s27, 1
      %p44 = por %p42, %p43
      %p45 = scmp.ne.s32.totalorder %s37, %s40
      %p46 = scmp.eq.s32.totalorder %s27, 0
      %p47 = por %p45, %p46
      %p48 = scmp.ne.s32.totalorder %s37, %s40
      %p49 = scmp.eq.s32.totalorder %s32, 1
      %p50 = por %p48, %p49
      %p51 = scmp.ne.s32.totalorder %s40, %s41
      %p52 = scmp.eq.s32.totalorder %s32, 0
      %p53 = por %p51, %p52
      %p54 = scmp.ne.s32.totalorder %s40, %s41
      %p55 = scmp.eq.s32.totalorder %s33, 1
      %p56 = por %p54, %p55
      %p58 = scmp.ne.s32.totalorder %s41, %s57
      %p59 = scmp.eq.s32.totalorder %s33, 0
      %p60 = por %p58, %p59
      %s62 = sadd.s32 %s61, 1
      %p65 = scmp.eq.s32.totalorder %s27, 1
      %p66 = scmp.ne.s32.totalorder %s61, %s63
      %p67 = scmp.eq.s32.totalorder %s27, 0
      %p68 = por %p66, %p67
      %p69 = scmp.ne.s32.totalorder %s61, %s63
      %p70 = scmp.eq.s32.totalorder %s32, 1
      %p71 = por %p69, %p70
      %p72 = scmp.ne.s32.totalorder %s63, %s64
      %p73 = scmp.eq.s32.totalorder %s32, 0
      %p74 = por %p72, %p73
      %p75 = scmp.ne.s32.totalorder %s63, %s64
      %p76 = scmp.eq.s32.totalorder %s33, 1
      %p77 = por %p75, %p76
      %p79 = scmp.ne.s32.totalorder %s64, %s78
      %p80 = scmp.eq.s32.totalorder %s33, 0
      %p81 = por %p79, %p80
      %s83 = sadd.s32 %s82, 1
      %p86 = scmp.eq.s32.totalorder %s27, 1
      %p87 = scmp.ne.s32.totalorder %s82, %s84
      %p88 = scmp.eq.s32.totalorder %s27, 0
      %p89 = por %p87, %p88
      %p90 = scmp.ne.s32.totalorder %s82, %s84
      %p91 = scmp.eq.s32.totalorder %s32, 1
      %p92 = por %p90, %p91
      %p93 = scmp.ne.s32.totalorder %s84, %s85
      %p94 = scmp.eq.s32.totalorder %s32, 0
      %p95 = por %p93, %p94
      %p96 = scmp.ne.s32.totalorder %s84, %s85
      %p97 = scmp.eq.s32.totalorder %s33, 1
      %p98 = por %p96, %p97
      %p100 = scmp.ne.s32.totalorder %s85, %s99
      %p101 = scmp.eq.s32.totalorder %s33, 0
      %p102 = por %p100, %p101
      %s104 = sadd.s32 %s103, 1
      %p107 = scmp.eq.s32.totalorder %s27, 1
      %p108 = scmp.ne.s32.totalorder %s103, %s105
      %p109 = scmp.eq.s32.totalorder %s27, 0
      %p110 = por %p108, %p109
      %p111 = scmp.ne.s32.totalorder %s103, %s105
      %p112 = scmp.eq.s32.totalorder %s32, 1
      %p113 = por %p111, %p112
      %p114 = scmp.ne.s32.totalorder %s105, %s106
      %p115 = scmp.eq.s32.totalorder %s32, 0
      %p116 = por %p114, %p115
      %p117 = scmp.ne.s32.totalorder %s105, %s106
      %p118 = scmp.eq.s32.totalorder %s33, 1
      %p119 = por %p117, %p118
      %p121 = scmp.ne.s32.totalorder %s106, %s120
      %p122 = scmp.eq.s32.totalorder %s33, 0
      %p123 = por %p121, %p122
      %s125 = sadd.s32 %s124, 1
      %p128 = scmp.eq.s32.totalorder %s27, 1
      %p129 = scmp.ne.s32.totalorder %s124, %s126
      %p130 = scmp.eq.s32.totalorder %s27, 0
      %p131 = por %p129, %p130
      %p132 = scmp.ne.s32.totalorder %s124, %s126
      %p133 = scmp.eq.s32.totalorder %s32, 1
      %p134 = por %p132, %p133
      %p135 = scmp.ne.s32.totalorder %s126, %s127
      %p136 = scmp.eq.s32.totalorder %s32, 0
      %p137 = por %p135, %p136
      %p138 = scmp.ne.s32.totalorder %s126, %s127
      %p139 = scmp.eq.s32.totalorder %s33, 1
      %p140 = por %p138, %p139
      %p142 = scmp.ne.s32.totalorder %s127, %s141
      %p143 = scmp.eq.s32.totalorder %s33, 0
      %p144 = por %p142, %p143
      %s146 = sadd.s32 %s145, 1
      %p149 = scmp.eq.s32.totalorder %s27, 1
      %p150 = scmp.ne.s32.totalorder %s145, %s147
      %p151 = scmp.eq.s32.totalorder %s27, 0
      %p152 = por %p150, %p151
      %p153 = scmp.ne.s32.totalorder %s145, %s147
      %p154 = scmp.eq.s32.totalorder %s32, 1
      %p155 = por %p153, %p154
      %p156 = scmp.ne.s32.totalorder %s147, %s148
      %p157 = scmp.eq.s32.totalorder %s32, 0
      %p158 = por %p156, %p157
      %p159 = scmp.ne.s32.totalorder %s147, %s148
      %p160 = scmp.eq.s32.totalorder %s33, 1
      %p161 = por %p159, %p160
      %p163 = scmp.ne.s32.totalorder %s148, %s162
      %p164 = scmp.eq.s32.totalorder %s33, 0
      %p165 = por %p163, %p164
      %s167 = sadd.s32 %s166, 1
      %p170 = scmp.eq.s32.totalorder %s27, 1
      %p171 = scmp.ne.s32.totalorder %s166, %s168
      %p172 = scmp.eq.s32.totalorder %s27, 0
      %p173 = por %p171, %p172
      %p174 = scmp.ne.s32.totalorder %s166, %s168
      %p175 = scmp.eq.s32.totalorder %s32, 1
      %p176 = por %p174, %p175
      %p177 = scmp.ne.s32.totalorder %s168, %s169
      %p178 = scmp.eq.s32.totalorder %s32, 0
      %p179 = por %p177, %p178
      %p180 = scmp.ne.s32.totalorder %s168, %s169
      %p181 = scmp.eq.s32.totalorder %s33, 1
      %p182 = por %p180, %p181
      %p184 = scmp.ne.s32.totalorder %s169, %s183
      %p185 = scmp.eq.s32.totalorder %s33, 0
      %p186 = por %p184, %p185
      %s188 = sadd.s32 %s187, 1
      %p191 = scmp.eq.s32.totalorder %s27, 1
      %p192 = scmp.ne.s32.totalorder %s187, %s189
      %p193 = scmp.eq.s32.totalorder %s27, 0
      %p194 = por %p192, %p193
      %p195 = scmp.ne.s32.totalorder %s187, %s189
      %p196 = scmp.eq.s32.totalorder %s32, 1
      %p197 = por %p195, %p196
      %p198 = scmp.ne.s32.totalorder %s189, %s190
      %p199 = scmp.eq.s32.totalorder %s32, 0
      %p200 = por %p198, %p199
      %p201 = scmp.ne.s32.totalorder %s189, %s190
      %p202 = scmp.eq.s32.totalorder %s33, 1
      %p203 = por %p201, %p202
      %p205 = scmp.ne.s32.totalorder %s190, %s204
      %p206 = scmp.eq.s32.totalorder %s33, 0
      %p207 = por %p205, %p206
      %s209 = sadd.s32 %s208, 1
      %p212 = scmp.eq.s32.totalorder %s27, 1
      %p213 = scmp.ne.s32.totalorder %s208, %s210
      %p214 = scmp.eq.s32.totalorder %s27, 0
      %p215 = por %p213, %p214
      %p216 = scmp.ne.s32.totalorder %s208, %s210
      %p217 = scmp.eq.s32.totalorder %s32, 1
      %p218 = por %p216, %p217
      %p219 = scmp.ne.s32.totalorder %s210, %s211
      %p220 = scmp.eq.s32.totalorder %s32, 0
      %p221 = por %p219, %p220
      %p222 = scmp.ne.s32.totalorder %s210, %s211
      %p223 = scmp.eq.s32.totalorder %s33, 1
      %p224 = por %p222, %p223
      %p226 = scmp.ne.s32.totalorder %s211, %s225
      %p227 = scmp.eq.s32.totalorder %s33, 0
      %p228 = por %p226, %p227
      %s230 = sadd.s32 %s229, 1
      %p233 = scmp.eq.s32.totalorder %s27, 1
      %p234 = scmp.ne.s32.totalorder %s229, %s231
      %p235 = scmp.eq.s32.totalorder %s27, 0
      %p236 = por %p234, %p235
      %p237 = scmp.ne.s32.totalorder %s229, %s231
      %p238 = scmp.eq.s32.totalorder %s32, 1
      %p239 = por %p237, %p238
      %p240 = scmp.ne.s32.totalorder %s231, %s232
      %p241 = scmp.eq.s32.totalorder %s32, 0
      %p242 = por %p240, %p241
      %p243 = scmp.ne.s32.totalorder %s231, %s232
      %p244 = scmp.eq.s32.totalorder %s33, 1
      %p245 = por %p243, %p244
      %p247 = scmp.ne.s32.totalorder %s232, %s246
      %p248 = scmp.eq.s32.totalorder %s33, 0
      %p249 = por %p247, %p248
      %s250 = ssub.s32 %s27, %s34
      %p251 = scmp.eq.s32.totalorder %s250, 0
      %s253 = sadd.s32 %s252, 1
      %s254 = scalar_select %p251, %s252, %s253
      %p257 = pneg %p251
      %p258 = scmp.eq.s32.totalorder %s27, 1
      %p259 = por %p257, %p258
      %p260 = scmp.ne.s32.totalorder %s252, %s255
      %p261 = scmp.eq.s32.totalorder %s27, 0
      %p262 = por %p260, %p261
      %p263 = scmp.ne.s32.totalorder %s252, %s255
      %p264 = scmp.eq.s32.totalorder %s32, 1
      %p265 = por %p263, %p264
      %p266 = scmp.ne.s32.totalorder %s255, %s256
      %p267 = scmp.eq.s32.totalorder %s32, 0
      %p268 = por %p266, %p267
      %p269 = scmp.ne.s32.totalorder %s255, %s256
      %p270 = scmp.eq.s32.totalorder %s33, 1
      %p271 = por %p269, %p270
      %p273 = scmp.ne.s32.totalorder %s256, %s272
      %p274 = scmp.eq.s32.totalorder %s33, 0
      %p275 = por %p273, %p274
      %s276 = ssub.s32 %s27, %s34
      %p277 = scmp.eq.s32.totalorder %s276, 0
      %s279 = sadd.s32 %s278, 1
      %s280 = scalar_select %p277, %s278, %s279
      %p283 = pneg %p277
      %p284 = scmp.eq.s32.totalorder %s27, 1
      %p285 = por %p283, %p284
      %p286 = scmp.ne.s32.totalorder %s278, %s281
      %p287 = scmp.eq.s32.totalorder %s27, 0
      %p288 = por %p286, %p287
      %p289 = scmp.ne.s32.totalorder %s278, %s281
      %p290 = scmp.eq.s32.totalorder %s32, 1
      %p291 = por %p289, %p290
      %p292 = scmp.ne.s32.totalorder %s281, %s282
      %p293 = scmp.eq.s32.totalorder %s32, 0
      %p294 = por %p292, %p293
      %p295 = scmp.ne.s32.totalorder %s281, %s282
      %p296 = scmp.eq.s32.totalorder %s33, 1
      %p297 = por %p295, %p296
      %p299 = scmp.ne.s32.totalorder %s282, %s298
      %p300 = scmp.eq.s32.totalorder %s33, 0
      %p301 = por %p299, %p300
      %p302 = scmp.le.s32.totalorder 1, %s27
      %p303 = scmp.lt.s32.totalorder %s27, 3
      %p304 = pnand %p302, %p303
      %p305 = pneg %p304
      // Predicated region
      $region9: #{tpu_custom_call.1} parent=5 // pred_check
        _
      $region10: #{tpu_custom_call.1} parent=5 // pred_check_branch
        %307 = sbr.rel (%p304) target = $region12
      $region11: #{tpu_custom_call.1} parent=5 // pred_region
        %s308 = ssub.s32 %s27, 1
        // Predicated region
        $region13: #{tpu_custom_call.1} parent=11 // pred_check
          %p309 = pneg %p74
        $region14: #{tpu_custom_call.1} parent=11 // pred_check_branch
          %311 = sbr.rel (%p309) target = $region16
        $region15: #{tpu_custom_call.1} parent=11 // pred_region
          %s313 = ssub.s32 28672, 28672
          %314 = vsyncadd [#allocation6], %s313
          %s315 = sshll.u32 [#allocation5], 4
          %s316 = int_to_ptr.vmem [resolvable:$true] %s315
          %321 = dma.hbm_to_vmem [thread:$0]  %s1, 28672, %s316, [#allocation6], 256, 256, 16
        $region16: #{tpu_custom_call.1} parent=11 // pred_fallthru
          _
        // Predicated region
        $region17: #{tpu_custom_call.1} parent=11 // pred_check
          %p322 = pneg %p95
        $region18: #{tpu_custom_call.1} parent=11 // pred_check_branch
          %324 = sbr.rel (%p322) target = $region20
        $region19: #{tpu_custom_call.1} parent=11 // pred_region
          %s326 = ssub.s32 8192, 8192
          %327 = vsyncadd [#allocation6], %s326
          %s328 = sshll.u32 [#allocation7], 4
          %s329 = int_to_ptr.vmem [resolvable:$true] %s328
          %334 = dma.hbm_to_vmem [thread:$0]  %s2, 8192, %s329, [#allocation6], 128, 128, 8
        $region20: #{tpu_custom_call.1} parent=11 // pred_fallthru
          _
        // Predicated region
        $region21: #{tpu_custom_call.1} parent=11 // pred_check
          %p335 = pneg %p116
        $region22: #{tpu_custom_call.1} parent=11 // pred_check_branch
          %337 = sbr.rel (%p335) target = $region24
        $region23: #{tpu_custom_call.1} parent=11 // pred_region
          _
        $region24: #{tpu_custom_call.1} parent=11 // pred_fallthru
          _
        // Predicated region
        $region25: #{tpu_custom_call.1} parent=11 // pred_check
          %p338 = pneg %p137
        $region26: #{tpu_custom_call.1} parent=11 // pred_check_branch
          %340 = sbr.rel (%p338) target = $region28
        $region27: #{tpu_custom_call.1} parent=11 // pred_region
          _
        $region28: #{tpu_custom_call.1} parent=11 // pred_fallthru
          _
        // Predicated region
        $region29: #{tpu_custom_call.1} parent=11 // pred_check
          %p341 = pneg %p158
        $region30: #{tpu_custom_call.1} parent=11 // pred_check_branch
          %343 = sbr.rel (%p341) target = $region32
        $region31: #{tpu_custom_call.1} parent=11 // pred_region
          _
        $region32: #{tpu_custom_call.1} parent=11 // pred_fallthru
          _
        // Predicated region
        $region33: #{tpu_custom_call.1} parent=11 // pred_check
          %p344 = pneg %p179
        $region34: #{tpu_custom_call.1} parent=11 // pred_check_branch
          %346 = sbr.rel (%p344) target = $region36
        $region35: #{tpu_custom_call.1} parent=11 // pred_region
          _
        $region36: #{tpu_custom_call.1} parent=11 // pred_fallthru
          _
        // Predicated region
        $region37: #{tpu_custom_call.1} parent=11 // pred_check
          %p347 = pneg %p200
        $region38: #{tpu_custom_call.1} parent=11 // pred_check_branch
          %349 = sbr.rel (%p347) target = $region40
        $region39: #{tpu_custom_call.1} parent=11 // pred_region
          %s351 = ssub.s32 8192, 8192
          %352 = vsyncadd [#allocation9], %s351
          %s353 = sshll.u32 [#allocation8], 4
          %s354 = int_to_ptr.vmem [resolvable:$true] %s353
          %359 = dma.hbm_to_vmem [thread:$0]  %s7, 8192, %s354, [#allocation9], 256, 256, 16
        $region40: #{tpu_custom_call.1} parent=11 // pred_fallthru
          _
        // Predicated region
        $region41: #{tpu_custom_call.1} parent=11 // pred_check
          %p360 = pneg %p221
        $region42: #{tpu_custom_call.1} parent=11 // pred_check_branch
          %362 = sbr.rel (%p360) target = $region44
        $region43: #{tpu_custom_call.1} parent=11 // pred_region
          %s364 = ssub.s32 28672, 28672
          %365 = vsyncadd [#allocation9], %s364
          %s366 = sshll.u32 [#allocation10], 4
          %s367 = int_to_ptr.vmem [resolvable:$true] %s366
          %372 = dma.hbm_to_vmem [thread:$0]  %s8, 28672, %s367, [#allocation9], 448, 448, 28
        $region44: #{tpu_custom_call.1} parent=11 // pred_fallthru
          _
        // Predicated region
        $region45: #{tpu_custom_call.1} parent=11 // pred_check
          %p373 = pneg %p242
        $region46: #{tpu_custom_call.1} parent=11 // pred_check_branch
          %375 = sbr.rel (%p373) target = $region48
        $region47: #{tpu_custom_call.1} parent=11 // pred_region
          %s377 = ssub.s32 336, 336
          %378 = vsyncadd [#allocation12], %s377
          %s380 = sshll.u32 [#allocation11], 4
          %s381 = int_to_ptr.vmem [resolvable:$true] %s380
          %383 = dma.hbm_to_vmem [thread:$0]  %s9, 336, %s381, [#allocation12]
        $region48: #{tpu_custom_call.1} parent=11 // pred_fallthru
          _
      $region12: #{tpu_custom_call.1} parent=5 // pred_fallthru
        _
      %p384 = scmp.lt.s32.totalorder %s27, 2
      // Predicated region
      $region49: #{tpu_custom_call.1} parent=5 // pred_check
        %p385 = pneg %p384
      $region50: #{tpu_custom_call.1} parent=5 // pred_check_branch
        %387 = sbr.rel (%p385) target = $region52
      $region51: #{tpu_custom_call.1} parent=5 // pred_region
        // Predicated region
        $region53: #{tpu_custom_call.1} parent=51 // pred_check
          %p388 = pneg %p47
        $region54: #{tpu_custom_call.1} parent=51 // pred_check_branch
          %390 = sbr.rel (%p388) target = $region56
        $region55: #{tpu_custom_call.1} parent=51 // pred_region
          %s391 = sand.u32 %s37, 1
          %s392 = scalar_lea.sflag [#allocation3], %s391
          %s393 = sand.u32 %s37, 1
          %s394 = smul.addr %s393, 56
          %s395 = scalar_lea.vmem [#allocation2], %s394
          %s397 = ssub.s32 896, 896
          %398 = vsyncadd %s392, %s397
          %s399 = smul.addr %s27, 7
          %s400 = smul.addr %s399, 128
          %s401 = scalar_lea.hbm %s0, %s400
          %s403 = sshll.u32 %s395, 4
          %s404 = int_to_ptr.vmem [resolvable:$true] %s403
          %406 = dma.hbm_to_vmem [thread:$0]  %s401, 896, %s404, %s392
        $region56: #{tpu_custom_call.1} parent=51 // pred_fallthru
          _
      $region52: #{tpu_custom_call.1} parent=5 // pred_fallthru
        _
      %p407 = scmp.le.s32.totalorder 1, %s27
      %p408 = scmp.lt.s32.totalorder %s27, 3
      %p409 = pnand %p407, %p408
      %p410 = pneg %p409
      // Predicated region
      $region57: #{tpu_custom_call.1} parent=5 // pred_check
        _
      $region58: #{tpu_custom_call.1} parent=5 // pred_check_branch
        %412 = sbr.rel (%p409) target = $region60
      $region59: #{tpu_custom_call.1} parent=5 // pred_region
        %s413 = ssub.s32 %s27, 1
        %s414 = sand.u32 %s40, 1
        %s415 = scalar_lea.sflag [#allocation3], %s414
        %s416 = sand.u32 %s40, 1
        %s417 = smul.addr %s416, 56
        %s418 = scalar_lea.vmem [#allocation2], %s417
        // Predicated region
        $region61: #{tpu_custom_call.1} parent=59 // pred_check
          %p419 = pneg %p53
        $region62: #{tpu_custom_call.1} parent=59 // pred_check_branch
          %421 = sbr.rel (%p419) target = $region64
        $region63: #{tpu_custom_call.1} parent=59 // pred_region
          %422 = dma.done %s415, 896
        $region64: #{tpu_custom_call.1} parent=59 // pred_fallthru
          _
        // Predicated region
        $region65: #{tpu_custom_call.1} parent=59 // pred_check
          %p423 = pneg %p74
        $region66: #{tpu_custom_call.1} parent=59 // pred_check_branch
          %425 = sbr.rel (%p423) target = $region68
        $region67: #{tpu_custom_call.1} parent=59 // pred_region
          %426 = dma.done [#allocation6], 28672
        $region68: #{tpu_custom_call.1} parent=59 // pred_fallthru
          _
        // Predicated region
        $region69: #{tpu_custom_call.1} parent=59 // pred_check
          %p427 = pneg %p95
        $region70: #{tpu_custom_call.1} parent=59 // pred_check_branch
          %429 = sbr.rel (%p427) target = $region72
        $region71: #{tpu_custom_call.1} parent=59 // pred_region
          %430 = dma.done [#allocation6], 8192
        $region72: #{tpu_custom_call.1} parent=59 // pred_fallthru
          _
        // Predicated region
        $region73: #{tpu_custom_call.1} parent=59 // pred_check
          %p431 = pneg %p200
        $region74: #{tpu_custom_call.1} parent=59 // pred_check_branch
          %433 = sbr.rel (%p431) target = $region76
        $region75: #{tpu_custom_call.1} parent=59 // pred_region
          %434 = dma.done [#allocation9], 8192
        $region76: #{tpu_custom_call.1} parent=59 // pred_fallthru
          _
        // Predicated region
        $region77: #{tpu_custom_call.1} parent=59 // pred_check
          %p435 = pneg %p221
        $region78: #{tpu_custom_call.1} parent=59 // pred_check_branch
          %437 = sbr.rel (%p435) target = $region80
        $region79: #{tpu_custom_call.1} parent=59 // pred_region
          %438 = dma.done [#allocation9], 28672
        $region80: #{tpu_custom_call.1} parent=59 // pred_fallthru
          _
        // Predicated region
        $region81: #{tpu_custom_call.1} parent=59 // pred_check
          %p439 = pneg %p242
        $region82: #{tpu_custom_call.1} parent=59 // pred_check_branch
          %441 = sbr.rel (%p439) target = $region84
        $region83: #{tpu_custom_call.1} parent=59 // pred_region
          %442 = dma.done [#allocation12], 336
        $region84: #{tpu_custom_call.1} parent=59 // pred_fallthru
          _
        %s443 = sand.u32 %s40, 1
        %s444 = scalar_lea.sflag [#allocation3], %s443
        %s445 = sand.u32 %s40, 1
        %s446 = smul.addr %s445, 56
        %s447 = scalar_lea.vmem [#allocation2], %s446
        %p448 = pneg %p53
        %p449 = pneg %p50
        %p450 = pneg %p74
        %p451 = pneg %p71
        %p452 = pneg %p95
        %p453 = pneg %p92
        %p454 = pneg %p116
        %p455 = pneg %p113
        %p456 = pneg %p137
        %p457 = pneg %p134
        %p458 = pneg %p158
        %p459 = pneg %p155
        %p460 = pneg %p179
        %p461 = pneg %p176
        %p462 = pneg %p200
        %p463 = pneg %p197
        %p464 = pneg %p221
        %p465 = pneg %p218
        %p466 = pneg %p242
        %p467 = pneg %p239
        %p468 = pneg %p268
        %p469 = pneg %p265
        %s470 = sand.u32 %s255, 1
        %s471 = scalar_lea.sflag [#allocation4], %s470
        %s472 = sand.u32 %s255, 1
        %s473 = smul.addr %s472, 56
        %s474 = scalar_lea.vmem [#allocation13], %s473
        %p475 = pneg %p294
        %p476 = pneg %p291
        %p477 = scmp.lt.s32.totalorder %s32, 1
        %s478 = scalar_select %p477, %s32, 1
        %s479 = smul.addr %s478, 8
        %s480 = scalar_lea.vmem %s11, %s479
        %p481 = scmp.lt.s32.totalorder %s32, 1
        %s482 = scalar_select %p481, %s32, 1
        %s483 = smul.addr %s482, 8
        %s484 = scalar_lea.vmem %s11, %s483
        %v486 = vld [vmem:[%s418 + $0x30] sm:$0xff]
        %v487 = vld [vmem:[%s418] sm:$0xff]
        %v488 = vld [vmem:[%s418 + $0x8] sm:$0xff]
        %v489 = vld [vmem:[%s418 + $0x10] sm:$0xff]
        %v490 = vld [vmem:[%s418 + $0x18] sm:$0xff]
        %v491 = vld [vmem:[%s418 + $0x20] sm:$0xff]
        %v492 = vld [vmem:[%s418 + $0x28] sm:$0xff]
        %v493 = vpack.c.bf16 %v487, %v487
        %v494 = vpack.c.bf16 %v488, %v488
        %v495 = vpack.c.bf16 %v489, %v489
        %v496 = vpack.c.bf16 %v490, %v490
        %v497 = vpack.c.bf16 %v491, %v491
        %v498 = vpack.c.bf16 %v492, %v492
        %v499 = vpack.c.bf16 %v486, %v486
        %v500 = vld [vmem:[#allocation5] sm:$0xff]
        %v501 = vld [vmem:[#allocation5 + $0x8] sm:$0xff]
        %v502 = vld [vmem:[#allocation5 + $0x10] sm:$0xff]
        %v503 = vld [vmem:[#allocation5 + $0x18] sm:$0xff]
        %v504 = vld [vmem:[#allocation5 + $0x20] sm:$0xff]
        %v505 = vld [vmem:[#allocation5 + $0x28] sm:$0xff]
        %v506 = vld [vmem:[#allocation5 + $0x30] sm:$0xff]
        %v507 = vld [vmem:[#allocation5 + $0x38] sm:$0xff]
        %v508 = vld [vmem:[#allocation5 + $0x40] sm:$0xff]
        %v509 = vld [vmem:[#allocation5 + $0x48] sm:$0xff]
        %v510 = vld [vmem:[#allocation5 + $0x50] sm:$0xff]
        %v511 = vld [vmem:[#allocation5 + $0x58] sm:$0xff]
        %v512 = vld [vmem:[#allocation5 + $0x60] sm:$0xff]
        %v513 = vld [vmem:[#allocation5 + $0x68] sm:$0xff]
        %v514 = vld [vmem:[#allocation5 + $0x70] sm:$0xff]
        %v515 = vld [vmem:[#allocation5 + $0x78] sm:$0xff]
        %v516 = vld [vmem:[#allocation5 + $0x80] sm:$0xff]
        %v517 = vld [vmem:[#allocation5 + $0x88] sm:$0xff]
        %v518 = vld [vmem:[#allocation5 + $0x90] sm:$0xff]
        %v519 = vld [vmem:[#allocation5 + $0x98] sm:$0xff]
        %v520 = vld [vmem:[#allocation5 + $0xa0] sm:$0xff]
        %v521 = vld [vmem:[#allocation5 + $0xa8] sm:$0xff]
        %v522 = vld [vmem:[#allocation5 + $0xb0] sm:$0xff]
        %v523 = vld [vmem:[#allocation5 + $0xb8] sm:$0xff]
        %v524 = vld [vmem:[#allocation5 + $0xc0] sm:$0xff]
        %v525 = vld [vmem:[#allocation5 + $0xc8] sm:$0xff]
        %v526 = vld [vmem:[#allocation5 + $0xd0] sm:$0xff]
        %v527 = vld [vmem:[#allocation5 + $0xd8] sm:$0xff]
        %v528 = vld [vmem:[#allocation5 + $0xe0] sm:$0xff]
        %v529 = vld [vmem:[#allocation5 + $0xe8] sm:$0xff]
        %v530 = vld [vmem:[#allocation5 + $0xf0] sm:$0xff]
        %v531 = vld [vmem:[#allocation5 + $0xf8] sm:$0xff]
        %v532 = vld [vmem:[#allocation5 + $0x100] sm:$0xff]
        %v533 = vld [vmem:[#allocation5 + $0x108] sm:$0xff]
        %v534 = vld [vmem:[#allocation5 + $0x110] sm:$0xff]
        %v535 = vld [vmem:[#allocation5 + $0x118] sm:$0xff]
        %v536 = vld [vmem:[#allocation5 + $0x120] sm:$0xff]
        %v537 = vld [vmem:[#allocation5 + $0x128] sm:$0xff]
        %v538 = vld [vmem:[#allocation5 + $0x130] sm:$0xff]
        %v539 = vld [vmem:[#allocation5 + $0x138] sm:$0xff]
        %v540 = vld [vmem:[#allocation5 + $0x140] sm:$0xff]
        %v541 = vld [vmem:[#allocation5 + $0x148] sm:$0xff]
        %v542 = vld [vmem:[#allocation5 + $0x150] sm:$0xff]
        %v543 = vld [vmem:[#allocation5 + $0x158] sm:$0xff]
        %v544 = vld [vmem:[#allocation5 + $0x160] sm:$0xff]
        %v545 = vld [vmem:[#allocation5 + $0x168] sm:$0xff]
        %v546 = vld [vmem:[#allocation5 + $0x170] sm:$0xff]
        %v547 = vld [vmem:[#allocation5 + $0x178] sm:$0xff]
        %v548 = vld [vmem:[#allocation5 + $0x180] sm:$0xff]
        %v549 = vld [vmem:[#allocation5 + $0x188] sm:$0xff]
        %v550 = vld [vmem:[#allocation5 + $0x190] sm:$0xff]
        %v551 = vld [vmem:[#allocation5 + $0x198] sm:$0xff]
        %v552 = vld [vmem:[#allocation5 + $0x1a0] sm:$0xff]
        %v553 = vld [vmem:[#allocation5 + $0x1a8] sm:$0xff]
        %v554 = vld [vmem:[#allocation5 + $0x1b0] sm:$0xff]
        %v555 = vld [vmem:[#allocation5 + $0x1b8] sm:$0xff]
        %v556 = vld [vmem:[#allocation5 + $0x1c0] sm:$0xff]
        %v557 = vld [vmem:[#allocation5 + $0x1c8] sm:$0xff]
        %v558 = vld [vmem:[#allocation5 + $0x1d0] sm:$0xff]
        %v559 = vld [vmem:[#allocation5 + $0x1d8] sm:$0xff]
        %v560 = vld [vmem:[#allocation5 + $0x1e0] sm:$0xff]
        %v561 = vld [vmem:[#allocation5 + $0x1e8] sm:$0xff]
        %v562 = vld [vmem:[#allocation5 + $0x1f0] sm:$0xff]
        %v563 = vld [vmem:[#allocation5 + $0x1f8] sm:$0xff]
        %v564 = vld [vmem:[#allocation5 + $0x200] sm:$0xff]
        %v565 = vld [vmem:[#allocation5 + $0x208] sm:$0xff]
        %v566 = vld [vmem:[#allocation5 + $0x210] sm:$0xff]
        %v567 = vld [vmem:[#allocation5 + $0x218] sm:$0xff]
        %v568 = vld [vmem:[#allocation5 + $0x220] sm:$0xff]
        %v569 = vld [vmem:[#allocation5 + $0x228] sm:$0xff]
        %v570 = vld [vmem:[#allocation5 + $0x230] sm:$0xff]
        %v571 = vld [vmem:[#allocation5 + $0x238] sm:$0xff]
        %v572 = vld [vmem:[#allocation5 + $0x240] sm:$0xff]
        %v573 = vld [vmem:[#allocation5 + $0x248] sm:$0xff]
        %v574 = vld [vmem:[#allocation5 + $0x250] sm:$0xff]
        %v575 = vld [vmem:[#allocation5 + $0x258] sm:$0xff]
        %v576 = vld [vmem:[#allocation5 + $0x260] sm:$0xff]
        %v577 = vld [vmem:[#allocation5 + $0x268] sm:$0xff]
        %v578 = vld [vmem:[#allocation5 + $0x270] sm:$0xff]
        %v579 = vld [vmem:[#allocation5 + $0x278] sm:$0xff]
        %v580 = vld [vmem:[#allocation5 + $0x280] sm:$0xff]
        %v581 = vld [vmem:[#allocation5 + $0x288] sm:$0xff]
        %v582 = vld [vmem:[#allocation5 + $0x290] sm:$0xff]
        %v583 = vld [vmem:[#allocation5 + $0x298] sm:$0xff]
        %v584 = vld [vmem:[#allocation5 + $0x2a0] sm:$0xff]
        %v585 = vld [vmem:[#allocation5 + $0x2a8] sm:$0xff]
        %v586 = vld [vmem:[#allocation5 + $0x2b0] sm:$0xff]
        %v587 = vld [vmem:[#allocation5 + $0x2b8] sm:$0xff]
        %v588 = vld [vmem:[#allocation5 + $0x2c0] sm:$0xff]
        %v589 = vld [vmem:[#allocation5 + $0x2c8] sm:$0xff]
        %v590 = vld [vmem:[#allocation5 + $0x2d0] sm:$0xff]
        %v591 = vld [vmem:[#allocation5 + $0x2d8] sm:$0xff]
        %v592 = vld [vmem:[#allocation5 + $0x2e0] sm:$0xff]
        %v593 = vld [vmem:[#allocation5 + $0x2e8] sm:$0xff]
        %v594 = vld [vmem:[#allocation5 + $0x2f0] sm:$0xff]
        %v595 = vld [vmem:[#allocation5 + $0x2f8] sm:$0xff]
        %v596 = vld [vmem:[#allocation5 + $0x300] sm:$0xff]
        %v597 = vld [vmem:[#allocation5 + $0x308] sm:$0xff]
        %v598 = vld [vmem:[#allocation5 + $0x310] sm:$0xff]
        %v599 = vld [vmem:[#allocation5 + $0x318] sm:$0xff]
        %v600 = vld [vmem:[#allocation5 + $0x320] sm:$0xff]
        %v601 = vld [vmem:[#allocation5 + $0x328] sm:$0xff]
        %v602 = vld [vmem:[#allocation5 + $0x330] sm:$0xff]
        %v603 = vld [vmem:[#allocation5 + $0x338] sm:$0xff]
        %v604 = vld [vmem:[#allocation5 + $0x340] sm:$0xff]
        %v605 = vld [vmem:[#allocation5 + $0x348] sm:$0xff]
        %v606 = vld [vmem:[#allocation5 + $0x350] sm:$0xff]
        %v607 = vld [vmem:[#allocation5 + $0x358] sm:$0xff]
        %v608 = vld [vmem:[#allocation5 + $0x360] sm:$0xff]
        %v609 = vld [vmem:[#allocation5 + $0x368] sm:$0xff]
        %v610 = vld [vmem:[#allocation5 + $0x370] sm:$0xff]
        %v611 = vld [vmem:[#allocation5 + $0x378] sm:$0xff]
        %v612 = vld [vmem:[#allocation5 + $0x380] sm:$0xff]
        %v613 = vld [vmem:[#allocation5 + $0x388] sm:$0xff]
        %v614 = vld [vmem:[#allocation5 + $0x390] sm:$0xff]
        %v615 = vld [vmem:[#allocation5 + $0x398] sm:$0xff]
        %v616 = vld [vmem:[#allocation5 + $0x3a0] sm:$0xff]
        %v617 = vld [vmem:[#allocation5 + $0x3a8] sm:$0xff]
        %v618 = vld [vmem:[#allocation5 + $0x3b0] sm:$0xff]
        %v619 = vld [vmem:[#allocation5 + $0x3b8] sm:$0xff]
        %v620 = vld [vmem:[#allocation5 + $0x3c0] sm:$0xff]
        %v621 = vld [vmem:[#allocation5 + $0x3c8] sm:$0xff]
        %v622 = vld [vmem:[#allocation5 + $0x3d0] sm:$0xff]
        %v623 = vld [vmem:[#allocation5 + $0x3d8] sm:$0xff]
        %v624 = vld [vmem:[#allocation5 + $0x3e0] sm:$0xff]
        %v625 = vld [vmem:[#allocation5 + $0x3e8] sm:$0xff]
        %v626 = vld [vmem:[#allocation5 + $0x3f0] sm:$0xff]
        %v627 = vld [vmem:[#allocation5 + $0x3f8] sm:$0xff]
        %v628 = vld [vmem:[#allocation5 + $0x400] sm:$0xff]
        %v629 = vld [vmem:[#allocation5 + $0x408] sm:$0xff]
        %v630 = vld [vmem:[#allocation5 + $0x410] sm:$0xff]
        %v631 = vld [vmem:[#allocation5 + $0x418] sm:$0xff]
        %v632 = vld [vmem:[#allocation5 + $0x420] sm:$0xff]
        %v633 = vld [vmem:[#allocation5 + $0x428] sm:$0xff]
        %v634 = vld [vmem:[#allocation5 + $0x430] sm:$0xff]
        %v635 = vld [vmem:[#allocation5 + $0x438] sm:$0xff]
        %v636 = vld [vmem:[#allocation5 + $0x440] sm:$0xff]
        %v637 = vld [vmem:[#allocation5 + $0x448] sm:$0xff]
        %v638 = vld [vmem:[#allocation5 + $0x450] sm:$0xff]
        %v639 = vld [vmem:[#allocation5 + $0x458] sm:$0xff]
        %v640 = vld [vmem:[#allocation5 + $0x460] sm:$0xff]
        %v641 = vld [vmem:[#allocation5 + $0x468] sm:$0xff]
        %v642 = vld [vmem:[#allocation5 + $0x470] sm:$0xff]
        %v643 = vld [vmem:[#allocation5 + $0x478] sm:$0xff]
        %v644 = vld [vmem:[#allocation5 + $0x480] sm:$0xff]
        %v645 = vld [vmem:[#allocation5 + $0x488] sm:$0xff]
        %v646 = vld [vmem:[#allocation5 + $0x490] sm:$0xff]
        %v647 = vld [vmem:[#allocation5 + $0x498] sm:$0xff]
        %v648 = vld [vmem:[#allocation5 + $0x4a0] sm:$0xff]
        %v649 = vld [vmem:[#allocation5 + $0x4a8] sm:$0xff]
        %v650 = vld [vmem:[#allocation5 + $0x4b0] sm:$0xff]
        %v651 = vld [vmem:[#allocation5 + $0x4b8] sm:$0xff]
        %v652 = vld [vmem:[#allocation5 + $0x4c0] sm:$0xff]
        %v653 = vld [vmem:[#allocation5 + $0x4c8] sm:$0xff]
        %v654 = vld [vmem:[#allocation5 + $0x4d0] sm:$0xff]
        %v655 = vld [vmem:[#allocation5 + $0x4d8] sm:$0xff]
        %v656 = vld [vmem:[#allocation5 + $0x4e0] sm:$0xff]
        %v657 = vld [vmem:[#allocation5 + $0x4e8] sm:$0xff]
        %v658 = vld [vmem:[#allocation5 + $0x4f0] sm:$0xff]
        %v659 = vld [vmem:[#allocation5 + $0x4f8] sm:$0xff]
        %v660 = vld [vmem:[#allocation5 + $0x500] sm:$0xff]
        %v661 = vld [vmem:[#allocation5 + $0x508] sm:$0xff]
        %v662 = vld [vmem:[#allocation5 + $0x510] sm:$0xff]
        %v663 = vld [vmem:[#allocation5 + $0x518] sm:$0xff]
        %v664 = vld [vmem:[#allocation5 + $0x520] sm:$0xff]
        %v665 = vld [vmem:[#allocation5 + $0x528] sm:$0xff]
        %v666 = vld [vmem:[#allocation5 + $0x530] sm:$0xff]
        %v667 = vld [vmem:[#allocation5 + $0x538] sm:$0xff]
        %v668 = vld [vmem:[#allocation5 + $0x540] sm:$0xff]
        %v669 = vld [vmem:[#allocation5 + $0x548] sm:$0xff]
        %v670 = vld [vmem:[#allocation5 + $0x550] sm:$0xff]
        %v671 = vld [vmem:[#allocation5 + $0x558] sm:$0xff]
        %v672 = vld [vmem:[#allocation5 + $0x560] sm:$0xff]
        %v673 = vld [vmem:[#allocation5 + $0x568] sm:$0xff]
        %v674 = vld [vmem:[#allocation5 + $0x570] sm:$0xff]
        %v675 = vld [vmem:[#allocation5 + $0x578] sm:$0xff]
        %v676 = vld [vmem:[#allocation5 + $0x580] sm:$0xff]
        %v677 = vld [vmem:[#allocation5 + $0x588] sm:$0xff]
        %v678 = vld [vmem:[#allocation5 + $0x590] sm:$0xff]
        %v679 = vld [vmem:[#allocation5 + $0x598] sm:$0xff]
        %v680 = vld [vmem:[#allocation5 + $0x5a0] sm:$0xff]
        %v681 = vld [vmem:[#allocation5 + $0x5a8] sm:$0xff]
        %v682 = vld [vmem:[#allocation5 + $0x5b0] sm:$0xff]
        %v683 = vld [vmem:[#allocation5 + $0x5b8] sm:$0xff]
        %v684 = vld [vmem:[#allocation5 + $0x5c0] sm:$0xff]
        %v685 = vld [vmem:[#allocation5 + $0x5c8] sm:$0xff]
        %v686 = vld [vmem:[#allocation5 + $0x5d0] sm:$0xff]
        %v687 = vld [vmem:[#allocation5 + $0x5d8] sm:$0xff]
        %v688 = vld [vmem:[#allocation5 + $0x5e0] sm:$0xff]
        %v689 = vld [vmem:[#allocation5 + $0x5e8] sm:$0xff]
        %v690 = vld [vmem:[#allocation5 + $0x5f0] sm:$0xff]
        %v691 = vld [vmem:[#allocation5 + $0x5f8] sm:$0xff]
        %v692 = vld [vmem:[#allocation5 + $0x600] sm:$0xff]
        %v693 = vld [vmem:[#allocation5 + $0x608] sm:$0xff]
        %v694 = vld [vmem:[#allocation5 + $0x610] sm:$0xff]
        %v695 = vld [vmem:[#allocation5 + $0x618] sm:$0xff]
        %v696 = vld [vmem:[#allocation5 + $0x620] sm:$0xff]
        %v697 = vld [vmem:[#allocation5 + $0x628] sm:$0xff]
        %v698 = vld [vmem:[#allocation5 + $0x630] sm:$0xff]
        %v699 = vld [vmem:[#allocation5 + $0x638] sm:$0xff]
        %v700 = vld [vmem:[#allocation5 + $0x640] sm:$0xff]
        %v701 = vld [vmem:[#allocation5 + $0x648] sm:$0xff]
        %v702 = vld [vmem:[#allocation5 + $0x650] sm:$0xff]
        %v703 = vld [vmem:[#allocation5 + $0x658] sm:$0xff]
        %v704 = vld [vmem:[#allocation5 + $0x660] sm:$0xff]
        %v705 = vld [vmem:[#allocation5 + $0x668] sm:$0xff]
        %v706 = vld [vmem:[#allocation5 + $0x670] sm:$0xff]
        %v707 = vld [vmem:[#allocation5 + $0x678] sm:$0xff]
        %v708 = vld [vmem:[#allocation5 + $0x680] sm:$0xff]
        %v709 = vld [vmem:[#allocation5 + $0x688] sm:$0xff]
        %v710 = vld [vmem:[#allocation5 + $0x690] sm:$0xff]
        %v711 = vld [vmem:[#allocation5 + $0x698] sm:$0xff]
        %v712 = vld [vmem:[#allocation5 + $0x6a0] sm:$0xff]
        %v713 = vld [vmem:[#allocation5 + $0x6a8] sm:$0xff]
        %v714 = vld [vmem:[#allocation5 + $0x6b0] sm:$0xff]
        %v715 = vld [vmem:[#allocation5 + $0x6b8] sm:$0xff]
        %v716 = vld [vmem:[#allocation5 + $0x6c0] sm:$0xff]
        %v717 = vld [vmem:[#allocation5 + $0x6c8] sm:$0xff]
        %v718 = vld [vmem:[#allocation5 + $0x6d0] sm:$0xff]
        %v719 = vld [vmem:[#allocation5 + $0x6d8] sm:$0xff]
        %v720 = vld [vmem:[#allocation5 + $0x6e0] sm:$0xff]
        %v721 = vld [vmem:[#allocation5 + $0x6e8] sm:$0xff]
        %v722 = vld [vmem:[#allocation5 + $0x6f0] sm:$0xff]
        %v723 = vld [vmem:[#allocation5 + $0x6f8] sm:$0xff]
        %v724 = vld [vmem:[#allocation11] sm:$0xf]
        %v726 = vlaneseq
        %v727 = vshrl.u32 %v726, 7
        %v728 = vsub.s32 0, %v727
        %v729 = vrot.slane %v724, %v728
        %v730 = vlaneseq
        %v731 = vshrl.u32 %v730, 7
        %v732 = vsub.s32 1, %v731
        %v733 = vrot.slane %v724, %v732
        %v734 = vlaneseq
        %v735 = vshrl.u32 %v734, 7
        %v736 = vsub.s32 2, %v735
        %v737 = vrot.slane %v724, %v736
        %v738 = vlaneseq
        %v739 = vshrl.u32 %v738, 7
        %v740 = vsub.s32 3, %v739
        %v741 = vrot.slane %v724, %v740
        %v970 = vunpack.c.l.b16 %v500
        %v971 = vunpack.c.h.b16 %v500
        %v972 = vunpack.c.l.b16 %v501
        %v973 = vunpack.c.h.b16 %v501
        %v974 = vunpack.c.l.b16 %v502
        %v975 = vunpack.c.h.b16 %v502
        %v976 = vunpack.c.l.b16 %v503
        %v977 = vunpack.c.h.b16 %v503
        %v978 = vunpack.c.l.b16 %v504
        %v979 = vunpack.c.h.b16 %v504
        %v980 = vunpack.c.l.b16 %v505
        %v981 = vunpack.c.h.b16 %v505
        %v982 = vunpack.c.l.b16 %v506
        %v983 = vunpack.c.h.b16 %v506
        %v984 = vunpack.c.l.b16 %v507
        %v985 = vunpack.c.h.b16 %v507
        %v986 = vunpack.c.l.b16 %v508
        %v987 = vunpack.c.h.b16 %v508
        %v988 = vunpack.c.l.b16 %v509
        %v989 = vunpack.c.h.b16 %v509
        %v990 = vunpack.c.l.b16 %v510
        %v991 = vunpack.c.h.b16 %v510
        %v992 = vunpack.c.l.b16 %v511
        %v993 = vunpack.c.h.b16 %v511
        %v994 = vunpack.c.l.b16 %v512
        %v995 = vunpack.c.h.b16 %v512
        %v996 = vunpack.c.l.b16 %v513
        %v997 = vunpack.c.h.b16 %v513
        %v998 = vunpack.c.l.b16 %v514
        %v999 = vunpack.c.h.b16 %v514
        %v1000 = vunpack.c.l.b16 %v515
        %v1001 = vunpack.c.h.b16 %v515
        %v1002 = vunpack.c.l.b16 %v516
        %v1003 = vunpack.c.h.b16 %v516
        %v1004 = vunpack.c.l.b16 %v517
        %v1005 = vunpack.c.h.b16 %v517
        %v1006 = vunpack.c.l.b16 %v518
        %v1007 = vunpack.c.h.b16 %v518
        %v1008 = vunpack.c.l.b16 %v519
        %v1009 = vunpack.c.h.b16 %v519
        %v1010 = vunpack.c.l.b16 %v520
        %v1011 = vunpack.c.h.b16 %v520
        %v1012 = vunpack.c.l.b16 %v521
        %v1013 = vunpack.c.h.b16 %v521
        %v1014 = vunpack.c.l.b16 %v522
        %v1015 = vunpack.c.h.b16 %v522
        %v1016 = vunpack.c.l.b16 %v523
        %v1017 = vunpack.c.h.b16 %v523
        %v1018 = vunpack.c.l.b16 %v524
        %v1019 = vunpack.c.h.b16 %v524
        %v1020 = vunpack.c.l.b16 %v525
        %v1021 = vunpack.c.h.b16 %v525
        %v1022 = vunpack.c.l.b16 %v526
        %v1023 = vunpack.c.h.b16 %v526
        %v1024 = vunpack.c.l.b16 %v527
        %v1025 = vunpack.c.h.b16 %v527
        %v1026 = vunpack.c.l.b16 %v528
        %v1027 = vunpack.c.h.b16 %v528
        %v1028 = vunpack.c.l.b16 %v529
        %v1029 = vunpack.c.h.b16 %v529
        %v1030 = vunpack.c.l.b16 %v530
        %v1031 = vunpack.c.h.b16 %v530
        %v1032 = vunpack.c.l.b16 %v531
        %v1033 = vunpack.c.h.b16 %v531
        %v1034 = vunpack.c.l.b16 %v532
        %v1035 = vunpack.c.h.b16 %v532
        %v1036 = vunpack.c.l.b16 %v533
        %v1037 = vunpack.c.h.b16 %v533
        %v1038 = vunpack.c.l.b16 %v534
        %v1039 = vunpack.c.h.b16 %v534
        %v1040 = vunpack.c.l.b16 %v535
        %v1041 = vunpack.c.h.b16 %v535
        %v1042 = vunpack.c.l.b16 %v536
        %v1043 = vunpack.c.h.b16 %v536
        %v1044 = vunpack.c.l.b16 %v537
        %v1045 = vunpack.c.h.b16 %v537
        %v1046 = vunpack.c.l.b16 %v538
        %v1047 = vunpack.c.h.b16 %v538
        %v1048 = vunpack.c.l.b16 %v539
        %v1049 = vunpack.c.h.b16 %v539
        %v1050 = vunpack.c.l.b16 %v540
        %v1051 = vunpack.c.h.b16 %v540
        %v1052 = vunpack.c.l.b16 %v541
        %v1053 = vunpack.c.h.b16 %v541
        %v1054 = vunpack.c.l.b16 %v542
        %v1055 = vunpack.c.h.b16 %v542
        %v1056 = vunpack.c.l.b16 %v543
        %v1057 = vunpack.c.h.b16 %v543
        %v1058 = vunpack.c.l.b16 %v544
        %v1059 = vunpack.c.h.b16 %v544
        %v1060 = vunpack.c.l.b16 %v545
        %v1061 = vunpack.c.h.b16 %v545
        %v1062 = vunpack.c.l.b16 %v546
        %v1063 = vunpack.c.h.b16 %v546
        %v1064 = vunpack.c.l.b16 %v547
        %v1065 = vunpack.c.h.b16 %v547
        %v1066 = vunpack.c.l.b16 %v548
        %v1067 = vunpack.c.h.b16 %v548
        %v1068 = vunpack.c.l.b16 %v549
        %v1069 = vunpack.c.h.b16 %v549
        %v1070 = vunpack.c.l.b16 %v550
        %v1071 = vunpack.c.h.b16 %v550
        %v1072 = vunpack.c.l.b16 %v551
        %v1073 = vunpack.c.h.b16 %v551
        %v1074 = vunpack.c.l.b16 %v552
        %v1075 = vunpack.c.h.b16 %v552
        %v1076 = vunpack.c.l.b16 %v553
        %v1077 = vunpack.c.h.b16 %v553
        %v1078 = vunpack.c.l.b16 %v554
        %v1079 = vunpack.c.h.b16 %v554
        %v1080 = vunpack.c.l.b16 %v555
        %v1081 = vunpack.c.h.b16 %v555
        %v1082 = vunpack.c.l.b16 %v556
        %v1083 = vunpack.c.h.b16 %v556
        %v1084 = vunpack.c.l.b16 %v557
        %v1085 = vunpack.c.h.b16 %v557
        %v1086 = vunpack.c.l.b16 %v558
        %v1087 = vunpack.c.h.b16 %v558
        %v1088 = vunpack.c.l.b16 %v559
        %v1089 = vunpack.c.h.b16 %v559
        %v1090 = vunpack.c.l.b16 %v560
        %v1091 = vunpack.c.h.b16 %v560
        %v1092 = vunpack.c.l.b16 %v561
        %v1093 = vunpack.c.h.b16 %v561
        %v1094 = vunpack.c.l.b16 %v562
        %v1095 = vunpack.c.h.b16 %v562
        %v1096 = vunpack.c.l.b16 %v563
        %v1097 = vunpack.c.h.b16 %v563
        %v1098 = vunpack.c.l.b16 %v564
        %v1099 = vunpack.c.h.b16 %v564
        %v1100 = vunpack.c.l.b16 %v565
        %v1101 = vunpack.c.h.b16 %v565
        %v1102 = vunpack.c.l.b16 %v566
        %v1103 = vunpack.c.h.b16 %v566
        %v1104 = vunpack.c.l.b16 %v567
        %v1105 = vunpack.c.h.b16 %v567
        %v1106 = vunpack.c.l.b16 %v568
        %v1107 = vunpack.c.h.b16 %v568
        %v1108 = vunpack.c.l.b16 %v569
        %v1109 = vunpack.c.h.b16 %v569
        %v1110 = vunpack.c.l.b16 %v570
        %v1111 = vunpack.c.h.b16 %v570
        %v1112 = vunpack.c.l.b16 %v571
        %v1113 = vunpack.c.h.b16 %v571
        %v1114 = vunpack.c.l.b16 %v572
        %v1115 = vunpack.c.h.b16 %v572
        %v1116 = vunpack.c.l.b16 %v573
        %v1117 = vunpack.c.h.b16 %v573
        %v1118 = vunpack.c.l.b16 %v574
        %v1119 = vunpack.c.h.b16 %v574
        %v1120 = vunpack.c.l.b16 %v575
        %v1121 = vunpack.c.h.b16 %v575
        %v1122 = vunpack.c.l.b16 %v576
        %v1123 = vunpack.c.h.b16 %v576
        %v1124 = vunpack.c.l.b16 %v577
        %v1125 = vunpack.c.h.b16 %v577
        %v1126 = vunpack.c.l.b16 %v578
        %v1127 = vunpack.c.h.b16 %v578
        %v1128 = vunpack.c.l.b16 %v579
        %v1129 = vunpack.c.h.b16 %v579
        %v1130 = vunpack.c.l.b16 %v580
        %v1131 = vunpack.c.h.b16 %v580
        %v1132 = vunpack.c.l.b16 %v581
        %v1133 = vunpack.c.h.b16 %v581
        %v1134 = vunpack.c.l.b16 %v582
        %v1135 = vunpack.c.h.b16 %v582
        %v1136 = vunpack.c.l.b16 %v583
        %v1137 = vunpack.c.h.b16 %v583
        %v1138 = vunpack.c.l.b16 %v584
        %v1139 = vunpack.c.h.b16 %v584
        %v1140 = vunpack.c.l.b16 %v585
        %v1141 = vunpack.c.h.b16 %v585
        %v1142 = vunpack.c.l.b16 %v586
        %v1143 = vunpack.c.h.b16 %v586
        %v1144 = vunpack.c.l.b16 %v587
        %v1145 = vunpack.c.h.b16 %v587
        %v1146 = vunpack.c.l.b16 %v588
        %v1147 = vunpack.c.h.b16 %v588
        %v1148 = vunpack.c.l.b16 %v589
        %v1149 = vunpack.c.h.b16 %v589
        %v1150 = vunpack.c.l.b16 %v590
        %v1151 = vunpack.c.h.b16 %v590
        %v1152 = vunpack.c.l.b16 %v591
        %v1153 = vunpack.c.h.b16 %v591
        %v1154 = vunpack.c.l.b16 %v592
        %v1155 = vunpack.c.h.b16 %v592
        %v1156 = vunpack.c.l.b16 %v593
        %v1157 = vunpack.c.h.b16 %v593
        %v1158 = vunpack.c.l.b16 %v594
        %v1159 = vunpack.c.h.b16 %v594
        %v1160 = vunpack.c.l.b16 %v595
        %v1161 = vunpack.c.h.b16 %v595
        %v1162 = vunpack.c.l.b16 %v596
        %v1163 = vunpack.c.h.b16 %v596
        %v1164 = vunpack.c.l.b16 %v597
        %v1165 = vunpack.c.h.b16 %v597
        %v1166 = vunpack.c.l.b16 %v598
        %v1167 = vunpack.c.h.b16 %v598
        %v1168 = vunpack.c.l.b16 %v599
        %v1169 = vunpack.c.h.b16 %v599
        %v1170 = vunpack.c.l.b16 %v600
        %v1171 = vunpack.c.h.b16 %v600
        %v1172 = vunpack.c.l.b16 %v601
        %v1173 = vunpack.c.h.b16 %v601
        %v1174 = vunpack.c.l.b16 %v602
        %v1175 = vunpack.c.h.b16 %v602
        %v1176 = vunpack.c.l.b16 %v603
        %v1177 = vunpack.c.h.b16 %v603
        %v1178 = vunpack.c.l.b16 %v604
        %v1179 = vunpack.c.h.b16 %v604
        %v1180 = vunpack.c.l.b16 %v605
        %v1181 = vunpack.c.h.b16 %v605
        %v1182 = vunpack.c.l.b16 %v606
        %v1183 = vunpack.c.h.b16 %v606
        %v1184 = vunpack.c.l.b16 %v607
        %v1185 = vunpack.c.h.b16 %v607
        %v1186 = vunpack.c.l.b16 %v608
        %v1187 = vunpack.c.h.b16 %v608
        %v1188 = vunpack.c.l.b16 %v609
        %v1189 = vunpack.c.h.b16 %v609
        %v1190 = vunpack.c.l.b16 %v610
        %v1191 = vunpack.c.h.b16 %v610
        %v1192 = vunpack.c.l.b16 %v611
        %v1193 = vunpack.c.h.b16 %v611
        %v1194 = vunpack.c.l.b16 %v612
        %v1195 = vunpack.c.h.b16 %v612
        %v1196 = vunpack.c.l.b16 %v613
        %v1197 = vunpack.c.h.b16 %v613
        %v1198 = vunpack.c.l.b16 %v614
        %v1199 = vunpack.c.h.b16 %v614
        %v1200 = vunpack.c.l.b16 %v615
        %v1201 = vunpack.c.h.b16 %v615
        %v1202 = vunpack.c.l.b16 %v616
        %v1203 = vunpack.c.h.b16 %v616
        %v1204 = vunpack.c.l.b16 %v617
        %v1205 = vunpack.c.h.b16 %v617
        %v1206 = vunpack.c.l.b16 %v618
        %v1207 = vunpack.c.h.b16 %v618
        %v1208 = vunpack.c.l.b16 %v619
        %v1209 = vunpack.c.h.b16 %v619
        %v1210 = vunpack.c.l.b16 %v620
        %v1211 = vunpack.c.h.b16 %v620
        %v1212 = vunpack.c.l.b16 %v621
        %v1213 = vunpack.c.h.b16 %v621
        %v1214 = vunpack.c.l.b16 %v622
        %v1215 = vunpack.c.h.b16 %v622
        %v1216 = vunpack.c.l.b16 %v623
        %v1217 = vunpack.c.h.b16 %v623
        %v1218 = vunpack.c.l.b16 %v624
        %v1219 = vunpack.c.h.b16 %v624
        %v1220 = vunpack.c.l.b16 %v625
        %v1221 = vunpack.c.h.b16 %v625
        %v1222 = vunpack.c.l.b16 %v626
        %v1223 = vunpack.c.h.b16 %v626
        %v1224 = vunpack.c.l.b16 %v627
        %v1225 = vunpack.c.h.b16 %v627
        %v1226 = vunpack.c.l.b16 %v628
        %v1227 = vunpack.c.h.b16 %v628
        %v1228 = vunpack.c.l.b16 %v629
        %v1229 = vunpack.c.h.b16 %v629
        %v1230 = vunpack.c.l.b16 %v630
        %v1231 = vunpack.c.h.b16 %v630
        %v1232 = vunpack.c.l.b16 %v631
        %v1233 = vunpack.c.h.b16 %v631
        %v1234 = vunpack.c.l.b16 %v632
        %v1235 = vunpack.c.h.b16 %v632
        %v1236 = vunpack.c.l.b16 %v633
        %v1237 = vunpack.c.h.b16 %v633
        %v1238 = vunpack.c.l.b16 %v634
        %v1239 = vunpack.c.h.b16 %v634
        %v1240 = vunpack.c.l.b16 %v635
        %v1241 = vunpack.c.h.b16 %v635
        %v1242 = vunpack.c.l.b16 %v636
        %v1243 = vunpack.c.h.b16 %v636
        %v1244 = vunpack.c.l.b16 %v637
        %v1245 = vunpack.c.h.b16 %v637
        %v1246 = vunpack.c.l.b16 %v638
        %v1247 = vunpack.c.h.b16 %v638
        %v1248 = vunpack.c.l.b16 %v639
        %v1249 = vunpack.c.h.b16 %v639
        %v1250 = vunpack.c.l.b16 %v640
        %v1251 = vunpack.c.h.b16 %v640
        %v1252 = vunpack.c.l.b16 %v641
        %v1253 = vunpack.c.h.b16 %v641
        %v1254 = vunpack.c.l.b16 %v642
        %v1255 = vunpack.c.h.b16 %v642
        %v1256 = vunpack.c.l.b16 %v643
        %v1257 = vunpack.c.h.b16 %v643
        %v1258 = vunpack.c.l.b16 %v644
        %v1259 = vunpack.c.h.b16 %v644
        %v1260 = vunpack.c.l.b16 %v645
        %v1261 = vunpack.c.h.b16 %v645
        %v1262 = vunpack.c.l.b16 %v646
        %v1263 = vunpack.c.h.b16 %v646
        %v1264 = vunpack.c.l.b16 %v647
        %v1265 = vunpack.c.h.b16 %v647
        %v1266 = vunpack.c.l.b16 %v648
        %v1267 = vunpack.c.h.b16 %v648
        %v1268 = vunpack.c.l.b16 %v649
        %v1269 = vunpack.c.h.b16 %v649
        %v1270 = vunpack.c.l.b16 %v650
        %v1271 = vunpack.c.h.b16 %v650
        %v1272 = vunpack.c.l.b16 %v651
        %v1273 = vunpack.c.h.b16 %v651
        %v1274 = vunpack.c.l.b16 %v652
        %v1275 = vunpack.c.h.b16 %v652
        %v1276 = vunpack.c.l.b16 %v653
        %v1277 = vunpack.c.h.b16 %v653
        %v1278 = vunpack.c.l.b16 %v654
        %v1279 = vunpack.c.h.b16 %v654
        %v1280 = vunpack.c.l.b16 %v655
        %v1281 = vunpack.c.h.b16 %v655
        %v1282 = vunpack.c.l.b16 %v656
        %v1283 = vunpack.c.h.b16 %v656
        %v1284 = vunpack.c.l.b16 %v657
        %v1285 = vunpack.c.h.b16 %v657
        %v1286 = vunpack.c.l.b16 %v658
        %v1287 = vunpack.c.h.b16 %v658
        %v1288 = vunpack.c.l.b16 %v659
        %v1289 = vunpack.c.h.b16 %v659
        %v1290 = vunpack.c.l.b16 %v660
        %v1291 = vunpack.c.h.b16 %v660
        %v1292 = vunpack.c.l.b16 %v661
        %v1293 = vunpack.c.h.b16 %v661
        %v1294 = vunpack.c.l.b16 %v662
        %v1295 = vunpack.c.h.b16 %v662
        %v1296 = vunpack.c.l.b16 %v663
        %v1297 = vunpack.c.h.b16 %v663
        %v1298 = vunpack.c.l.b16 %v664
        %v1299 = vunpack.c.h.b16 %v664
        %v1300 = vunpack.c.l.b16 %v665
        %v1301 = vunpack.c.h.b16 %v665
        %v1302 = vunpack.c.l.b16 %v666
        %v1303 = vunpack.c.h.b16 %v666
        %v1304 = vunpack.c.l.b16 %v667
        %v1305 = vunpack.c.h.b16 %v667
        %v1306 = vunpack.c.l.b16 %v668
        %v1307 = vunpack.c.h.b16 %v668
        %v1308 = vunpack.c.l.b16 %v669
        %v1309 = vunpack.c.h.b16 %v669
        %v1310 = vunpack.c.l.b16 %v670
        %v1311 = vunpack.c.h.b16 %v670
        %v1312 = vunpack.c.l.b16 %v671
        %v1313 = vunpack.c.h.b16 %v671
        %v1314 = vunpack.c.l.b16 %v672
        %v1315 = vunpack.c.h.b16 %v672
        %v1316 = vunpack.c.l.b16 %v673
        %v1317 = vunpack.c.h.b16 %v673
        %v1318 = vunpack.c.l.b16 %v674
        %v1319 = vunpack.c.h.b16 %v674
        %v1320 = vunpack.c.l.b16 %v675
        %v1321 = vunpack.c.h.b16 %v675
        %v1322 = vunpack.c.l.b16 %v676
        %v1323 = vunpack.c.h.b16 %v676
        %v1324 = vunpack.c.l.b16 %v677
        %v1325 = vunpack.c.h.b16 %v677
        %v1326 = vunpack.c.l.b16 %v678
        %v1327 = vunpack.c.h.b16 %v678
        %v1328 = vunpack.c.l.b16 %v679
        %v1329 = vunpack.c.h.b16 %v679
        %v1330 = vunpack.c.l.b16 %v680
        %v1331 = vunpack.c.h.b16 %v680
        %v1332 = vunpack.c.l.b16 %v681
        %v1333 = vunpack.c.h.b16 %v681
        %v1334 = vunpack.c.l.b16 %v682
        %v1335 = vunpack.c.h.b16 %v682
        %v1336 = vunpack.c.l.b16 %v683
        %v1337 = vunpack.c.h.b16 %v683
        %v1338 = vunpack.c.l.b16 %v684
        %v1339 = vunpack.c.h.b16 %v684
        %v1340 = vunpack.c.l.b16 %v685
        %v1341 = vunpack.c.h.b16 %v685
        %v1342 = vunpack.c.l.b16 %v686
        %v1343 = vunpack.c.h.b16 %v686
        %v1344 = vunpack.c.l.b16 %v687
        %v1345 = vunpack.c.h.b16 %v687
        %v1346 = vunpack.c.l.b16 %v688
        %v1347 = vunpack.c.h.b16 %v688
        %v1348 = vunpack.c.l.b16 %v689
        %v1349 = vunpack.c.h.b16 %v689
        %v1350 = vunpack.c.l.b16 %v690
        %v1351 = vunpack.c.h.b16 %v690
        %v1352 = vunpack.c.l.b16 %v691
        %v1353 = vunpack.c.h.b16 %v691
        %v1354 = vunpack.c.l.b16 %v692
        %v1355 = vunpack.c.h.b16 %v692
        %v1356 = vunpack.c.l.b16 %v693
        %v1357 = vunpack.c.h.b16 %v693
        %v1358 = vunpack.c.l.b16 %v694
        %v1359 = vunpack.c.h.b16 %v694
        %v1360 = vunpack.c.l.b16 %v695
        %v1361 = vunpack.c.h.b16 %v695
        %v1362 = vunpack.c.l.b16 %v696
        %v1363 = vunpack.c.h.b16 %v696
        %v1364 = vunpack.c.l.b16 %v697
        %v1365 = vunpack.c.h.b16 %v697
        %v1366 = vunpack.c.l.b16 %v698
        %v1367 = vunpack.c.h.b16 %v698
        %v1368 = vunpack.c.l.b16 %v699
        %v1369 = vunpack.c.h.b16 %v699
        %v1370 = vunpack.c.l.b16 %v700
        %v1371 = vunpack.c.h.b16 %v700
        %v1372 = vunpack.c.l.b16 %v701
        %v1373 = vunpack.c.h.b16 %v701
        %v1374 = vunpack.c.l.b16 %v702
        %v1375 = vunpack.c.h.b16 %v702
        %v1376 = vunpack.c.l.b16 %v703
        %v1377 = vunpack.c.h.b16 %v703
        %v1378 = vunpack.c.l.b16 %v704
        %v1379 = vunpack.c.h.b16 %v704
        %v1380 = vunpack.c.l.b16 %v705
        %v1381 = vunpack.c.h.b16 %v705
        %v1382 = vunpack.c.l.b16 %v706
        %v1383 = vunpack.c.h.b16 %v706
        %v1384 = vunpack.c.l.b16 %v707
        %v1385 = vunpack.c.h.b16 %v707
        %v1386 = vunpack.c.l.b16 %v708
        %v1387 = vunpack.c.h.b16 %v708
        %v1388 = vunpack.c.l.b16 %v709
        %v1389 = vunpack.c.h.b16 %v709
        %v1390 = vunpack.c.l.b16 %v710
        %v1391 = vunpack.c.h.b16 %v710
        %v1392 = vunpack.c.l.b16 %v711
        %v1393 = vunpack.c.h.b16 %v711
        %v1394 = vunpack.c.l.b16 %v712
        %v1395 = vunpack.c.h.b16 %v712
        %v1396 = vunpack.c.l.b16 %v713
        %v1397 = vunpack.c.h.b16 %v713
        %v1398 = vunpack.c.l.b16 %v714
        %v1399 = vunpack.c.h.b16 %v714
        %v1400 = vunpack.c.l.b16 %v715
        %v1401 = vunpack.c.h.b16 %v715
        %v1402 = vunpack.c.l.b16 %v716
        %v1403 = vunpack.c.h.b16 %v716
        %v1404 = vunpack.c.l.b16 %v717
        %v1405 = vunpack.c.h.b16 %v717
        %v1406 = vunpack.c.l.b16 %v718
        %v1407 = vunpack.c.h.b16 %v718
        %v1408 = vunpack.c.l.b16 %v719
        %v1409 = vunpack.c.h.b16 %v719
        %v1410 = vunpack.c.l.b16 %v720
        %v1411 = vunpack.c.h.b16 %v720
        %v1412 = vunpack.c.l.b16 %v721
        %v1413 = vunpack.c.h.b16 %v721
        %v1414 = vunpack.c.l.b16 %v722
        %v1415 = vunpack.c.h.b16 %v722
        %v1416 = vunpack.c.l.b16 %v723
        %v1417 = vunpack.c.h.b16 %v723
        %v1418 = vpack.c.b16 %v974, %v970
        %v1419 = vpack.c.b16 %v975, %v971
        %v1420 = vpack.c.b16 %v976, %v972
        %v1421 = vpack.c.b16 %v977, %v973
        %v1422 = vpack.c.b16 %v982, %v978
        %v1423 = vpack.c.b16 %v983, %v979
        %v1424 = vpack.c.b16 %v984, %v980
        %v1425 = vpack.c.b16 %v985, %v981
        %v1426 = vpack.c.b16 %v990, %v986
        %v1427 = vpack.c.b16 %v991, %v987
        %v1428 = vpack.c.b16 %v992, %v988
        %v1429 = vpack.c.b16 %v993, %v989
        %v1430 = vpack.c.b16 %v998, %v994
        %v1431 = vpack.c.b16 %v999, %v995
        %v1432 = vpack.c.b16 %v1000, %v996
        %v1433 = vpack.c.b16 %v1001, %v997
        %v1434 = vpack.c.b16 %v1006, %v1002
        %v1435 = vpack.c.b16 %v1007, %v1003
        %v1436 = vpack.c.b16 %v1008, %v1004
        %v1437 = vpack.c.b16 %v1009, %v1005
        %v1438 = vpack.c.b16 %v1014, %v1010
        %v1439 = vpack.c.b16 %v1015, %v1011
        %v1440 = vpack.c.b16 %v1016, %v1012
        %v1441 = vpack.c.b16 %v1017, %v1013
        %v1442 = vpack.c.b16 %v1022, %v1018
        %v1443 = vpack.c.b16 %v1023, %v1019
        %v1444 = vpack.c.b16 %v1024, %v1020
        %v1445 = vpack.c.b16 %v1025, %v1021
        %v1446 = vpack.c.b16 %v1030, %v1026
        %v1447 = vpack.c.b16 %v1031, %v1027
        %v1448 = vpack.c.b16 %v1032, %v1028
        %v1449 = vpack.c.b16 %v1033, %v1029
        %v1450 = vpack.c.b16 %v1038, %v1034
        %v1451 = vpack.c.b16 %v1039, %v1035
        %v1452 = vpack.c.b16 %v1040, %v1036
        %v1453 = vpack.c.b16 %v1041, %v1037
        %v1454 = vpack.c.b16 %v1046, %v1042
        %v1455 = vpack.c.b16 %v1047, %v1043
        %v1456 = vpack.c.b16 %v1048, %v1044
        %v1457 = vpack.c.b16 %v1049, %v1045
        %v1458 = vpack.c.b16 %v1054, %v1050
        %v1459 = vpack.c.b16 %v1055, %v1051
        %v1460 = vpack.c.b16 %v1056, %v1052
        %v1461 = vpack.c.b16 %v1057, %v1053
        %v1462 = vpack.c.b16 %v1062, %v1058
        %v1463 = vpack.c.b16 %v1063, %v1059
        %v1464 = vpack.c.b16 %v1064, %v1060
        %v1465 = vpack.c.b16 %v1065, %v1061
        %v1466 = vpack.c.b16 %v1070, %v1066
        %v1467 = vpack.c.b16 %v1071, %v1067
        %v1468 = vpack.c.b16 %v1072, %v1068
        %v1469 = vpack.c.b16 %v1073, %v1069
        %v1470 = vpack.c.b16 %v1078, %v1074
        %v1471 = vpack.c.b16 %v1079, %v1075
        %v1472 = vpack.c.b16 %v1080, %v1076
        %v1473 = vpack.c.b16 %v1081, %v1077
        %v1474 = vpack.c.b16 %v1086, %v1082
        %v1475 = vpack.c.b16 %v1087, %v1083
        %v1476 = vpack.c.b16 %v1088, %v1084
        %v1477 = vpack.c.b16 %v1089, %v1085
        %v1478 = vpack.c.b16 %v1094, %v1090
        %v1479 = vpack.c.b16 %v1095, %v1091
        %v1480 = vpack.c.b16 %v1096, %v1092
        %v1481 = vpack.c.b16 %v1097, %v1093
        %v1482 = vpack.c.b16 %v1102, %v1098
        %v1483 = vpack.c.b16 %v1103, %v1099
        %v1484 = vpack.c.b16 %v1104, %v1100
        %v1485 = vpack.c.b16 %v1105, %v1101
        %v1486 = vpack.c.b16 %v1110, %v1106
        %v1487 = vpack.c.b16 %v1111, %v1107
        %v1488 = vpack.c.b16 %v1112, %v1108
        %v1489 = vpack.c.b16 %v1113, %v1109
        %v1490 = vpack.c.b16 %v1118, %v1114
        %v1491 = vpack.c.b16 %v1119, %v1115
        %v1492 = vpack.c.b16 %v1120, %v1116
        %v1493 = vpack.c.b16 %v1121, %v1117
        %v1494 = vpack.c.b16 %v1126, %v1122
        %v1495 = vpack.c.b16 %v1127, %v1123
        %v1496 = vpack.c.b16 %v1128, %v1124
        %v1497 = vpack.c.b16 %v1129, %v1125
        %v1498 = vpack.c.b16 %v1134, %v1130
        %v1499 = vpack.c.b16 %v1135, %v1131
        %v1500 = vpack.c.b16 %v1136, %v1132
        %v1501 = vpack.c.b16 %v1137, %v1133
        %v1502 = vpack.c.b16 %v1142, %v1138
        %v1503 = vpack.c.b16 %v1143, %v1139
        %v1504 = vpack.c.b16 %v1144, %v1140
        %v1505 = vpack.c.b16 %v1145, %v1141
        %v1506 = vpack.c.b16 %v1150, %v1146
        %v1507 = vpack.c.b16 %v1151, %v1147
        %v1508 = vpack.c.b16 %v1152, %v1148
        %v1509 = vpack.c.b16 %v1153, %v1149
        %v1510 = vpack.c.b16 %v1158, %v1154
        %v1511 = vpack.c.b16 %v1159, %v1155
        %v1512 = vpack.c.b16 %v1160, %v1156
        %v1513 = vpack.c.b16 %v1161, %v1157
        %v1514 = vpack.c.b16 %v1166, %v1162
        %v1515 = vpack.c.b16 %v1167, %v1163
        %v1516 = vpack.c.b16 %v1168, %v1164
        %v1517 = vpack.c.b16 %v1169, %v1165
        %v1518 = vpack.c.b16 %v1174, %v1170
        %v1519 = vpack.c.b16 %v1175, %v1171
        %v1520 = vpack.c.b16 %v1176, %v1172
        %v1521 = vpack.c.b16 %v1177, %v1173
        %v1522 = vpack.c.b16 %v1182, %v1178
        %v1523 = vpack.c.b16 %v1183, %v1179
        %v1524 = vpack.c.b16 %v1184, %v1180
        %v1525 = vpack.c.b16 %v1185, %v1181
        %v1526 = vpack.c.b16 %v1190, %v1186
        %v1527 = vpack.c.b16 %v1191, %v1187
        %v1528 = vpack.c.b16 %v1192, %v1188
        %v1529 = vpack.c.b16 %v1193, %v1189
        %v1530 = vpack.c.b16 %v1198, %v1194
        %v1531 = vpack.c.b16 %v1199, %v1195
        %v1532 = vpack.c.b16 %v1200, %v1196
        %v1533 = vpack.c.b16 %v1201, %v1197
        %v1534 = vpack.c.b16 %v1206, %v1202
        %v1535 = vpack.c.b16 %v1207, %v1203
        %v1536 = vpack.c.b16 %v1208, %v1204
        %v1537 = vpack.c.b16 %v1209, %v1205
        %v1538 = vpack.c.b16 %v1214, %v1210
        %v1539 = vpack.c.b16 %v1215, %v1211
        %v1540 = vpack.c.b16 %v1216, %v1212
        %v1541 = vpack.c.b16 %v1217, %v1213
        %v1542 = vpack.c.b16 %v1222, %v1218
        %v1543 = vpack.c.b16 %v1223, %v1219
        %v1544 = vpack.c.b16 %v1224, %v1220
        %v1545 = vpack.c.b16 %v1225, %v1221
        %v1546 = vpack.c.b16 %v1230, %v1226
        %v1547 = vpack.c.b16 %v1231, %v1227
        %v1548 = vpack.c.b16 %v1232, %v1228
        %v1549 = vpack.c.b16 %v1233, %v1229
        %v1550 = vpack.c.b16 %v1238, %v1234
        %v1551 = vpack.c.b16 %v1239, %v1235
        %v1552 = vpack.c.b16 %v1240, %v1236
        %v1553 = vpack.c.b16 %v1241, %v1237
        %v1554 = vpack.c.b16 %v1246, %v1242
        %v1555 = vpack.c.b16 %v1247, %v1243
        %v1556 = vpack.c.b16 %v1248, %v1244
        %v1557 = vpack.c.b16 %v1249, %v1245
        %v1558 = vpack.c.b16 %v1254, %v1250
        %v1559 = vpack.c.b16 %v1255, %v1251
        %v1560 = vpack.c.b16 %v1256, %v1252
        %v1561 = vpack.c.b16 %v1257, %v1253
        %v1562 = vpack.c.b16 %v1262, %v1258
        %v1563 = vpack.c.b16 %v1263, %v1259
        %v1564 = vpack.c.b16 %v1264, %v1260
        %v1565 = vpack.c.b16 %v1265, %v1261
        %v1566 = vpack.c.b16 %v1270, %v1266
        %v1567 = vpack.c.b16 %v1271, %v1267
        %v1568 = vpack.c.b16 %v1272, %v1268
        %v1569 = vpack.c.b16 %v1273, %v1269
        %v1570 = vpack.c.b16 %v1278, %v1274
        %v1571 = vpack.c.b16 %v1279, %v1275
        %v1572 = vpack.c.b16 %v1280, %v1276
        %v1573 = vpack.c.b16 %v1281, %v1277
        %v1574 = vpack.c.b16 %v1286, %v1282
        %v1575 = vpack.c.b16 %v1287, %v1283
        %v1576 = vpack.c.b16 %v1288, %v1284
        %v1577 = vpack.c.b16 %v1289, %v1285
        %v1578 = vpack.c.b16 %v1294, %v1290
        %v1579 = vpack.c.b16 %v1295, %v1291
        %v1580 = vpack.c.b16 %v1296, %v1292
        %v1581 = vpack.c.b16 %v1297, %v1293
        %v1582 = vpack.c.b16 %v1302, %v1298
        %v1583 = vpack.c.b16 %v1303, %v1299
        %v1584 = vpack.c.b16 %v1304, %v1300
        %v1585 = vpack.c.b16 %v1305, %v1301
        %v1586 = vpack.c.b16 %v1310, %v1306
        %v1587 = vpack.c.b16 %v1311, %v1307
        %v1588 = vpack.c.b16 %v1312, %v1308
        %v1589 = vpack.c.b16 %v1313, %v1309
        %v1590 = vpack.c.b16 %v1318, %v1314
        %v1591 = vpack.c.b16 %v1319, %v1315
        %v1592 = vpack.c.b16 %v1320, %v1316
        %v1593 = vpack.c.b16 %v1321, %v1317
        %v1594 = vpack.c.b16 %v1326, %v1322
        %v1595 = vpack.c.b16 %v1327, %v1323
        %v1596 = vpack.c.b16 %v1328, %v1324
        %v1597 = vpack.c.b16 %v1329, %v1325
        %v1598 = vpack.c.b16 %v1334, %v1330
        %v1599 = vpack.c.b16 %v1335, %v1331
        %v1600 = vpack.c.b16 %v1336, %v1332
        %v1601 = vpack.c.b16 %v1337, %v1333
        %v1602 = vpack.c.b16 %v1342, %v1338
        %v1603 = vpack.c.b16 %v1343, %v1339
        %v1604 = vpack.c.b16 %v1344, %v1340
        %v1605 = vpack.c.b16 %v1345, %v1341
        %v1606 = vpack.c.b16 %v1350, %v1346
        %v1607 = vpack.c.b16 %v1351, %v1347
        %v1608 = vpack.c.b16 %v1352, %v1348
        %v1609 = vpack.c.b16 %v1353, %v1349
        %v1610 = vpack.c.b16 %v1358, %v1354
        %v1611 = vpack.c.b16 %v1359, %v1355
        %v1612 = vpack.c.b16 %v1360, %v1356
        %v1613 = vpack.c.b16 %v1361, %v1357
        %v1614 = vpack.c.b16 %v1366, %v1362
        %v1615 = vpack.c.b16 %v1367, %v1363
        %v1616 = vpack.c.b16 %v1368, %v1364
        %v1617 = vpack.c.b16 %v1369, %v1365
        %v1618 = vpack.c.b16 %v1374, %v1370
        %v1619 = vpack.c.b16 %v1375, %v1371
        %v1620 = vpack.c.b16 %v1376, %v1372
        %v1621 = vpack.c.b16 %v1377, %v1373
        %v1622 = vpack.c.b16 %v1382, %v1378
        %v1623 = vpack.c.b16 %v1383, %v1379
        %v1624 = vpack.c.b16 %v1384, %v1380
        %v1625 = vpack.c.b16 %v1385, %v1381
        %v1626 = vpack.c.b16 %v1390, %v1386
        %v1627 = vpack.c.b16 %v1391, %v1387
        %v1628 = vpack.c.b16 %v1392, %v1388
        %v1629 = vpack.c.b16 %v1393, %v1389
        %v1630 = vpack.c.b16 %v1398, %v1394
        %v1631 = vpack.c.b16 %v1399, %v1395
        %v1632 = vpack.c.b16 %v1400, %v1396
        %v1633 = vpack.c.b16 %v1401, %v1397
        %v1634 = vpack.c.b16 %v1406, %v1402
        %v1635 = vpack.c.b16 %v1407, %v1403
        %v1636 = vpack.c.b16 %v1408, %v1404
        %v1637 = vpack.c.b16 %v1409, %v1405
        %v1638 = vpack.c.b16 %v1414, %v1410
        %v1639 = vpack.c.b16 %v1415, %v1411
        %v1640 = vpack.c.b16 %v1416, %v1412
        %v1641 = vpack.c.b16 %v1417, %v1413
        %1866 = vmatprep.subr.bf16.mxu0 %v1447
        %1867 = vmatpush1.bf16.msra.mxu0 %v1446
        %1868 = vmatprep.subr.bf16.mxu0 %v1443
        %1869 = vmatpush1.bf16.msra.mxu0 %v1442
        %1870 = vmatprep.subr.bf16.mxu0 %v1439
        %1871 = vmatpush1.bf16.msra.mxu0 %v1438
        %1872 = vmatprep.subr.bf16.mxu0 %v1435
        %1873 = vmatpush1.bf16.msra.mxu0 %v1434
        %1874 = vmatprep.subr.bf16.mxu0 %v1431
        %1875 = vmatpush1.bf16.msra.mxu0 %v1430
        %1876 = vmatprep.subr.bf16.mxu0 %v1427
        %1877 = vmatpush1.bf16.msra.mxu0 %v1426
        %1878 = vmatprep.subr.bf16.mxu0 %v1423
        %1879 = vmatpush1.bf16.msra.mxu0 %v1422
        %1880 = vmatprep.subr.bf16.mxu0 %v1419
        %1881 = vmatpush1.bf16.msra.mxu0 %v1418
        %1882 = vmatprep.subr.bf16.mxu0 %v1479
        %1883 = vmatpush2.bf16.msra.mxu0 %v1478
        %1884 = vmatprep.subr.bf16.mxu0 %v1475
        %1885 = vmatpush2.bf16.msra.mxu0 %v1474
        %1886 = vmatprep.subr.bf16.mxu0 %v1471
        %1887 = vmatpush2.bf16.msra.mxu0 %v1470
        %1888 = vmatprep.subr.bf16.mxu0 %v1467
        %1889 = vmatpush2.bf16.msra.mxu0 %v1466
        %1890 = vmatprep.subr.bf16.mxu0 %v1463
        %1891 = vmatpush2.bf16.msra.mxu0 %v1462
        %1892 = vmatprep.subr.bf16.mxu0 %v1459
        %1893 = vmatpush2.bf16.msra.mxu0 %v1458
        %1894 = vmatprep.subr.bf16.mxu0 %v1455
        %1895 = vmatpush2.bf16.msra.mxu0 %v1454
        %1896 = vmatprep.subr.bf16.mxu0 %v1451
        %1897 = vmatpush2.bf16.msra.mxu0 %v1450
        %1898 = vmatprep.mubr.bf16.mxu0 %v494
        %1899 = vmatmul.mubr.bf16.gmra.mxu0 %v493
        %v1900 = vpop.f32.mrf.mxu0
        %v1901 = vadd.f32 %v729, %v1900
        %v1902 = vpop.f32.mrf.mxu0
        %v1903 = vadd.f32 %v733, %v1902
        %v1904 = vpop.f32.mrf.mxu0
        %v1905 = vpop.f32.mrf.mxu0
        %1906 = vdwg.mxu0
        %1907 = vmatprep.subr.bf16.mxu0 %v1511
        %1908 = vmatpush1.bf16.msra.mxu0 %v1510
        %1909 = vmatprep.subr.bf16.mxu0 %v1507
        %1910 = vmatpush1.bf16.msra.mxu0 %v1506
        %1911 = vmatprep.subr.bf16.mxu0 %v1503
        %1912 = vmatpush1.bf16.msra.mxu0 %v1502
        %1913 = vmatprep.subr.bf16.mxu0 %v1499
        %1914 = vmatpush1.bf16.msra.mxu0 %v1498
        %1915 = vmatprep.subr.bf16.mxu0 %v1495
        %1916 = vmatpush1.bf16.msra.mxu0 %v1494
        %1917 = vmatprep.subr.bf16.mxu0 %v1491
        %1918 = vmatpush1.bf16.msra.mxu0 %v1490
        %1919 = vmatprep.subr.bf16.mxu0 %v1487
        %1920 = vmatpush1.bf16.msra.mxu0 %v1486
        %1921 = vmatprep.subr.bf16.mxu0 %v1483
        %1922 = vmatpush1.bf16.msra.mxu0 %v1482
        %1923 = vmatprep.subr.bf16.mxu0 %v1543
        %1924 = vmatpush2.bf16.msra.mxu0 %v1542
        %1925 = vmatprep.subr.bf16.mxu0 %v1539
        %1926 = vmatpush2.bf16.msra.mxu0 %v1538
        %1927 = vmatprep.subr.bf16.mxu0 %v1535
        %1928 = vmatpush2.bf16.msra.mxu0 %v1534
        %1929 = vmatprep.subr.bf16.mxu0 %v1531
        %1930 = vmatpush2.bf16.msra.mxu0 %v1530
        %1931 = vmatprep.subr.bf16.mxu0 %v1527
        %1932 = vmatpush2.bf16.msra.mxu0 %v1526
        %1933 = vmatprep.subr.bf16.mxu0 %v1523
        %1934 = vmatpush2.bf16.msra.mxu0 %v1522
        %1935 = vmatprep.subr.bf16.mxu0 %v1519
        %1936 = vmatpush2.bf16.msra.mxu0 %v1518
        %1937 = vmatprep.subr.bf16.mxu0 %v1515
        %1938 = vmatpush2.bf16.msra.mxu0 %v1514
        %1939 = vmatprep.mubr.bf16.mxu0 %v496
        %1940 = vmatmul.mubr.bf16.gmra.mxu0 %v495
        %v1941 = vpop.f32.mrf.mxu0
        %v1942 = vadd.f32 %v1901, %v1941
        %v1943 = vpop.f32.mrf.mxu0
        %v1944 = vadd.f32 %v1903, %v1943
        %v1945 = vpop.f32.mrf.mxu0
        %v1946 = vpop.f32.mrf.mxu0
        %1947 = vdwg.mxu0
        %1948 = vmatprep.subr.bf16.mxu0 %v1575
        %1949 = vmatpush1.bf16.msra.mxu0 %v1574
        %1950 = vmatprep.subr.bf16.mxu0 %v1571
        %1951 = vmatpush1.bf16.msra.mxu0 %v1570
        %1952 = vmatprep.subr.bf16.mxu0 %v1567
        %1953 = vmatpush1.bf16.msra.mxu0 %v1566
        %1954 = vmatprep.subr.bf16.mxu0 %v1563
        %1955 = vmatpush1.bf16.msra.mxu0 %v1562
        %1956 = vmatprep.subr.bf16.mxu0 %v1559
        %1957 = vmatpush1.bf16.msra.mxu0 %v1558
        %1958 = vmatprep.subr.bf16.mxu0 %v1555
        %1959 = vmatpush1.bf16.msra.mxu0 %v1554
        %1960 = vmatprep.subr.bf16.mxu0 %v1551
        %1961 = vmatpush1.bf16.msra.mxu0 %v1550
        %1962 = vmatprep.subr.bf16.mxu0 %v1547
        %1963 = vmatpush1.bf16.msra.mxu0 %v1546
        %1964 = vmatprep.subr.bf16.mxu0 %v1607
        %1965 = vmatpush2.bf16.msra.mxu0 %v1606
        %1966 = vmatprep.subr.bf16.mxu0 %v1603
        %1967 = vmatpush2.bf16.msra.mxu0 %v1602
        %1968 = vmatprep.subr.bf16.mxu0 %v1599
        %1969 = vmatpush2.bf16.msra.mxu0 %v1598
        %1970 = vmatprep.subr.bf16.mxu0 %v1595
        %1971 = vmatpush2.bf16.msra.mxu0 %v1594
        %1972 = vmatprep.subr.bf16.mxu0 %v1591
        %1973 = vmatpush2.bf16.msra.mxu0 %v1590
        %1974 = vmatprep.subr.bf16.mxu0 %v1587
        %1975 = vmatpush2.bf16.msra.mxu0 %v1586
        %1976 = vmatprep.subr.bf16.mxu0 %v1583
        %1977 = vmatpush2.bf16.msra.mxu0 %v1582
        %1978 = vmatprep.subr.bf16.mxu0 %v1579
        %1979 = vmatpush2.bf16.msra.mxu0 %v1578
        %1980 = vmatprep.mubr.bf16.mxu0 %v498
        %1981 = vmatmul.mubr.bf16.gmra.mxu0 %v497
        %v1982 = vpop.f32.mrf.mxu0
        %v1983 = vadd.f32 %v1942, %v1982
        %v1984 = vpop.f32.mrf.mxu0
        %v1985 = vadd.f32 %v1944, %v1984
        %v1986 = vpop.f32.mrf.mxu0
        %v1987 = vpop.f32.mrf.mxu0
        %1988 = vdwg.mxu0
        %1989 = vmatprep.subr.bf16.mxu0 %v1639
        %1990 = vmatpush1.bf16.msra.mxu0 %v1638
        %1991 = vmatprep.subr.bf16.mxu0 %v1635
        %1992 = vmatpush1.bf16.msra.mxu0 %v1634
        %1993 = vmatprep.subr.bf16.mxu0 %v1631
        %1994 = vmatpush1.bf16.msra.mxu0 %v1630
        %1995 = vmatprep.subr.bf16.mxu0 %v1627
        %1996 = vmatpush1.bf16.msra.mxu0 %v1626
        %1997 = vmatprep.subr.bf16.mxu0 %v1623
        %1998 = vmatpush1.bf16.msra.mxu0 %v1622
        %1999 = vmatprep.subr.bf16.mxu0 %v1619
        %2000 = vmatpush1.bf16.msra.mxu0 %v1618
        %2001 = vmatprep.subr.bf16.mxu0 %v1615
        %2002 = vmatpush1.bf16.msra.mxu0 %v1614
        %2003 = vmatprep.subr.bf16.mxu0 %v1611
        %2004 = vmatpush1.bf16.msra.mxu0 %v1610
        %2005 = vmatprep.subr.bf16.mxu0 0
        %2006 = vmatpush2.bf16.msra.mxu0 0
        %2007 = vmatprep.subr.bf16.mxu0 0
        %2008 = vmatpush2.bf16.msra.mxu0 0
        %2009 = vmatprep.subr.bf16.mxu0 0
        %2010 = vmatpush2.bf16.msra.mxu0 0
        %2011 = vmatprep.subr.bf16.mxu0 0
        %2012 = vmatpush2.bf16.msra.mxu0 0
        %2013 = vmatprep.subr.bf16.mxu0 0
        %2014 = vmatpush2.bf16.msra.mxu0 0
        %2015 = vmatprep.subr.bf16.mxu0 0
        %2016 = vmatpush2.bf16.msra.mxu0 0
        %2017 = vmatprep.subr.bf16.mxu0 0
        %2018 = vmatpush2.bf16.msra.mxu0 0
        %2019 = vmatprep.subr.bf16.mxu0 0
        %2020 = vmatpush2.bf16.msra.mxu0 0
        %2021 = vmatprep.mubr.bf16.mxu0 0
        %2022 = vmatmul.mubr.bf16.gmra.mxu0 %v499
        %v2023 = vpop.f32.mrf.mxu0
        %v2024 = vadd.f32 %v1983, %v2023
        %v2025 = vpop.f32.mrf.mxu0
        %v2026 = vadd.f32 %v1985, %v2025
        %v2027 = vpop.f32.mrf.mxu0
        %v2028 = vpop.f32.mrf.mxu0
        %2029 = vdwg.mxu0
        %2030 = vmatprep.subr.bf16.mxu0 %v1449
        %2031 = vmatpush1.bf16.msra.mxu0 %v1448
        %2032 = vmatprep.subr.bf16.mxu0 %v1445
        %2033 = vmatpush1.bf16.msra.mxu0 %v1444
        %2034 = vmatprep.subr.bf16.mxu0 %v1441
        %2035 = vmatpush1.bf16.msra.mxu0 %v1440
        %2036 = vmatprep.subr.bf16.mxu0 %v1437
        %2037 = vmatpush1.bf16.msra.mxu0 %v1436
        %2038 = vmatprep.subr.bf16.mxu0 %v1433
        %2039 = vmatpush1.bf16.msra.mxu0 %v1432
        %2040 = vmatprep.subr.bf16.mxu0 %v1429
        %2041 = vmatpush1.bf16.msra.mxu0 %v1428
        %2042 = vmatprep.subr.bf16.mxu0 %v1425
        %2043 = vmatpush1.bf16.msra.mxu0 %v1424
        %2044 = vmatprep.subr.bf16.mxu0 %v1421
        %2045 = vmatpush1.bf16.msra.mxu0 %v1420
        %2046 = vmatprep.subr.bf16.mxu0 %v1481
        %2047 = vmatpush2.bf16.msra.mxu0 %v1480
        %2048 = vmatprep.subr.bf16.mxu0 %v1477
        %2049 = vmatpush2.bf16.msra.mxu0 %v1476
        %2050 = vmatprep.subr.bf16.mxu0 %v1473
        %2051 = vmatpush2.bf16.msra.mxu0 %v1472
        %2052 = vmatprep.subr.bf16.mxu0 %v1469
        %2053 = vmatpush2.bf16.msra.mxu0 %v1468
        %2054 = vmatprep.subr.bf16.mxu0 %v1465
        %2055 = vmatpush2.bf16.msra.mxu0 %v1464
        %2056 = vmatprep.subr.bf16.mxu0 %v1461
        %2057 = vmatpush2.bf16.msra.mxu0 %v1460
        %2058 = vmatprep.subr.bf16.mxu0 %v1457
        %2059 = vmatpush2.bf16.msra.mxu0 %v1456
        %2060 = vmatprep.subr.bf16.mxu0 %v1453
        %2061 = vmatpush2.bf16.msra.mxu0 %v1452
        %2062 = vmatprep.mubr.bf16.mxu0 %v494
        %2063 = vmatmul.mubr.bf16.gmra.mxu0 %v493
        %v2064 = vpop.f32.mrf.mxu0
        %v2065 = vadd.f32 %v737, %v2064
        %v2066 = vpop.f32.mrf.mxu0
        %v2067 = vadd.f32 %v741, %v2066
        %v2068 = vpop.f32.mrf.mxu0
        %v2069 = vpop.f32.mrf.mxu0
        %2070 = vdwg.mxu0
        %2071 = vmatprep.subr.bf16.mxu0 %v1513
        %2072 = vmatpush1.bf16.msra.mxu0 %v1512
        %2073 = vmatprep.subr.bf16.mxu0 %v1509
        %2074 = vmatpush1.bf16.msra.mxu0 %v1508
        %2075 = vmatprep.subr.bf16.mxu0 %v1505
        %2076 = vmatpush1.bf16.msra.mxu0 %v1504
        %2077 = vmatprep.subr.bf16.mxu0 %v1501
        %2078 = vmatpush1.bf16.msra.mxu0 %v1500
        %2079 = vmatprep.subr.bf16.mxu0 %v1497
        %2080 = vmatpush1.bf16.msra.mxu0 %v1496
        %2081 = vmatprep.subr.bf16.mxu0 %v1493
        %2082 = vmatpush1.bf16.msra.mxu0 %v1492
        %2083 = vmatprep.subr.bf16.mxu0 %v1489
        %2084 = vmatpush1.bf16.msra.mxu0 %v1488
        %2085 = vmatprep.subr.bf16.mxu0 %v1485
        %2086 = vmatpush1.bf16.msra.mxu0 %v1484
        %2087 = vmatprep.subr.bf16.mxu0 %v1545
        %2088 = vmatpush2.bf16.msra.mxu0 %v1544
        %2089 = vmatprep.subr.bf16.mxu0 %v1541
        %2090 = vmatpush2.bf16.msra.mxu0 %v1540
        %2091 = vmatprep.subr.bf16.mxu0 %v1537
        %2092 = vmatpush2.bf16.msra.mxu0 %v1536
        %2093 = vmatprep.subr.bf16.mxu0 %v1533
        %2094 = vmatpush2.bf16.msra.mxu0 %v1532
        %2095 = vmatprep.subr.bf16.mxu0 %v1529
        %2096 = vmatpush2.bf16.msra.mxu0 %v1528
        %2097 = vmatprep.subr.bf16.mxu0 %v1525
        %2098 = vmatpush2.bf16.msra.mxu0 %v1524
        %2099 = vmatprep.subr.bf16.mxu0 %v1521
        %2100 = vmatpush2.bf16.msra.mxu0 %v1520
        %2101 = vmatprep.subr.bf16.mxu0 %v1517
        %2102 = vmatpush2.bf16.msra.mxu0 %v1516
        %2103 = vmatprep.mubr.bf16.mxu0 %v496
        %2104 = vmatmul.mubr.bf16.gmra.mxu0 %v495
        %v2105 = vpop.f32.mrf.mxu0
        %v2106 = vadd.f32 %v2065, %v2105
        %v2107 = vpop.f32.mrf.mxu0
        %v2108 = vadd.f32 %v2067, %v2107
        %v2109 = vpop.f32.mrf.mxu0
        %v2110 = vpop.f32.mrf.mxu0
        %2111 = vdwg.mxu0
        %2112 = vmatprep.subr.bf16.mxu0 %v1577
        %2113 = vmatpush1.bf16.msra.mxu0 %v1576
        %2114 = vmatprep.subr.bf16.mxu0 %v1573
        %2115 = vmatpush1.bf16.msra.mxu0 %v1572
        %2116 = vmatprep.subr.bf16.mxu0 %v1569
        %2117 = vmatpush1.bf16.msra.mxu0 %v1568
        %2118 = vmatprep.subr.bf16.mxu0 %v1565
        %2119 = vmatpush1.bf16.msra.mxu0 %v1564
        %2120 = vmatprep.subr.bf16.mxu0 %v1561
        %2121 = vmatpush1.bf16.msra.mxu0 %v1560
        %2122 = vmatprep.subr.bf16.mxu0 %v1557
        %2123 = vmatpush1.bf16.msra.mxu0 %v1556
        %2124 = vmatprep.subr.bf16.mxu0 %v1553
        %2125 = vmatpush1.bf16.msra.mxu0 %v1552
        %2126 = vmatprep.subr.bf16.mxu0 %v1549
        %2127 = vmatpush1.bf16.msra.mxu0 %v1548
        %2128 = vmatprep.subr.bf16.mxu0 %v1609
        %2129 = vmatpush2.bf16.msra.mxu0 %v1608
        %2130 = vmatprep.subr.bf16.mxu0 %v1605
        %2131 = vmatpush2.bf16.msra.mxu0 %v1604
        %2132 = vmatprep.subr.bf16.mxu0 %v1601
        %2133 = vmatpush2.bf16.msra.mxu0 %v1600
        %2134 = vmatprep.subr.bf16.mxu0 %v1597
        %2135 = vmatpush2.bf16.msra.mxu0 %v1596
        %2136 = vmatprep.subr.bf16.mxu0 %v1593
        %2137 = vmatpush2.bf16.msra.mxu0 %v1592
        %2138 = vmatprep.subr.bf16.mxu0 %v1589
        %2139 = vmatpush2.bf16.msra.mxu0 %v1588
        %2140 = vmatprep.subr.bf16.mxu0 %v1585
        %2141 = vmatpush2.bf16.msra.mxu0 %v1584
        %2142 = vmatprep.subr.bf16.mxu0 %v1581
        %2143 = vmatpush2.bf16.msra.mxu0 %v1580
        %2144 = vmatprep.mubr.bf16.mxu0 %v498
        %2145 = vmatmul.mubr.bf16.gmra.mxu0 %v497
        %v2146 = vpop.f32.mrf.mxu0
        %v2147 = vadd.f32 %v2106, %v2146
        %v2148 = vpop.f32.mrf.mxu0
        %v2149 = vadd.f32 %v2108, %v2148
        %v2150 = vpop.f32.mrf.mxu0
        %v2151 = vpop.f32.mrf.mxu0
        %2152 = vdwg.mxu0
        %2153 = vmatprep.subr.bf16.mxu0 %v1641
        %2154 = vmatpush1.bf16.msra.mxu0 %v1640
        %2155 = vmatprep.subr.bf16.mxu0 %v1637
        %2156 = vmatpush1.bf16.msra.mxu0 %v1636
        %2157 = vmatprep.subr.bf16.mxu0 %v1633
        %2158 = vmatpush1.bf16.msra.mxu0 %v1632
        %2159 = vmatprep.subr.bf16.mxu0 %v1629
        %2160 = vmatpush1.bf16.msra.mxu0 %v1628
        %2161 = vmatprep.subr.bf16.mxu0 %v1625
        %2162 = vmatpush1.bf16.msra.mxu0 %v1624
        %2163 = vmatprep.subr.bf16.mxu0 %v1621
        %2164 = vmatpush1.bf16.msra.mxu0 %v1620
        %2165 = vmatprep.subr.bf16.mxu0 %v1617
        %2166 = vmatpush1.bf16.msra.mxu0 %v1616
        %2167 = vmatprep.subr.bf16.mxu0 %v1613
        %2168 = vmatpush1.bf16.msra.mxu0 %v1612
        %2169 = vmatprep.subr.bf16.mxu0 0
        %2170 = vmatpush2.bf16.msra.mxu0 0
        %2171 = vmatprep.subr.bf16.mxu0 0
        %2172 = vmatpush2.bf16.msra.mxu0 0
        %2173 = vmatprep.subr.bf16.mxu0 0
        %2174 = vmatpush2.bf16.msra.mxu0 0
        %2175 = vmatprep.subr.bf16.mxu0 0
        %2176 = vmatpush2.bf16.msra.mxu0 0
        %2177 = vmatprep.subr.bf16.mxu0 0
        %2178 = vmatpush2.bf16.msra.mxu0 0
        %2179 = vmatprep.subr.bf16.mxu0 0
        %2180 = vmatpush2.bf16.msra.mxu0 0
        %2181 = vmatprep.subr.bf16.mxu0 0
        %2182 = vmatpush2.bf16.msra.mxu0 0
        %2183 = vmatprep.subr.bf16.mxu0 0
        %2184 = vmatpush2.bf16.msra.mxu0 0
        %2185 = vmatprep.mubr.bf16.mxu0 0
        %2186 = vmatmul.mubr.bf16.gmra.mxu0 %v499
        %v2187 = vpop.f32.mrf.mxu0
        %v2188 = vadd.f32 %v2147, %v2187
        %v2189 = vpop.f32.mrf.mxu0
        %v2190 = vadd.f32 %v2149, %v2189
        %v2191 = vpop.f32.mrf.mxu0
        %v2192 = vpop.f32.mrf.mxu0
        %2193 = vdwg.mxu0
        %v2194 = vpack.c.bf16 %v2024, %v2024
        %v2195 = vpack.c.bf16 %v2026, %v2026
        %v2196 = vpack.c.bf16 %v2188, %v2188
        %v2197 = vpack.c.bf16 %v2190, %v2190
        %v2198 = vmax.bf16 %v2194, 0
        %v2199 = vmax.bf16 %v2195, 0
        %v2200 = vmax.bf16 %v2196, 0
        %v2201 = vmax.bf16 %v2197, 0
        %v2202 = vld [vmem:[#allocation7] sm:$0xff]
        %v2203 = vld [vmem:[#allocation7 + $0x8] sm:$0xff]
        %v2204 = vld [vmem:[#allocation7 + $0x10] sm:$0xff]
        %v2205 = vld [vmem:[#allocation7 + $0x18] sm:$0xff]
        %v2206 = vld [vmem:[#allocation7 + $0x20] sm:$0xff]
        %v2207 = vld [vmem:[#allocation7 + $0x28] sm:$0xff]
        %v2208 = vld [vmem:[#allocation7 + $0x30] sm:$0xff]
        %v2209 = vld [vmem:[#allocation7 + $0x38] sm:$0xff]
        %v2210 = vld [vmem:[#allocation7 + $0x40] sm:$0xff]
        %v2211 = vld [vmem:[#allocation7 + $0x48] sm:$0xff]
        %v2212 = vld [vmem:[#allocation7 + $0x50] sm:$0xff]
        %v2213 = vld [vmem:[#allocation7 + $0x58] sm:$0xff]
        %v2214 = vld [vmem:[#allocation7 + $0x60] sm:$0xff]
        %v2215 = vld [vmem:[#allocation7 + $0x68] sm:$0xff]
        %v2216 = vld [vmem:[#allocation7 + $0x70] sm:$0xff]
        %v2217 = vld [vmem:[#allocation7 + $0x78] sm:$0xff]
        %v2218 = vld [vmem:[#allocation7 + $0x80] sm:$0xff]
        %v2219 = vld [vmem:[#allocation7 + $0x88] sm:$0xff]
        %v2220 = vld [vmem:[#allocation7 + $0x90] sm:$0xff]
        %v2221 = vld [vmem:[#allocation7 + $0x98] sm:$0xff]
        %v2222 = vld [vmem:[#allocation7 + $0xa0] sm:$0xff]
        %v2223 = vld [vmem:[#allocation7 + $0xa8] sm:$0xff]
        %v2224 = vld [vmem:[#allocation7 + $0xb0] sm:$0xff]
        %v2225 = vld [vmem:[#allocation7 + $0xb8] sm:$0xff]
        %v2226 = vld [vmem:[#allocation7 + $0xc0] sm:$0xff]
        %v2227 = vld [vmem:[#allocation7 + $0xc8] sm:$0xff]
        %v2228 = vld [vmem:[#allocation7 + $0xd0] sm:$0xff]
        %v2229 = vld [vmem:[#allocation7 + $0xd8] sm:$0xff]
        %v2230 = vld [vmem:[#allocation7 + $0xe0] sm:$0xff]
        %v2231 = vld [vmem:[#allocation7 + $0xe8] sm:$0xff]
        %v2232 = vld [vmem:[#allocation7 + $0xf0] sm:$0xff]
        %v2233 = vld [vmem:[#allocation7 + $0xf8] sm:$0xff]
        %v2234 = vld [vmem:[#allocation7 + $0x100] sm:$0xff]
        %v2235 = vld [vmem:[#allocation7 + $0x108] sm:$0xff]
        %v2236 = vld [vmem:[#allocation7 + $0x110] sm:$0xff]
        %v2237 = vld [vmem:[#allocation7 + $0x118] sm:$0xff]
        %v2238 = vld [vmem:[#allocation7 + $0x120] sm:$0xff]
        %v2239 = vld [vmem:[#allocation7 + $0x128] sm:$0xff]
        %v2240 = vld [vmem:[#allocation7 + $0x130] sm:$0xff]
        %v2241 = vld [vmem:[#allocation7 + $0x138] sm:$0xff]
        %v2242 = vld [vmem:[#allocation7 + $0x140] sm:$0xff]
        %v2243 = vld [vmem:[#allocation7 + $0x148] sm:$0xff]
        %v2244 = vld [vmem:[#allocation7 + $0x150] sm:$0xff]
        %v2245 = vld [vmem:[#allocation7 + $0x158] sm:$0xff]
        %v2246 = vld [vmem:[#allocation7 + $0x160] sm:$0xff]
        %v2247 = vld [vmem:[#allocation7 + $0x168] sm:$0xff]
        %v2248 = vld [vmem:[#allocation7 + $0x170] sm:$0xff]
        %v2249 = vld [vmem:[#allocation7 + $0x178] sm:$0xff]
        %v2250 = vld [vmem:[#allocation7 + $0x180] sm:$0xff]
        %v2251 = vld [vmem:[#allocation7 + $0x188] sm:$0xff]
        %v2252 = vld [vmem:[#allocation7 + $0x190] sm:$0xff]
        %v2253 = vld [vmem:[#allocation7 + $0x198] sm:$0xff]
        %v2254 = vld [vmem:[#allocation7 + $0x1a0] sm:$0xff]
        %v2255 = vld [vmem:[#allocation7 + $0x1a8] sm:$0xff]
        %v2256 = vld [vmem:[#allocation7 + $0x1b0] sm:$0xff]
        %v2257 = vld [vmem:[#allocation7 + $0x1b8] sm:$0xff]
        %v2258 = vld [vmem:[#allocation7 + $0x1c0] sm:$0xff]
        %v2259 = vld [vmem:[#allocation7 + $0x1c8] sm:$0xff]
        %v2260 = vld [vmem:[#allocation7 + $0x1d0] sm:$0xff]
        %v2261 = vld [vmem:[#allocation7 + $0x1d8] sm:$0xff]
        %v2262 = vld [vmem:[#allocation7 + $0x1e0] sm:$0xff]
        %v2263 = vld [vmem:[#allocation7 + $0x1e8] sm:$0xff]
        %v2264 = vld [vmem:[#allocation7 + $0x1f0] sm:$0xff]
        %v2265 = vld [vmem:[#allocation7 + $0x1f8] sm:$0xff]
        %v2266 = vld [vmem:[#allocation11 + $0x4] sm:$0x3]
        %v2268 = vlaneseq
        %v2269 = vshrl.u32 %v2268, 7
        %v2270 = vsub.s32 0, %v2269
        %v2271 = vrot.slane %v2266, %v2270
        %v2272 = vlaneseq
        %v2273 = vshrl.u32 %v2272, 7
        %v2274 = vsub.s32 1, %v2273
        %v2275 = vrot.slane %v2266, %v2274
        %v2342 = vunpack.c.l.b16 %v2202
        %v2343 = vunpack.c.h.b16 %v2202
        %v2344 = vunpack.c.l.b16 %v2203
        %v2345 = vunpack.c.h.b16 %v2203
        %v2346 = vunpack.c.l.b16 %v2204
        %v2347 = vunpack.c.h.b16 %v2204
        %v2348 = vunpack.c.l.b16 %v2205
        %v2349 = vunpack.c.h.b16 %v2205
        %v2350 = vunpack.c.l.b16 %v2206
        %v2351 = vunpack.c.h.b16 %v2206
        %v2352 = vunpack.c.l.b16 %v2207
        %v2353 = vunpack.c.h.b16 %v2207
        %v2354 = vunpack.c.l.b16 %v2208
        %v2355 = vunpack.c.h.b16 %v2208
        %v2356 = vunpack.c.l.b16 %v2209
        %v2357 = vunpack.c.h.b16 %v2209
        %v2358 = vunpack.c.l.b16 %v2210
        %v2359 = vunpack.c.h.b16 %v2210
        %v2360 = vunpack.c.l.b16 %v2211
        %v2361 = vunpack.c.h.b16 %v2211
        %v2362 = vunpack.c.l.b16 %v2212
        %v2363 = vunpack.c.h.b16 %v2212
        %v2364 = vunpack.c.l.b16 %v2213
        %v2365 = vunpack.c.h.b16 %v2213
        %v2366 = vunpack.c.l.b16 %v2214
        %v2367 = vunpack.c.h.b16 %v2214
        %v2368 = vunpack.c.l.b16 %v2215
        %v2369 = vunpack.c.h.b16 %v2215
        %v2370 = vunpack.c.l.b16 %v2216
        %v2371 = vunpack.c.h.b16 %v2216
        %v2372 = vunpack.c.l.b16 %v2217
        %v2373 = vunpack.c.h.b16 %v2217
        %v2374 = vunpack.c.l.b16 %v2218
        %v2375 = vunpack.c.h.b16 %v2218
        %v2376 = vunpack.c.l.b16 %v2219
        %v2377 = vunpack.c.h.b16 %v2219
        %v2378 = vunpack.c.l.b16 %v2220
        %v2379 = vunpack.c.h.b16 %v2220
        %v2380 = vunpack.c.l.b16 %v2221
        %v2381 = vunpack.c.h.b16 %v2221
        %v2382 = vunpack.c.l.b16 %v2222
        %v2383 = vunpack.c.h.b16 %v2222
        %v2384 = vunpack.c.l.b16 %v2223
        %v2385 = vunpack.c.h.b16 %v2223
        %v2386 = vunpack.c.l.b16 %v2224
        %v2387 = vunpack.c.h.b16 %v2224
        %v2388 = vunpack.c.l.b16 %v2225
        %v2389 = vunpack.c.h.b16 %v2225
        %v2390 = vunpack.c.l.b16 %v2226
        %v2391 = vunpack.c.h.b16 %v2226
        %v2392 = vunpack.c.l.b16 %v2227
        %v2393 = vunpack.c.h.b16 %v2227
        %v2394 = vunpack.c.l.b16 %v2228
        %v2395 = vunpack.c.h.b16 %v2228
        %v2396 = vunpack.c.l.b16 %v2229
        %v2397 = vunpack.c.h.b16 %v2229
        %v2398 = vunpack.c.l.b16 %v2230
        %v2399 = vunpack.c.h.b16 %v2230
        %v2400 = vunpack.c.l.b16 %v2231
        %v2401 = vunpack.c.h.b16 %v2231
        %v2402 = vunpack.c.l.b16 %v2232
        %v2403 = vunpack.c.h.b16 %v2232
        %v2404 = vunpack.c.l.b16 %v2233
        %v2405 = vunpack.c.h.b16 %v2233
        %v2406 = vunpack.c.l.b16 %v2234
        %v2407 = vunpack.c.h.b16 %v2234
        %v2408 = vunpack.c.l.b16 %v2235
        %v2409 = vunpack.c.h.b16 %v2235
        %v2410 = vunpack.c.l.b16 %v2236
        %v2411 = vunpack.c.h.b16 %v2236
        %v2412 = vunpack.c.l.b16 %v2237
        %v2413 = vunpack.c.h.b16 %v2237
        %v2414 = vunpack.c.l.b16 %v2238
        %v2415 = vunpack.c.h.b16 %v2238
        %v2416 = vunpack.c.l.b16 %v2239
        %v2417 = vunpack.c.h.b16 %v2239
        %v2418 = vunpack.c.l.b16 %v2240
        %v2419 = vunpack.c.h.b16 %v2240
        %v2420 = vunpack.c.l.b16 %v2241
        %v2421 = vunpack.c.h.b16 %v2241
        %v2422 = vunpack.c.l.b16 %v2242
        %v2423 = vunpack.c.h.b16 %v2242
        %v2424 = vunpack.c.l.b16 %v2243
        %v2425 = vunpack.c.h.b16 %v2243
        %v2426 = vunpack.c.l.b16 %v2244
        %v2427 = vunpack.c.h.b16 %v2244
        %v2428 = vunpack.c.l.b16 %v2245
        %v2429 = vunpack.c.h.b16 %v2245
        %v2430 = vunpack.c.l.b16 %v2246
        %v2431 = vunpack.c.h.b16 %v2246
        %v2432 = vunpack.c.l.b16 %v2247
        %v2433 = vunpack.c.h.b16 %v2247
        %v2434 = vunpack.c.l.b16 %v2248
        %v2435 = vunpack.c.h.b16 %v2248
        %v2436 = vunpack.c.l.b16 %v2249
        %v2437 = vunpack.c.h.b16 %v2249
        %v2438 = vunpack.c.l.b16 %v2250
        %v2439 = vunpack.c.h.b16 %v2250
        %v2440 = vunpack.c.l.b16 %v2251
        %v2441 = vunpack.c.h.b16 %v2251
        %v2442 = vunpack.c.l.b16 %v2252
        %v2443 = vunpack.c.h.b16 %v2252
        %v2444 = vunpack.c.l.b16 %v2253
        %v2445 = vunpack.c.h.b16 %v2253
        %v2446 = vunpack.c.l.b16 %v2254
        %v2447 = vunpack.c.h.b16 %v2254
        %v2448 = vunpack.c.l.b16 %v2255
        %v2449 = vunpack.c.h.b16 %v2255
        %v2450 = vunpack.c.l.b16 %v2256
        %v2451 = vunpack.c.h.b16 %v2256
        %v2452 = vunpack.c.l.b16 %v2257
        %v2453 = vunpack.c.h.b16 %v2257
        %v2454 = vunpack.c.l.b16 %v2258
        %v2455 = vunpack.c.h.b16 %v2258
        %v2456 = vunpack.c.l.b16 %v2259
        %v2457 = vunpack.c.h.b16 %v2259
        %v2458 = vunpack.c.l.b16 %v2260
        %v2459 = vunpack.c.h.b16 %v2260
        %v2460 = vunpack.c.l.b16 %v2261
        %v2461 = vunpack.c.h.b16 %v2261
        %v2462 = vunpack.c.l.b16 %v2262
        %v2463 = vunpack.c.h.b16 %v2262
        %v2464 = vunpack.c.l.b16 %v2263
        %v2465 = vunpack.c.h.b16 %v2263
        %v2466 = vunpack.c.l.b16 %v2264
        %v2467 = vunpack.c.h.b16 %v2264
        %v2468 = vunpack.c.l.b16 %v2265
        %v2469 = vunpack.c.h.b16 %v2265
        %v2470 = vpack.c.b16 %v2344, %v2342
        %v2471 = vpack.c.b16 %v2345, %v2343
        %v2472 = vpack.c.b16 %v2348, %v2346
        %v2473 = vpack.c.b16 %v2349, %v2347
        %v2474 = vpack.c.b16 %v2352, %v2350
        %v2475 = vpack.c.b16 %v2353, %v2351
        %v2476 = vpack.c.b16 %v2356, %v2354
        %v2477 = vpack.c.b16 %v2357, %v2355
        %v2478 = vpack.c.b16 %v2360, %v2358
        %v2479 = vpack.c.b16 %v2361, %v2359
        %v2480 = vpack.c.b16 %v2364, %v2362
        %v2481 = vpack.c.b16 %v2365, %v2363
        %v2482 = vpack.c.b16 %v2368, %v2366
        %v2483 = vpack.c.b16 %v2369, %v2367
        %v2484 = vpack.c.b16 %v2372, %v2370
        %v2485 = vpack.c.b16 %v2373, %v2371
        %v2486 = vpack.c.b16 %v2376, %v2374
        %v2487 = vpack.c.b16 %v2377, %v2375
        %v2488 = vpack.c.b16 %v2380, %v2378
        %v2489 = vpack.c.b16 %v2381, %v2379
        %v2490 = vpack.c.b16 %v2384, %v2382
        %v2491 = vpack.c.b16 %v2385, %v2383
        %v2492 = vpack.c.b16 %v2388, %v2386
        %v2493 = vpack.c.b16 %v2389, %v2387
        %v2494 = vpack.c.b16 %v2392, %v2390
        %v2495 = vpack.c.b16 %v2393, %v2391
        %v2496 = vpack.c.b16 %v2396, %v2394
        %v2497 = vpack.c.b16 %v2397, %v2395
        %v2498 = vpack.c.b16 %v2400, %v2398
        %v2499 = vpack.c.b16 %v2401, %v2399
        %v2500 = vpack.c.b16 %v2404, %v2402
        %v2501 = vpack.c.b16 %v2405, %v2403
        %v2502 = vpack.c.b16 %v2408, %v2406
        %v2503 = vpack.c.b16 %v2409, %v2407
        %v2504 = vpack.c.b16 %v2412, %v2410
        %v2505 = vpack.c.b16 %v2413, %v2411
        %v2506 = vpack.c.b16 %v2416, %v2414
        %v2507 = vpack.c.b16 %v2417, %v2415
        %v2508 = vpack.c.b16 %v2420, %v2418
        %v2509 = vpack.c.b16 %v2421, %v2419
        %v2510 = vpack.c.b16 %v2424, %v2422
        %v2511 = vpack.c.b16 %v2425, %v2423
        %v2512 = vpack.c.b16 %v2428, %v2426
        %v2513 = vpack.c.b16 %v2429, %v2427
        %v2514 = vpack.c.b16 %v2432, %v2430
        %v2515 = vpack.c.b16 %v2433, %v2431
        %v2516 = vpack.c.b16 %v2436, %v2434
        %v2517 = vpack.c.b16 %v2437, %v2435
        %v2518 = vpack.c.b16 %v2440, %v2438
        %v2519 = vpack.c.b16 %v2441, %v2439
        %v2520 = vpack.c.b16 %v2444, %v2442
        %v2521 = vpack.c.b16 %v2445, %v2443
        %v2522 = vpack.c.b16 %v2448, %v2446
        %v2523 = vpack.c.b16 %v2449, %v2447
        %v2524 = vpack.c.b16 %v2452, %v2450
        %v2525 = vpack.c.b16 %v2453, %v2451
        %v2526 = vpack.c.b16 %v2456, %v2454
        %v2527 = vpack.c.b16 %v2457, %v2455
        %v2528 = vpack.c.b16 %v2460, %v2458
        %v2529 = vpack.c.b16 %v2461, %v2459
        %v2530 = vpack.c.b16 %v2464, %v2462
        %v2531 = vpack.c.b16 %v2465, %v2463
        %v2532 = vpack.c.b16 %v2468, %v2466
        %v2533 = vpack.c.b16 %v2469, %v2467
        %2598 = vmatprep.subr.bf16.mxu0 %v2485
        %2599 = vmatpush1.bf16.msra.mxu0 %v2484
        %2600 = vmatprep.subr.bf16.mxu0 %v2483
        %2601 = vmatpush1.bf16.msra.mxu0 %v2482
        %2602 = vmatprep.subr.bf16.mxu0 %v2481
        %2603 = vmatpush1.bf16.msra.mxu0 %v2480
        %2604 = vmatprep.subr.bf16.mxu0 %v2479
        %2605 = vmatpush1.bf16.msra.mxu0 %v2478
        %2606 = vmatprep.subr.bf16.mxu0 %v2477
        %2607 = vmatpush1.bf16.msra.mxu0 %v2476
        %2608 = vmatprep.subr.bf16.mxu0 %v2475
        %2609 = vmatpush1.bf16.msra.mxu0 %v2474
        %2610 = vmatprep.subr.bf16.mxu0 %v2473
        %2611 = vmatpush1.bf16.msra.mxu0 %v2472
        %2612 = vmatprep.subr.bf16.mxu0 %v2471
        %2613 = vmatpush1.bf16.msra.mxu0 %v2470
        %2614 = vmatprep.subr.bf16.mxu0 %v2501
        %2615 = vmatpush2.bf16.msra.mxu0 %v2500
        %2616 = vmatprep.subr.bf16.mxu0 %v2499
        %2617 = vmatpush2.bf16.msra.mxu0 %v2498
        %2618 = vmatprep.subr.bf16.mxu0 %v2497
        %2619 = vmatpush2.bf16.msra.mxu0 %v2496
        %2620 = vmatprep.subr.bf16.mxu0 %v2495
        %2621 = vmatpush2.bf16.msra.mxu0 %v2494
        %2622 = vmatprep.subr.bf16.mxu0 %v2493
        %2623 = vmatpush2.bf16.msra.mxu0 %v2492
        %2624 = vmatprep.subr.bf16.mxu0 %v2491
        %2625 = vmatpush2.bf16.msra.mxu0 %v2490
        %2626 = vmatprep.subr.bf16.mxu0 %v2489
        %2627 = vmatpush2.bf16.msra.mxu0 %v2488
        %2628 = vmatprep.subr.bf16.mxu0 %v2487
        %2629 = vmatpush2.bf16.msra.mxu0 %v2486
        %2630 = vmatprep.mubr.bf16.mxu0 %v2199
        %2631 = vmatmul.mubr.bf16.gmra.mxu0 %v2198
        %v2632 = vpop.f32.mrf.mxu0
        %v2633 = vadd.f32 %v2271, %v2632
        %v2634 = vpop.f32.mrf.mxu0
        %v2635 = vadd.f32 %v2275, %v2634
        %v2636 = vpop.f32.mrf.mxu0
        %v2637 = vpop.f32.mrf.mxu0
        %2638 = vdwg.mxu0
        %2639 = vmatprep.subr.bf16.mxu0 %v2517
        %2640 = vmatpush1.bf16.msra.mxu0 %v2516
        %2641 = vmatprep.subr.bf16.mxu0 %v2515
        %2642 = vmatpush1.bf16.msra.mxu0 %v2514
        %2643 = vmatprep.subr.bf16.mxu0 %v2513
        %2644 = vmatpush1.bf16.msra.mxu0 %v2512
        %2645 = vmatprep.subr.bf16.mxu0 %v2511
        %2646 = vmatpush1.bf16.msra.mxu0 %v2510
        %2647 = vmatprep.subr.bf16.mxu0 %v2509
        %2648 = vmatpush1.bf16.msra.mxu0 %v2508
        %2649 = vmatprep.subr.bf16.mxu0 %v2507
        %2650 = vmatpush1.bf16.msra.mxu0 %v2506
        %2651 = vmatprep.subr.bf16.mxu0 %v2505
        %2652 = vmatpush1.bf16.msra.mxu0 %v2504
        %2653 = vmatprep.subr.bf16.mxu0 %v2503
        %2654 = vmatpush1.bf16.msra.mxu0 %v2502
        %2655 = vmatprep.subr.bf16.mxu0 %v2533
        %2656 = vmatpush2.bf16.msra.mxu0 %v2532
        %2657 = vmatprep.subr.bf16.mxu0 %v2531
        %2658 = vmatpush2.bf16.msra.mxu0 %v2530
        %2659 = vmatprep.subr.bf16.mxu0 %v2529
        %2660 = vmatpush2.bf16.msra.mxu0 %v2528
        %2661 = vmatprep.subr.bf16.mxu0 %v2527
        %2662 = vmatpush2.bf16.msra.mxu0 %v2526
        %2663 = vmatprep.subr.bf16.mxu0 %v2525
        %2664 = vmatpush2.bf16.msra.mxu0 %v2524
        %2665 = vmatprep.subr.bf16.mxu0 %v2523
        %2666 = vmatpush2.bf16.msra.mxu0 %v2522
        %2667 = vmatprep.subr.bf16.mxu0 %v2521
        %2668 = vmatpush2.bf16.msra.mxu0 %v2520
        %2669 = vmatprep.subr.bf16.mxu0 %v2519
        %2670 = vmatpush2.bf16.msra.mxu0 %v2518
        %2671 = vmatprep.mubr.bf16.mxu0 %v2201
        %2672 = vmatmul.mubr.bf16.gmra.mxu0 %v2200
        %v2673 = vpop.f32.mrf.mxu0
        %v2674 = vadd.f32 %v2633, %v2673
        %v2675 = vpop.f32.mrf.mxu0
        %v2676 = vadd.f32 %v2635, %v2675
        %v2677 = vpop.f32.mrf.mxu0
        %v2678 = vpop.f32.mrf.mxu0
        %2679 = vdwg.mxu0
        %v2680 = vpack.c.bf16 %v2674, %v2674
        %v2681 = vpack.c.bf16 %v2676, %v2676
        %v2682 = vmax.bf16 %v2680, 0
        %v2683 = vmax.bf16 %v2681, 0
        %v2684 = vld [vmem:[%s3] sm:$0xf]
        %v2685 = vld [vmem:[%s3 + $0x4] sm:$0xf]
        %v2686 = vld [vmem:[%s3 + $0x8] sm:$0xf]
        %v2687 = vld [vmem:[%s3 + $0xc] sm:$0xf]
        %v2688 = vld [vmem:[%s3 + $0x10] sm:$0xf]
        %v2689 = vld [vmem:[%s3 + $0x14] sm:$0xf]
        %v2690 = vld [vmem:[%s3 + $0x18] sm:$0xf]
        %v2691 = vld [vmem:[%s3 + $0x1c] sm:$0xf]
        %v2692 = vld [vmem:[%s3 + $0x20] sm:$0xf]
        %v2693 = vld [vmem:[%s3 + $0x24] sm:$0xf]
        %v2694 = vld [vmem:[%s3 + $0x28] sm:$0xf]
        %v2695 = vld [vmem:[%s3 + $0x2c] sm:$0xf]
        %v2696 = vld [vmem:[%s3 + $0x30] sm:$0xf]
        %v2697 = vld [vmem:[%s3 + $0x34] sm:$0xf]
        %v2698 = vld [vmem:[%s3 + $0x38] sm:$0xf]
        %v2699 = vld [vmem:[%s3 + $0x3c] sm:$0xf]
        %v2700 = vld [vmem:[%s3 + $0x40] sm:$0xf]
        %v2701 = vld [vmem:[%s3 + $0x44] sm:$0xf]
        %v2702 = vld [vmem:[%s3 + $0x48] sm:$0xf]
        %v2703 = vld [vmem:[%s3 + $0x4c] sm:$0xf]
        %v2704 = vld [vmem:[%s3 + $0x50] sm:$0xf]
        %v2705 = vld [vmem:[%s3 + $0x54] sm:$0xf]
        %v2706 = vld [vmem:[%s3 + $0x58] sm:$0xf]
        %v2707 = vld [vmem:[%s3 + $0x5c] sm:$0xf]
        %v2708 = vld [vmem:[%s3 + $0x60] sm:$0xf]
        %v2709 = vld [vmem:[%s3 + $0x64] sm:$0xf]
        %v2710 = vld [vmem:[%s3 + $0x68] sm:$0xf]
        %v2711 = vld [vmem:[%s3 + $0x6c] sm:$0xf]
        %v2712 = vld [vmem:[%s3 + $0x70] sm:$0xf]
        %v2713 = vld [vmem:[%s3 + $0x74] sm:$0xf]
        %v2714 = vld [vmem:[%s3 + $0x78] sm:$0xf]
        %v2715 = vld [vmem:[%s3 + $0x7c] sm:$0xf]
        %v2716 = vld [vmem:[#allocation11 + $0x6] sm:$0x1]
        %v2718 = vlaneseq
        %v2719 = vshrl.u32 %v2718, 7
        %v2720 = vsub.s32 0, %v2719
        %v2721 = vrot.slane %v2716, %v2720
        %v2755 = vunpack.c.l.b16 %v2684
        %v2756 = vunpack.c.l.b16 %v2685
        %v2757 = vunpack.c.l.b16 %v2686
        %v2758 = vunpack.c.l.b16 %v2687
        %v2759 = vunpack.c.l.b16 %v2688
        %v2760 = vunpack.c.l.b16 %v2689
        %v2761 = vunpack.c.l.b16 %v2690
        %v2762 = vunpack.c.l.b16 %v2691
        %v2763 = vunpack.c.l.b16 %v2692
        %v2764 = vunpack.c.l.b16 %v2693
        %v2765 = vunpack.c.l.b16 %v2694
        %v2766 = vunpack.c.l.b16 %v2695
        %v2767 = vunpack.c.l.b16 %v2696
        %v2768 = vunpack.c.l.b16 %v2697
        %v2769 = vunpack.c.l.b16 %v2698
        %v2770 = vunpack.c.l.b16 %v2699
        %v2771 = vunpack.c.l.b16 %v2700
        %v2772 = vunpack.c.l.b16 %v2701
        %v2773 = vunpack.c.l.b16 %v2702
        %v2774 = vunpack.c.l.b16 %v2703
        %v2775 = vunpack.c.l.b16 %v2704
        %v2776 = vunpack.c.l.b16 %v2705
        %v2777 = vunpack.c.l.b16 %v2706
        %v2778 = vunpack.c.l.b16 %v2707
        %v2779 = vunpack.c.l.b16 %v2708
        %v2780 = vunpack.c.l.b16 %v2709
        %v2781 = vunpack.c.l.b16 %v2710
        %v2782 = vunpack.c.l.b16 %v2711
        %v2783 = vunpack.c.l.b16 %v2712
        %v2784 = vunpack.c.l.b16 %v2713
        %v2785 = vunpack.c.l.b16 %v2714
        %v2786 = vunpack.c.l.b16 %v2715
        %v2787 = vpack.c.b16 %v2756, %v2755
        %v2788 = vpack.c.b16 %v2758, %v2757
        %v2789 = vpack.c.b16 %v2760, %v2759
        %v2790 = vpack.c.b16 %v2762, %v2761
        %v2791 = vpack.c.b16 %v2764, %v2763
        %v2792 = vpack.c.b16 %v2766, %v2765
        %v2793 = vpack.c.b16 %v2768, %v2767
        %v2794 = vpack.c.b16 %v2770, %v2769
        %v2795 = vpack.c.b16 %v2772, %v2771
        %v2796 = vpack.c.b16 %v2774, %v2773
        %v2797 = vpack.c.b16 %v2776, %v2775
        %v2798 = vpack.c.b16 %v2778, %v2777
        %v2799 = vpack.c.b16 %v2780, %v2779
        %v2800 = vpack.c.b16 %v2782, %v2781
        %v2801 = vpack.c.b16 %v2784, %v2783
        %v2802 = vpack.c.b16 %v2786, %v2785
        %2819 = vmatprep.subr.bf16.mxu0 0
        %2820 = vmatpush1.bf16.msra.mxu0 %v2794
        %2821 = vmatprep.subr.bf16.mxu0 0
        %2822 = vmatpush1.bf16.msra.mxu0 %v2793
        %2823 = vmatprep.subr.bf16.mxu0 0
        %2824 = vmatpush1.bf16.msra.mxu0 %v2792
        %2825 = vmatprep.subr.bf16.mxu0 0
        %2826 = vmatpush1.bf16.msra.mxu0 %v2791
        %2827 = vmatprep.subr.bf16.mxu0 0
        %2828 = vmatpush1.bf16.msra.mxu0 %v2790
        %2829 = vmatprep.subr.bf16.mxu0 0
        %2830 = vmatpush1.bf16.msra.mxu0 %v2789
        %2831 = vmatprep.subr.bf16.mxu0 0
        %2832 = vmatpush1.bf16.msra.mxu0 %v2788
        %2833 = vmatprep.subr.bf16.mxu0 0
        %2834 = vmatpush1.bf16.msra.mxu0 %v2787
        %2835 = vmatprep.subr.bf16.mxu0 0
        %2836 = vmatpush2.bf16.msra.mxu0 %v2802
        %2837 = vmatprep.subr.bf16.mxu0 0
        %2838 = vmatpush2.bf16.msra.mxu0 %v2801
        %2839 = vmatprep.subr.bf16.mxu0 0
        %2840 = vmatpush2.bf16.msra.mxu0 %v2800
        %2841 = vmatprep.subr.bf16.mxu0 0
        %2842 = vmatpush2.bf16.msra.mxu0 %v2799
        %2843 = vmatprep.subr.bf16.mxu0 0
        %2844 = vmatpush2.bf16.msra.mxu0 %v2798
        %2845 = vmatprep.subr.bf16.mxu0 0
        %2846 = vmatpush2.bf16.msra.mxu0 %v2797
        %2847 = vmatprep.subr.bf16.mxu0 0
        %2848 = vmatpush2.bf16.msra.mxu0 %v2796
        %2849 = vmatprep.subr.bf16.mxu0 0
        %2850 = vmatpush2.bf16.msra.mxu0 %v2795
        %2851 = vmatprep.mubr.bf16.mxu0 %v2683
        %2852 = vmatmul.mubr.bf16.gmra.mxu0 %v2682
        %v2853 = vpop.f32.mrf.mxu0
        %v2854 = vadd.f32 %v2721, %v2853
        %v2855 = vpop.f32.mrf.mxu0
        %v2856 = vpop.f32.mrf.mxu0
        %v2857 = vpop.f32.mrf.mxu0
        %2858 = vdwg.mxu0
        %v2859 = vmul.f32 %v2854, 0.5
        %v2860 = vmul.f32 %v2859, 1.442695
        %v2861 = vpow.pop %v2860
        %2863 = vrot.lane.b32.xlu0 %v2861, 14
        %v2864 = vpop.permute.xlu0 %2863
        %v2866 = vmul.f32 %v486, %v2864
        %2868 = vrot.lane.b32.xlu0 %v2866, 112
        %v2869 = vpop.permute.xlu0 %2868
        %v2871 = vadd.f32 %v2854, %v2869
        %v2872 = vld [vmem:[%s4] sm:$0x1]
        %2874 = vset.pattern.permute.xlu0 1
        %2875 = vperm.xlu0 %2874, %v2871
        %v2876 = vpop.permute.xlu0 %2875
        %v2879 = vlaneseq
        %v2880 = vshrl.u32 %v2879, 7
        %v2881 = vsub.s32 0, %v2880
        %v2882 = vrot.slane %v2872, %v2881
        %v2884 = vmul.f32 %v2876, %v2882
        %v2885 = vld [vmem:[#allocation11 + $0x7] sm:$0x1]
        %v2887 = vlaneseq
        %v2888 = vshrl.u32 %v2887, 7
        %v2889 = vsub.s32 0, %v2888
        %v2890 = vrot.slane %v2885, %v2889
        %v2892 = vadd.f32 %v2884, %v2890
        %v2893 = vpack.c.bf16 %v2892, %v2892
        %v2894 = vmax.bf16 %v2893, 0
        %v2895 = vld [vmem:[%s6] sm:$0x3]
        %2896 = vset.pattern.permute.xlu0 0
        %2897 = vperm.xlu0 %2896, %v2871
        %v2898 = vpop.permute.xlu0 %2897
        %v2901 = vlaneseq
        %v2902 = vshrl.u32 %v2901, 7
        %v2903 = vsub.s32 0, %v2902
        %v2904 = vrot.slane %v2895, %v2903
        %v2905 = vlaneseq
        %v2906 = vshrl.u32 %v2905, 7
        %v2907 = vsub.s32 1, %v2906
        %v2908 = vrot.slane %v2895, %v2907
        %v2911 = vmul.f32 %v2898, %v2904
        %v2912 = vmul.f32 %v2898, %v2908
        %v2913 = vld [vmem:[%s5] sm:$0xff]
        %v2914 = vld [vmem:[%s5 + $0x8] sm:$0xff]
        %v2915 = vld [vmem:[%s5 + $0x10] sm:$0xff]
        %v2916 = vld [vmem:[%s5 + $0x18] sm:$0xff]
        %v2917 = vld [vmem:[%s5 + $0x20] sm:$0xff]
        %v2918 = vld [vmem:[%s5 + $0x28] sm:$0xff]
        %v2919 = vld [vmem:[%s5 + $0x30] sm:$0xff]
        %v2920 = vld [vmem:[%s5 + $0x38] sm:$0xff]
        %v2921 = vld [vmem:[%s5 + $0x40] sm:$0xff]
        %v2922 = vld [vmem:[%s5 + $0x48] sm:$0xff]
        %v2923 = vld [vmem:[%s5 + $0x50] sm:$0xff]
        %v2924 = vld [vmem:[%s5 + $0x58] sm:$0xff]
        %v2925 = vld [vmem:[%s5 + $0x60] sm:$0xff]
        %v2926 = vld [vmem:[%s5 + $0x68] sm:$0xff]
        %v2927 = vld [vmem:[%s5 + $0x70] sm:$0xff]
        %v2928 = vld [vmem:[%s5 + $0x78] sm:$0xff]
        %v2945 = vunpack.c.l.b16 %v2913
        %v2946 = vunpack.c.h.b16 %v2913
        %v2947 = vunpack.c.l.b16 %v2914
        %v2948 = vunpack.c.h.b16 %v2914
        %v2949 = vunpack.c.l.b16 %v2915
        %v2950 = vunpack.c.h.b16 %v2915
        %v2951 = vunpack.c.l.b16 %v2916
        %v2952 = vunpack.c.h.b16 %v2916
        %v2953 = vunpack.c.l.b16 %v2917
        %v2954 = vunpack.c.h.b16 %v2917
        %v2955 = vunpack.c.l.b16 %v2918
        %v2956 = vunpack.c.h.b16 %v2918
        %v2957 = vunpack.c.l.b16 %v2919
        %v2958 = vunpack.c.h.b16 %v2919
        %v2959 = vunpack.c.l.b16 %v2920
        %v2960 = vunpack.c.h.b16 %v2920
        %v2961 = vunpack.c.l.b16 %v2921
        %v2962 = vunpack.c.h.b16 %v2921
        %v2963 = vunpack.c.l.b16 %v2922
        %v2964 = vunpack.c.h.b16 %v2922
        %v2965 = vunpack.c.l.b16 %v2923
        %v2966 = vunpack.c.h.b16 %v2923
        %v2967 = vunpack.c.l.b16 %v2924
        %v2968 = vunpack.c.h.b16 %v2924
        %v2969 = vunpack.c.l.b16 %v2925
        %v2970 = vunpack.c.h.b16 %v2925
        %v2971 = vunpack.c.l.b16 %v2926
        %v2972 = vunpack.c.h.b16 %v2926
        %v2973 = vunpack.c.l.b16 %v2927
        %v2974 = vunpack.c.h.b16 %v2927
        %v2975 = vunpack.c.l.b16 %v2928
        %v2976 = vunpack.c.h.b16 %v2928
        %v2977 = vpack.c.b16 %v2947, %v2945
        %v2978 = vpack.c.b16 %v2948, %v2946
        %v2979 = vpack.c.b16 %v2951, %v2949
        %v2980 = vpack.c.b16 %v2952, %v2950
        %v2981 = vpack.c.b16 %v2955, %v2953
        %v2982 = vpack.c.b16 %v2956, %v2954
        %v2983 = vpack.c.b16 %v2959, %v2957
        %v2984 = vpack.c.b16 %v2960, %v2958
        %v2985 = vpack.c.b16 %v2963, %v2961
        %v2986 = vpack.c.b16 %v2964, %v2962
        %v2987 = vpack.c.b16 %v2967, %v2965
        %v2988 = vpack.c.b16 %v2968, %v2966
        %v2989 = vpack.c.b16 %v2971, %v2969
        %v2990 = vpack.c.b16 %v2972, %v2970
        %v2991 = vpack.c.b16 %v2975, %v2973
        %v2992 = vpack.c.b16 %v2976, %v2974
        %3009 = vmatprep.subr.bf16.mxu0 %v2992
        %3010 = vmatpush1.bf16.msra.mxu0 %v2991
        %3011 = vmatprep.subr.bf16.mxu0 %v2990
        %3012 = vmatpush1.bf16.msra.mxu0 %v2989
        %3013 = vmatprep.subr.bf16.mxu0 %v2988
        %3014 = vmatpush1.bf16.msra.mxu0 %v2987
        %3015 = vmatprep.subr.bf16.mxu0 %v2986
        %3016 = vmatpush1.bf16.msra.mxu0 %v2985
        %3017 = vmatprep.subr.bf16.mxu0 %v2984
        %3018 = vmatpush1.bf16.msra.mxu0 %v2983
        %3019 = vmatprep.subr.bf16.mxu0 %v2982
        %3020 = vmatpush1.bf16.msra.mxu0 %v2981
        %3021 = vmatprep.subr.bf16.mxu0 %v2980
        %3022 = vmatpush1.bf16.msra.mxu0 %v2979
        %3023 = vmatprep.subr.bf16.mxu0 %v2978
        %3024 = vmatpush1.bf16.msra.mxu0 %v2977
        %3025 = vmatprep.subr.bf16.mxu0 0
        %3026 = vmatpush2.bf16.msra.mxu0 0
        %3027 = vmatprep.subr.bf16.mxu0 0
        %3028 = vmatpush2.bf16.msra.mxu0 0
        %3029 = vmatprep.subr.bf16.mxu0 0
        %3030 = vmatpush2.bf16.msra.mxu0 0
        %3031 = vmatprep.subr.bf16.mxu0 0
        %3032 = vmatpush2.bf16.msra.mxu0 0
        %3033 = vmatprep.subr.bf16.mxu0 0
        %3034 = vmatpush2.bf16.msra.mxu0 0
        %3035 = vmatprep.subr.bf16.mxu0 0
        %3036 = vmatpush2.bf16.msra.mxu0 0
        %3037 = vmatprep.subr.bf16.mxu0 0
        %3038 = vmatpush2.bf16.msra.mxu0 0
        %3039 = vmatprep.subr.bf16.mxu0 0
        %3040 = vmatpush2.bf16.msra.mxu0 0
        %3041 = vmatprep.mubr.bf16.mxu0 0
        %3042 = vmatmul.mubr.bf16.gmra.mxu0 %v2894
        %v3043 = vpop.f32.mrf.mxu0
        %v3044 = vadd.f32 0.0, %v3043
        %v3045 = vpop.f32.mrf.mxu0
        %v3046 = vadd.f32 0.0, %v3045
        %v3047 = vpop.f32.mrf.mxu0
        %v3048 = vpop.f32.mrf.mxu0
        %3049 = vdwg.mxu0
        %v3050 = vadd.f32 %v2911, %v3044
        %v3051 = vadd.f32 %v2912, %v3046
        %v3052 = vld [vmem:[#allocation11 + $0x8] sm:$0x3]
        %v3054 = vlaneseq
        %v3055 = vshrl.u32 %v3054, 7
        %v3056 = vsub.s32 0, %v3055
        %v3057 = vrot.slane %v3052, %v3056
        %v3058 = vlaneseq
        %v3059 = vshrl.u32 %v3058, 7
        %v3060 = vsub.s32 1, %v3059
        %v3061 = vrot.slane %v3052, %v3060
        %v3064 = vadd.f32 %v3050, %v3057
        %v3065 = vadd.f32 %v3051, %v3061
        %v3066 = vpack.c.bf16 %v3064, %v3064
        %v3067 = vpack.c.bf16 %v3065, %v3065
        %v3068 = vmax.bf16 %v3066, 0
        %v3069 = vmax.bf16 %v3067, 0
        %v3070 = vld [vmem:[#allocation8] sm:$0xff]
        %v3071 = vld [vmem:[#allocation8 + $0x8] sm:$0xff]
        %v3072 = vld [vmem:[#allocation8 + $0x10] sm:$0xff]
        %v3073 = vld [vmem:[#allocation8 + $0x18] sm:$0xff]
        %v3074 = vld [vmem:[#allocation8 + $0x20] sm:$0xff]
        %v3075 = vld [vmem:[#allocation8 + $0x28] sm:$0xff]
        %v3076 = vld [vmem:[#allocation8 + $0x30] sm:$0xff]
        %v3077 = vld [vmem:[#allocation8 + $0x38] sm:$0xff]
        %v3078 = vld [vmem:[#allocation8 + $0x40] sm:$0xff]
        %v3079 = vld [vmem:[#allocation8 + $0x48] sm:$0xff]
        %v3080 = vld [vmem:[#allocation8 + $0x50] sm:$0xff]
        %v3081 = vld [vmem:[#allocation8 + $0x58] sm:$0xff]
        %v3082 = vld [vmem:[#allocation8 + $0x60] sm:$0xff]
        %v3083 = vld [vmem:[#allocation8 + $0x68] sm:$0xff]
        %v3084 = vld [vmem:[#allocation8 + $0x70] sm:$0xff]
        %v3085 = vld [vmem:[#allocation8 + $0x78] sm:$0xff]
        %v3086 = vld [vmem:[#allocation8 + $0x80] sm:$0xff]
        %v3087 = vld [vmem:[#allocation8 + $0x88] sm:$0xff]
        %v3088 = vld [vmem:[#allocation8 + $0x90] sm:$0xff]
        %v3089 = vld [vmem:[#allocation8 + $0x98] sm:$0xff]
        %v3090 = vld [vmem:[#allocation8 + $0xa0] sm:$0xff]
        %v3091 = vld [vmem:[#allocation8 + $0xa8] sm:$0xff]
        %v3092 = vld [vmem:[#allocation8 + $0xb0] sm:$0xff]
        %v3093 = vld [vmem:[#allocation8 + $0xb8] sm:$0xff]
        %v3094 = vld [vmem:[#allocation8 + $0xc0] sm:$0xff]
        %v3095 = vld [vmem:[#allocation8 + $0xc8] sm:$0xff]
        %v3096 = vld [vmem:[#allocation8 + $0xd0] sm:$0xff]
        %v3097 = vld [vmem:[#allocation8 + $0xd8] sm:$0xff]
        %v3098 = vld [vmem:[#allocation8 + $0xe0] sm:$0xff]
        %v3099 = vld [vmem:[#allocation8 + $0xe8] sm:$0xff]
        %v3100 = vld [vmem:[#allocation8 + $0xf0] sm:$0xff]
        %v3101 = vld [vmem:[#allocation8 + $0xf8] sm:$0xff]
        %v3102 = vld [vmem:[#allocation8 + $0x100] sm:$0xff]
        %v3103 = vld [vmem:[#allocation8 + $0x108] sm:$0xff]
        %v3104 = vld [vmem:[#allocation8 + $0x110] sm:$0xff]
        %v3105 = vld [vmem:[#allocation8 + $0x118] sm:$0xff]
        %v3106 = vld [vmem:[#allocation8 + $0x120] sm:$0xff]
        %v3107 = vld [vmem:[#allocation8 + $0x128] sm:$0xff]
        %v3108 = vld [vmem:[#allocation8 + $0x130] sm:$0xff]
        %v3109 = vld [vmem:[#allocation8 + $0x138] sm:$0xff]
        %v3110 = vld [vmem:[#allocation8 + $0x140] sm:$0xff]
        %v3111 = vld [vmem:[#allocation8 + $0x148] sm:$0xff]
        %v3112 = vld [vmem:[#allocation8 + $0x150] sm:$0xff]
        %v3113 = vld [vmem:[#allocation8 + $0x158] sm:$0xff]
        %v3114 = vld [vmem:[#allocation8 + $0x160] sm:$0xff]
        %v3115 = vld [vmem:[#allocation8 + $0x168] sm:$0xff]
        %v3116 = vld [vmem:[#allocation8 + $0x170] sm:$0xff]
        %v3117 = vld [vmem:[#allocation8 + $0x178] sm:$0xff]
        %v3118 = vld [vmem:[#allocation8 + $0x180] sm:$0xff]
        %v3119 = vld [vmem:[#allocation8 + $0x188] sm:$0xff]
        %v3120 = vld [vmem:[#allocation8 + $0x190] sm:$0xff]
        %v3121 = vld [vmem:[#allocation8 + $0x198] sm:$0xff]
        %v3122 = vld [vmem:[#allocation8 + $0x1a0] sm:$0xff]
        %v3123 = vld [vmem:[#allocation8 + $0x1a8] sm:$0xff]
        %v3124 = vld [vmem:[#allocation8 + $0x1b0] sm:$0xff]
        %v3125 = vld [vmem:[#allocation8 + $0x1b8] sm:$0xff]
        %v3126 = vld [vmem:[#allocation8 + $0x1c0] sm:$0xff]
        %v3127 = vld [vmem:[#allocation8 + $0x1c8] sm:$0xff]
        %v3128 = vld [vmem:[#allocation8 + $0x1d0] sm:$0xff]
        %v3129 = vld [vmem:[#allocation8 + $0x1d8] sm:$0xff]
        %v3130 = vld [vmem:[#allocation8 + $0x1e0] sm:$0xff]
        %v3131 = vld [vmem:[#allocation8 + $0x1e8] sm:$0xff]
        %v3132 = vld [vmem:[#allocation8 + $0x1f0] sm:$0xff]
        %v3133 = vld [vmem:[#allocation8 + $0x1f8] sm:$0xff]
        %v3134 = vld [vmem:[#allocation11 + $0xa] sm:$0xf]
        %v3136 = vlaneseq
        %v3137 = vshrl.u32 %v3136, 7
        %v3138 = vsub.s32 0, %v3137
        %v3139 = vrot.slane %v3134, %v3138
        %v3140 = vlaneseq
        %v3141 = vshrl.u32 %v3140, 7
        %v3142 = vsub.s32 1, %v3141
        %v3143 = vrot.slane %v3134, %v3142
        %v3144 = vlaneseq
        %v3145 = vshrl.u32 %v3144, 7
        %v3146 = vsub.s32 2, %v3145
        %v3147 = vrot.slane %v3134, %v3146
        %v3148 = vlaneseq
        %v3149 = vshrl.u32 %v3148, 7
        %v3150 = vsub.s32 3, %v3149
        %v3151 = vrot.slane %v3134, %v3150
        %v3220 = vunpack.c.l.b16 %v3070
        %v3221 = vunpack.c.h.b16 %v3070
        %v3222 = vunpack.c.l.b16 %v3071
        %v3223 = vunpack.c.h.b16 %v3071
        %v3224 = vunpack.c.l.b16 %v3072
        %v3225 = vunpack.c.h.b16 %v3072
        %v3226 = vunpack.c.l.b16 %v3073
        %v3227 = vunpack.c.h.b16 %v3073
        %v3228 = vunpack.c.l.b16 %v3074
        %v3229 = vunpack.c.h.b16 %v3074
        %v3230 = vunpack.c.l.b16 %v3075
        %v3231 = vunpack.c.h.b16 %v3075
        %v3232 = vunpack.c.l.b16 %v3076
        %v3233 = vunpack.c.h.b16 %v3076
        %v3234 = vunpack.c.l.b16 %v3077
        %v3235 = vunpack.c.h.b16 %v3077
        %v3236 = vunpack.c.l.b16 %v3078
        %v3237 = vunpack.c.h.b16 %v3078
        %v3238 = vunpack.c.l.b16 %v3079
        %v3239 = vunpack.c.h.b16 %v3079
        %v3240 = vunpack.c.l.b16 %v3080
        %v3241 = vunpack.c.h.b16 %v3080
        %v3242 = vunpack.c.l.b16 %v3081
        %v3243 = vunpack.c.h.b16 %v3081
        %v3244 = vunpack.c.l.b16 %v3082
        %v3245 = vunpack.c.h.b16 %v3082
        %v3246 = vunpack.c.l.b16 %v3083
        %v3247 = vunpack.c.h.b16 %v3083
        %v3248 = vunpack.c.l.b16 %v3084
        %v3249 = vunpack.c.h.b16 %v3084
        %v3250 = vunpack.c.l.b16 %v3085
        %v3251 = vunpack.c.h.b16 %v3085
        %v3252 = vunpack.c.l.b16 %v3086
        %v3253 = vunpack.c.h.b16 %v3086
        %v3254 = vunpack.c.l.b16 %v3087
        %v3255 = vunpack.c.h.b16 %v3087
        %v3256 = vunpack.c.l.b16 %v3088
        %v3257 = vunpack.c.h.b16 %v3088
        %v3258 = vunpack.c.l.b16 %v3089
        %v3259 = vunpack.c.h.b16 %v3089
        %v3260 = vunpack.c.l.b16 %v3090
        %v3261 = vunpack.c.h.b16 %v3090
        %v3262 = vunpack.c.l.b16 %v3091
        %v3263 = vunpack.c.h.b16 %v3091
        %v3264 = vunpack.c.l.b16 %v3092
        %v3265 = vunpack.c.h.b16 %v3092
        %v3266 = vunpack.c.l.b16 %v3093
        %v3267 = vunpack.c.h.b16 %v3093
        %v3268 = vunpack.c.l.b16 %v3094
        %v3269 = vunpack.c.h.b16 %v3094
        %v3270 = vunpack.c.l.b16 %v3095
        %v3271 = vunpack.c.h.b16 %v3095
        %v3272 = vunpack.c.l.b16 %v3096
        %v3273 = vunpack.c.h.b16 %v3096
        %v3274 = vunpack.c.l.b16 %v3097
        %v3275 = vunpack.c.h.b16 %v3097
        %v3276 = vunpack.c.l.b16 %v3098
        %v3277 = vunpack.c.h.b16 %v3098
        %v3278 = vunpack.c.l.b16 %v3099
        %v3279 = vunpack.c.h.b16 %v3099
        %v3280 = vunpack.c.l.b16 %v3100
        %v3281 = vunpack.c.h.b16 %v3100
        %v3282 = vunpack.c.l.b16 %v3101
        %v3283 = vunpack.c.h.b16 %v3101
        %v3284 = vunpack.c.l.b16 %v3102
        %v3285 = vunpack.c.h.b16 %v3102
        %v3286 = vunpack.c.l.b16 %v3103
        %v3287 = vunpack.c.h.b16 %v3103
        %v3288 = vunpack.c.l.b16 %v3104
        %v3289 = vunpack.c.h.b16 %v3104
        %v3290 = vunpack.c.l.b16 %v3105
        %v3291 = vunpack.c.h.b16 %v3105
        %v3292 = vunpack.c.l.b16 %v3106
        %v3293 = vunpack.c.h.b16 %v3106
        %v3294 = vunpack.c.l.b16 %v3107
        %v3295 = vunpack.c.h.b16 %v3107
        %v3296 = vunpack.c.l.b16 %v3108
        %v3297 = vunpack.c.h.b16 %v3108
        %v3298 = vunpack.c.l.b16 %v3109
        %v3299 = vunpack.c.h.b16 %v3109
        %v3300 = vunpack.c.l.b16 %v3110
        %v3301 = vunpack.c.h.b16 %v3110
        %v3302 = vunpack.c.l.b16 %v3111
        %v3303 = vunpack.c.h.b16 %v3111
        %v3304 = vunpack.c.l.b16 %v3112
        %v3305 = vunpack.c.h.b16 %v3112
        %v3306 = vunpack.c.l.b16 %v3113
        %v3307 = vunpack.c.h.b16 %v3113
        %v3308 = vunpack.c.l.b16 %v3114
        %v3309 = vunpack.c.h.b16 %v3114
        %v3310 = vunpack.c.l.b16 %v3115
        %v3311 = vunpack.c.h.b16 %v3115
        %v3312 = vunpack.c.l.b16 %v3116
        %v3313 = vunpack.c.h.b16 %v3116
        %v3314 = vunpack.c.l.b16 %v3117
        %v3315 = vunpack.c.h.b16 %v3117
        %v3316 = vunpack.c.l.b16 %v3118
        %v3317 = vunpack.c.h.b16 %v3118
        %v3318 = vunpack.c.l.b16 %v3119
        %v3319 = vunpack.c.h.b16 %v3119
        %v3320 = vunpack.c.l.b16 %v3120
        %v3321 = vunpack.c.h.b16 %v3120
        %v3322 = vunpack.c.l.b16 %v3121
        %v3323 = vunpack.c.h.b16 %v3121
        %v3324 = vunpack.c.l.b16 %v3122
        %v3325 = vunpack.c.h.b16 %v3122
        %v3326 = vunpack.c.l.b16 %v3123
        %v3327 = vunpack.c.h.b16 %v3123
        %v3328 = vunpack.c.l.b16 %v3124
        %v3329 = vunpack.c.h.b16 %v3124
        %v3330 = vunpack.c.l.b16 %v3125
        %v3331 = vunpack.c.h.b16 %v3125
        %v3332 = vunpack.c.l.b16 %v3126
        %v3333 = vunpack.c.h.b16 %v3126
        %v3334 = vunpack.c.l.b16 %v3127
        %v3335 = vunpack.c.h.b16 %v3127
        %v3336 = vunpack.c.l.b16 %v3128
        %v3337 = vunpack.c.h.b16 %v3128
        %v3338 = vunpack.c.l.b16 %v3129
        %v3339 = vunpack.c.h.b16 %v3129
        %v3340 = vunpack.c.l.b16 %v3130
        %v3341 = vunpack.c.h.b16 %v3130
        %v3342 = vunpack.c.l.b16 %v3131
        %v3343 = vunpack.c.h.b16 %v3131
        %v3344 = vunpack.c.l.b16 %v3132
        %v3345 = vunpack.c.h.b16 %v3132
        %v3346 = vunpack.c.l.b16 %v3133
        %v3347 = vunpack.c.h.b16 %v3133
        %v3348 = vpack.c.b16 %v3224, %v3220
        %v3349 = vpack.c.b16 %v3225, %v3221
        %v3350 = vpack.c.b16 %v3226, %v3222
        %v3351 = vpack.c.b16 %v3227, %v3223
        %v3352 = vpack.c.b16 %v3232, %v3228
        %v3353 = vpack.c.b16 %v3233, %v3229
        %v3354 = vpack.c.b16 %v3234, %v3230
        %v3355 = vpack.c.b16 %v3235, %v3231
        %v3356 = vpack.c.b16 %v3240, %v3236
        %v3357 = vpack.c.b16 %v3241, %v3237
        %v3358 = vpack.c.b16 %v3242, %v3238
        %v3359 = vpack.c.b16 %v3243, %v3239
        %v3360 = vpack.c.b16 %v3248, %v3244
        %v3361 = vpack.c.b16 %v3249, %v3245
        %v3362 = vpack.c.b16 %v3250, %v3246
        %v3363 = vpack.c.b16 %v3251, %v3247
        %v3364 = vpack.c.b16 %v3256, %v3252
        %v3365 = vpack.c.b16 %v3257, %v3253
        %v3366 = vpack.c.b16 %v3258, %v3254
        %v3367 = vpack.c.b16 %v3259, %v3255
        %v3368 = vpack.c.b16 %v3264, %v3260
        %v3369 = vpack.c.b16 %v3265, %v3261
        %v3370 = vpack.c.b16 %v3266, %v3262
        %v3371 = vpack.c.b16 %v3267, %v3263
        %v3372 = vpack.c.b16 %v3272, %v3268
        %v3373 = vpack.c.b16 %v3273, %v3269
        %v3374 = vpack.c.b16 %v3274, %v3270
        %v3375 = vpack.c.b16 %v3275, %v3271
        %v3376 = vpack.c.b16 %v3280, %v3276
        %v3377 = vpack.c.b16 %v3281, %v3277
        %v3378 = vpack.c.b16 %v3282, %v3278
        %v3379 = vpack.c.b16 %v3283, %v3279
        %v3380 = vpack.c.b16 %v3288, %v3284
        %v3381 = vpack.c.b16 %v3289, %v3285
        %v3382 = vpack.c.b16 %v3290, %v3286
        %v3383 = vpack.c.b16 %v3291, %v3287
        %v3384 = vpack.c.b16 %v3296, %v3292
        %v3385 = vpack.c.b16 %v3297, %v3293
        %v3386 = vpack.c.b16 %v3298, %v3294
        %v3387 = vpack.c.b16 %v3299, %v3295
        %v3388 = vpack.c.b16 %v3304, %v3300
        %v3389 = vpack.c.b16 %v3305, %v3301
        %v3390 = vpack.c.b16 %v3306, %v3302
        %v3391 = vpack.c.b16 %v3307, %v3303
        %v3392 = vpack.c.b16 %v3312, %v3308
        %v3393 = vpack.c.b16 %v3313, %v3309
        %v3394 = vpack.c.b16 %v3314, %v3310
        %v3395 = vpack.c.b16 %v3315, %v3311
        %v3396 = vpack.c.b16 %v3320, %v3316
        %v3397 = vpack.c.b16 %v3321, %v3317
        %v3398 = vpack.c.b16 %v3322, %v3318
        %v3399 = vpack.c.b16 %v3323, %v3319
        %v3400 = vpack.c.b16 %v3328, %v3324
        %v3401 = vpack.c.b16 %v3329, %v3325
        %v3402 = vpack.c.b16 %v3330, %v3326
        %v3403 = vpack.c.b16 %v3331, %v3327
        %v3404 = vpack.c.b16 %v3336, %v3332
        %v3405 = vpack.c.b16 %v3337, %v3333
        %v3406 = vpack.c.b16 %v3338, %v3334
        %v3407 = vpack.c.b16 %v3339, %v3335
        %v3408 = vpack.c.b16 %v3344, %v3340
        %v3409 = vpack.c.b16 %v3345, %v3341
        %v3410 = vpack.c.b16 %v3346, %v3342
        %v3411 = vpack.c.b16 %v3347, %v3343
        %3476 = vmatprep.subr.bf16.mxu0 %v3377
        %3477 = vmatpush1.bf16.msra.mxu0 %v3376
        %3478 = vmatprep.subr.bf16.mxu0 %v3373
        %3479 = vmatpush1.bf16.msra.mxu0 %v3372
        %3480 = vmatprep.subr.bf16.mxu0 %v3369
        %3481 = vmatpush1.bf16.msra.mxu0 %v3368
        %3482 = vmatprep.subr.bf16.mxu0 %v3365
        %3483 = vmatpush1.bf16.msra.mxu0 %v3364
        %3484 = vmatprep.subr.bf16.mxu0 %v3361
        %3485 = vmatpush1.bf16.msra.mxu0 %v3360
        %3486 = vmatprep.subr.bf16.mxu0 %v3357
        %3487 = vmatpush1.bf16.msra.mxu0 %v3356
        %3488 = vmatprep.subr.bf16.mxu0 %v3353
        %3489 = vmatpush1.bf16.msra.mxu0 %v3352
        %3490 = vmatprep.subr.bf16.mxu0 %v3349
        %3491 = vmatpush1.bf16.msra.mxu0 %v3348
        %3492 = vmatprep.subr.bf16.mxu0 %v3409
        %3493 = vmatpush2.bf16.msra.mxu0 %v3408
        %3494 = vmatprep.subr.bf16.mxu0 %v3405
        %3495 = vmatpush2.bf16.msra.mxu0 %v3404
        %3496 = vmatprep.subr.bf16.mxu0 %v3401
        %3497 = vmatpush2.bf16.msra.mxu0 %v3400
        %3498 = vmatprep.subr.bf16.mxu0 %v3397
        %3499 = vmatpush2.bf16.msra.mxu0 %v3396
        %3500 = vmatprep.subr.bf16.mxu0 %v3393
        %3501 = vmatpush2.bf16.msra.mxu0 %v3392
        %3502 = vmatprep.subr.bf16.mxu0 %v3389
        %3503 = vmatpush2.bf16.msra.mxu0 %v3388
        %3504 = vmatprep.subr.bf16.mxu0 %v3385
        %3505 = vmatpush2.bf16.msra.mxu0 %v3384
        %3506 = vmatprep.subr.bf16.mxu0 %v3381
        %3507 = vmatpush2.bf16.msra.mxu0 %v3380
        %3508 = vmatprep.mubr.bf16.mxu0 %v3069
        %3509 = vmatmul.mubr.bf16.gmra.mxu0 %v3068
        %v3510 = vpop.f32.mrf.mxu0
        %v3511 = vadd.f32 %v3139, %v3510
        %v3512 = vpop.f32.mrf.mxu0
        %v3513 = vadd.f32 %v3143, %v3512
        %v3514 = vpop.f32.mrf.mxu0
        %v3515 = vpop.f32.mrf.mxu0
        %3516 = vdwg.mxu0
        %3517 = vmatprep.subr.bf16.mxu0 %v3379
        %3518 = vmatpush1.bf16.msra.mxu0 %v3378
        %3519 = vmatprep.subr.bf16.mxu0 %v3375
        %3520 = vmatpush1.bf16.msra.mxu0 %v3374
        %3521 = vmatprep.subr.bf16.mxu0 %v3371
        %3522 = vmatpush1.bf16.msra.mxu0 %v3370
        %3523 = vmatprep.subr.bf16.mxu0 %v3367
        %3524 = vmatpush1.bf16.msra.mxu0 %v3366
        %3525 = vmatprep.subr.bf16.mxu0 %v3363
        %3526 = vmatpush1.bf16.msra.mxu0 %v3362
        %3527 = vmatprep.subr.bf16.mxu0 %v3359
        %3528 = vmatpush1.bf16.msra.mxu0 %v3358
        %3529 = vmatprep.subr.bf16.mxu0 %v3355
        %3530 = vmatpush1.bf16.msra.mxu0 %v3354
        %3531 = vmatprep.subr.bf16.mxu0 %v3351
        %3532 = vmatpush1.bf16.msra.mxu0 %v3350
        %3533 = vmatprep.subr.bf16.mxu0 %v3411
        %3534 = vmatpush2.bf16.msra.mxu0 %v3410
        %3535 = vmatprep.subr.bf16.mxu0 %v3407
        %3536 = vmatpush2.bf16.msra.mxu0 %v3406
        %3537 = vmatprep.subr.bf16.mxu0 %v3403
        %3538 = vmatpush2.bf16.msra.mxu0 %v3402
        %3539 = vmatprep.subr.bf16.mxu0 %v3399
        %3540 = vmatpush2.bf16.msra.mxu0 %v3398
        %3541 = vmatprep.subr.bf16.mxu0 %v3395
        %3542 = vmatpush2.bf16.msra.mxu0 %v3394
        %3543 = vmatprep.subr.bf16.mxu0 %v3391
        %3544 = vmatpush2.bf16.msra.mxu0 %v3390
        %3545 = vmatprep.subr.bf16.mxu0 %v3387
        %3546 = vmatpush2.bf16.msra.mxu0 %v3386
        %3547 = vmatprep.subr.bf16.mxu0 %v3383
        %3548 = vmatpush2.bf16.msra.mxu0 %v3382
        %3549 = vmatprep.mubr.bf16.mxu0 %v3069
        %3550 = vmatmul.mubr.bf16.gmra.mxu0 %v3068
        %v3551 = vpop.f32.mrf.mxu0
        %v3552 = vadd.f32 %v3147, %v3551
        %v3553 = vpop.f32.mrf.mxu0
        %v3554 = vadd.f32 %v3151, %v3553
        %v3555 = vpop.f32.mrf.mxu0
        %v3556 = vpop.f32.mrf.mxu0
        %3557 = vdwg.mxu0
        %v3558 = vpack.c.bf16 %v3511, %v3511
        %v3559 = vpack.c.bf16 %v3513, %v3513
        %v3560 = vpack.c.bf16 %v3552, %v3552
        %v3561 = vpack.c.bf16 %v3554, %v3554
        %v3562 = vmax.bf16 %v3558, 0
        %v3563 = vmax.bf16 %v3559, 0
        %v3564 = vmax.bf16 %v3560, 0
        %v3565 = vmax.bf16 %v3561, 0
        %v3566 = vld [vmem:[#allocation10] sm:$0xff]
        %v3567 = vld [vmem:[#allocation10 + $0x8] sm:$0xff]
        %v3568 = vld [vmem:[#allocation10 + $0x10] sm:$0xff]
        %v3569 = vld [vmem:[#allocation10 + $0x18] sm:$0xf]
        %v3570 = vld [vmem:[#allocation10 + $0x1c] sm:$0xff]
        %v3571 = vld [vmem:[#allocation10 + $0x24] sm:$0xff]
        %v3572 = vld [vmem:[#allocation10 + $0x2c] sm:$0xff]
        %v3573 = vld [vmem:[#allocation10 + $0x34] sm:$0xf]
        %v3574 = vld [vmem:[#allocation10 + $0x38] sm:$0xff]
        %v3575 = vld [vmem:[#allocation10 + $0x40] sm:$0xff]
        %v3576 = vld [vmem:[#allocation10 + $0x48] sm:$0xff]
        %v3577 = vld [vmem:[#allocation10 + $0x50] sm:$0xf]
        %v3578 = vld [vmem:[#allocation10 + $0x54] sm:$0xff]
        %v3579 = vld [vmem:[#allocation10 + $0x5c] sm:$0xff]
        %v3580 = vld [vmem:[#allocation10 + $0x64] sm:$0xff]
        %v3581 = vld [vmem:[#allocation10 + $0x6c] sm:$0xf]
        %v3582 = vld [vmem:[#allocation10 + $0x70] sm:$0xff]
        %v3583 = vld [vmem:[#allocation10 + $0x78] sm:$0xff]
        %v3584 = vld [vmem:[#allocation10 + $0x80] sm:$0xff]
        %v3585 = vld [vmem:[#allocation10 + $0x88] sm:$0xf]
        %v3586 = vld [vmem:[#allocation10 + $0x8c] sm:$0xff]
        %v3587 = vld [vmem:[#allocation10 + $0x94] sm:$0xff]
        %v3588 = vld [vmem:[#allocation10 + $0x9c] sm:$0xff]
        %v3589 = vld [vmem:[#allocation10 + $0xa4] sm:$0xf]
        %v3590 = vld [vmem:[#allocation10 + $0xa8] sm:$0xff]
        %v3591 = vld [vmem:[#allocation10 + $0xb0] sm:$0xff]
        %v3592 = vld [vmem:[#allocation10 + $0xb8] sm:$0xff]
        %v3593 = vld [vmem:[#allocation10 + $0xc0] sm:$0xf]
        %v3594 = vld [vmem:[#allocation10 + $0xc4] sm:$0xff]
        %v3595 = vld [vmem:[#allocation10 + $0xcc] sm:$0xff]
        %v3596 = vld [vmem:[#allocation10 + $0xd4] sm:$0xff]
        %v3597 = vld [vmem:[#allocation10 + $0xdc] sm:$0xf]
        %v3598 = vld [vmem:[#allocation10 + $0xe0] sm:$0xff]
        %v3599 = vld [vmem:[#allocation10 + $0xe8] sm:$0xff]
        %v3600 = vld [vmem:[#allocation10 + $0xf0] sm:$0xff]
        %v3601 = vld [vmem:[#allocation10 + $0xf8] sm:$0xf]
        %v3602 = vld [vmem:[#allocation10 + $0xfc] sm:$0xff]
        %v3603 = vld [vmem:[#allocation10 + $0x104] sm:$0xff]
        %v3604 = vld [vmem:[#allocation10 + $0x10c] sm:$0xff]
        %v3605 = vld [vmem:[#allocation10 + $0x114] sm:$0xf]
        %v3606 = vld [vmem:[#allocation10 + $0x118] sm:$0xff]
        %v3607 = vld [vmem:[#allocation10 + $0x120] sm:$0xff]
        %v3608 = vld [vmem:[#allocation10 + $0x128] sm:$0xff]
        %v3609 = vld [vmem:[#allocation10 + $0x130] sm:$0xf]
        %v3610 = vld [vmem:[#allocation10 + $0x134] sm:$0xff]
        %v3611 = vld [vmem:[#allocation10 + $0x13c] sm:$0xff]
        %v3612 = vld [vmem:[#allocation10 + $0x144] sm:$0xff]
        %v3613 = vld [vmem:[#allocation10 + $0x14c] sm:$0xf]
        %v3614 = vld [vmem:[#allocation10 + $0x150] sm:$0xff]
        %v3615 = vld [vmem:[#allocation10 + $0x158] sm:$0xff]
        %v3616 = vld [vmem:[#allocation10 + $0x160] sm:$0xff]
        %v3617 = vld [vmem:[#allocation10 + $0x168] sm:$0xf]
        %v3618 = vld [vmem:[#allocation10 + $0x16c] sm:$0xff]
        %v3619 = vld [vmem:[#allocation10 + $0x174] sm:$0xff]
        %v3620 = vld [vmem:[#allocation10 + $0x17c] sm:$0xff]
        %v3621 = vld [vmem:[#allocation10 + $0x184] sm:$0xf]
        %v3622 = vld [vmem:[#allocation10 + $0x188] sm:$0xff]
        %v3623 = vld [vmem:[#allocation10 + $0x190] sm:$0xff]
        %v3624 = vld [vmem:[#allocation10 + $0x198] sm:$0xff]
        %v3625 = vld [vmem:[#allocation10 + $0x1a0] sm:$0xf]
        %v3626 = vld [vmem:[#allocation10 + $0x1a4] sm:$0xff]
        %v3627 = vld [vmem:[#allocation10 + $0x1ac] sm:$0xff]
        %v3628 = vld [vmem:[#allocation10 + $0x1b4] sm:$0xff]
        %v3629 = vld [vmem:[#allocation10 + $0x1bc] sm:$0xf]
        %v3630 = vld [vmem:[#allocation10 + $0x1c0] sm:$0xff]
        %v3631 = vld [vmem:[#allocation10 + $0x1c8] sm:$0xff]
        %v3632 = vld [vmem:[#allocation10 + $0x1d0] sm:$0xff]
        %v3633 = vld [vmem:[#allocation10 + $0x1d8] sm:$0xf]
        %v3634 = vld [vmem:[#allocation10 + $0x1dc] sm:$0xff]
        %v3635 = vld [vmem:[#allocation10 + $0x1e4] sm:$0xff]
        %v3636 = vld [vmem:[#allocation10 + $0x1ec] sm:$0xff]
        %v3637 = vld [vmem:[#allocation10 + $0x1f4] sm:$0xf]
        %v3638 = vld [vmem:[#allocation10 + $0x1f8] sm:$0xff]
        %v3639 = vld [vmem:[#allocation10 + $0x200] sm:$0xff]
        %v3640 = vld [vmem:[#allocation10 + $0x208] sm:$0xff]
        %v3641 = vld [vmem:[#allocation10 + $0x210] sm:$0xf]
        %v3642 = vld [vmem:[#allocation10 + $0x214] sm:$0xff]
        %v3643 = vld [vmem:[#allocation10 + $0x21c] sm:$0xff]
        %v3644 = vld [vmem:[#allocation10 + $0x224] sm:$0xff]
        %v3645 = vld [vmem:[#allocation10 + $0x22c] sm:$0xf]
        %v3646 = vld [vmem:[#allocation10 + $0x230] sm:$0xff]
        %v3647 = vld [vmem:[#allocation10 + $0x238] sm:$0xff]
        %v3648 = vld [vmem:[#allocation10 + $0x240] sm:$0xff]
        %v3649 = vld [vmem:[#allocation10 + $0x248] sm:$0xf]
        %v3650 = vld [vmem:[#allocation10 + $0x24c] sm:$0xff]
        %v3651 = vld [vmem:[#allocation10 + $0x254] sm:$0xff]
        %v3652 = vld [vmem:[#allocation10 + $0x25c] sm:$0xff]
        %v3653 = vld [vmem:[#allocation10 + $0x264] sm:$0xf]
        %v3654 = vld [vmem:[#allocation10 + $0x268] sm:$0xff]
        %v3655 = vld [vmem:[#allocation10 + $0x270] sm:$0xff]
        %v3656 = vld [vmem:[#allocation10 + $0x278] sm:$0xff]
        %v3657 = vld [vmem:[#allocation10 + $0x280] sm:$0xf]
        %v3658 = vld [vmem:[#allocation10 + $0x284] sm:$0xff]
        %v3659 = vld [vmem:[#allocation10 + $0x28c] sm:$0xff]
        %v3660 = vld [vmem:[#allocation10 + $0x294] sm:$0xff]
        %v3661 = vld [vmem:[#allocation10 + $0x29c] sm:$0xf]
        %v3662 = vld [vmem:[#allocation10 + $0x2a0] sm:$0xff]
        %v3663 = vld [vmem:[#allocation10 + $0x2a8] sm:$0xff]
        %v3664 = vld [vmem:[#allocation10 + $0x2b0] sm:$0xff]
        %v3665 = vld [vmem:[#allocation10 + $0x2b8] sm:$0xf]
        %v3666 = vld [vmem:[#allocation10 + $0x2bc] sm:$0xff]
        %v3667 = vld [vmem:[#allocation10 + $0x2c4] sm:$0xff]
        %v3668 = vld [vmem:[#allocation10 + $0x2cc] sm:$0xff]
        %v3669 = vld [vmem:[#allocation10 + $0x2d4] sm:$0xf]
        %v3670 = vld [vmem:[#allocation10 + $0x2d8] sm:$0xff]
        %v3671 = vld [vmem:[#allocation10 + $0x2e0] sm:$0xff]
        %v3672 = vld [vmem:[#allocation10 + $0x2e8] sm:$0xff]
        %v3673 = vld [vmem:[#allocation10 + $0x2f0] sm:$0xf]
        %v3674 = vld [vmem:[#allocation10 + $0x2f4] sm:$0xff]
        %v3675 = vld [vmem:[#allocation10 + $0x2fc] sm:$0xff]
        %v3676 = vld [vmem:[#allocation10 + $0x304] sm:$0xff]
        %v3677 = vld [vmem:[#allocation10 + $0x30c] sm:$0xf]
        %v3678 = vld [vmem:[#allocation10 + $0x310] sm:$0xff]
        %v3679 = vld [vmem:[#allocation10 + $0x318] sm:$0xff]
        %v3680 = vld [vmem:[#allocation10 + $0x320] sm:$0xff]
        %v3681 = vld [vmem:[#allocation10 + $0x328] sm:$0xf]
        %v3682 = vld [vmem:[#allocation10 + $0x32c] sm:$0xff]
        %v3683 = vld [vmem:[#allocation10 + $0x334] sm:$0xff]
        %v3684 = vld [vmem:[#allocation10 + $0x33c] sm:$0xff]
        %v3685 = vld [vmem:[#allocation10 + $0x344] sm:$0xf]
        %v3686 = vld [vmem:[#allocation10 + $0x348] sm:$0xff]
        %v3687 = vld [vmem:[#allocation10 + $0x350] sm:$0xff]
        %v3688 = vld [vmem:[#allocation10 + $0x358] sm:$0xff]
        %v3689 = vld [vmem:[#allocation10 + $0x360] sm:$0xf]
        %v3690 = vld [vmem:[#allocation10 + $0x364] sm:$0xff]
        %v3691 = vld [vmem:[#allocation10 + $0x36c] sm:$0xff]
        %v3692 = vld [vmem:[#allocation10 + $0x374] sm:$0xff]
        %v3693 = vld [vmem:[#allocation10 + $0x37c] sm:$0xf]
        %v3694 = vld [vmem:[#allocation10 + $0x380] sm:$0xff]
        %v3695 = vld [vmem:[#allocation10 + $0x388] sm:$0xff]
        %v3696 = vld [vmem:[#allocation10 + $0x390] sm:$0xff]
        %v3697 = vld [vmem:[#allocation10 + $0x398] sm:$0xf]
        %v3698 = vld [vmem:[#allocation10 + $0x39c] sm:$0xff]
        %v3699 = vld [vmem:[#allocation10 + $0x3a4] sm:$0xff]
        %v3700 = vld [vmem:[#allocation10 + $0x3ac] sm:$0xff]
        %v3701 = vld [vmem:[#allocation10 + $0x3b4] sm:$0xf]
        %v3702 = vld [vmem:[#allocation10 + $0x3b8] sm:$0xff]
        %v3703 = vld [vmem:[#allocation10 + $0x3c0] sm:$0xff]
        %v3704 = vld [vmem:[#allocation10 + $0x3c8] sm:$0xff]
        %v3705 = vld [vmem:[#allocation10 + $0x3d0] sm:$0xf]
        %v3706 = vld [vmem:[#allocation10 + $0x3d4] sm:$0xff]
        %v3707 = vld [vmem:[#allocation10 + $0x3dc] sm:$0xff]
        %v3708 = vld [vmem:[#allocation10 + $0x3e4] sm:$0xff]
        %v3709 = vld [vmem:[#allocation10 + $0x3ec] sm:$0xf]
        %v3710 = vld [vmem:[#allocation10 + $0x3f0] sm:$0xff]
        %v3711 = vld [vmem:[#allocation10 + $0x3f8] sm:$0xff]
        %v3712 = vld [vmem:[#allocation10 + $0x400] sm:$0xff]
        %v3713 = vld [vmem:[#allocation10 + $0x408] sm:$0xf]
        %v3714 = vld [vmem:[#allocation10 + $0x40c] sm:$0xff]
        %v3715 = vld [vmem:[#allocation10 + $0x414] sm:$0xff]
        %v3716 = vld [vmem:[#allocation10 + $0x41c] sm:$0xff]
        %v3717 = vld [vmem:[#allocation10 + $0x424] sm:$0xf]
        %v3718 = vld [vmem:[#allocation10 + $0x428] sm:$0xff]
        %v3719 = vld [vmem:[#allocation10 + $0x430] sm:$0xff]
        %v3720 = vld [vmem:[#allocation10 + $0x438] sm:$0xff]
        %v3721 = vld [vmem:[#allocation10 + $0x440] sm:$0xf]
        %v3722 = vld [vmem:[#allocation10 + $0x444] sm:$0xff]
        %v3723 = vld [vmem:[#allocation10 + $0x44c] sm:$0xff]
        %v3724 = vld [vmem:[#allocation10 + $0x454] sm:$0xff]
        %v3725 = vld [vmem:[#allocation10 + $0x45c] sm:$0xf]
        %v3726 = vld [vmem:[#allocation10 + $0x460] sm:$0xff]
        %v3727 = vld [vmem:[#allocation10 + $0x468] sm:$0xff]
        %v3728 = vld [vmem:[#allocation10 + $0x470] sm:$0xff]
        %v3729 = vld [vmem:[#allocation10 + $0x478] sm:$0xf]
        %v3730 = vld [vmem:[#allocation10 + $0x47c] sm:$0xff]
        %v3731 = vld [vmem:[#allocation10 + $0x484] sm:$0xff]
        %v3732 = vld [vmem:[#allocation10 + $0x48c] sm:$0xff]
        %v3733 = vld [vmem:[#allocation10 + $0x494] sm:$0xf]
        %v3734 = vld [vmem:[#allocation10 + $0x498] sm:$0xff]
        %v3735 = vld [vmem:[#allocation10 + $0x4a0] sm:$0xff]
        %v3736 = vld [vmem:[#allocation10 + $0x4a8] sm:$0xff]
        %v3737 = vld [vmem:[#allocation10 + $0x4b0] sm:$0xf]
        %v3738 = vld [vmem:[#allocation10 + $0x4b4] sm:$0xff]
        %v3739 = vld [vmem:[#allocation10 + $0x4bc] sm:$0xff]
        %v3740 = vld [vmem:[#allocation10 + $0x4c4] sm:$0xff]
        %v3741 = vld [vmem:[#allocation10 + $0x4cc] sm:$0xf]
        %v3742 = vld [vmem:[#allocation10 + $0x4d0] sm:$0xff]
        %v3743 = vld [vmem:[#allocation10 + $0x4d8] sm:$0xff]
        %v3744 = vld [vmem:[#allocation10 + $0x4e0] sm:$0xff]
        %v3745 = vld [vmem:[#allocation10 + $0x4e8] sm:$0xf]
        %v3746 = vld [vmem:[#allocation10 + $0x4ec] sm:$0xff]
        %v3747 = vld [vmem:[#allocation10 + $0x4f4] sm:$0xff]
        %v3748 = vld [vmem:[#allocation10 + $0x4fc] sm:$0xff]
        %v3749 = vld [vmem:[#allocation10 + $0x504] sm:$0xf]
        %v3750 = vld [vmem:[#allocation10 + $0x508] sm:$0xff]
        %v3751 = vld [vmem:[#allocation10 + $0x510] sm:$0xff]
        %v3752 = vld [vmem:[#allocation10 + $0x518] sm:$0xff]
        %v3753 = vld [vmem:[#allocation10 + $0x520] sm:$0xf]
        %v3754 = vld [vmem:[#allocation10 + $0x524] sm:$0xff]
        %v3755 = vld [vmem:[#allocation10 + $0x52c] sm:$0xff]
        %v3756 = vld [vmem:[#allocation10 + $0x534] sm:$0xff]
        %v3757 = vld [vmem:[#allocation10 + $0x53c] sm:$0xf]
        %v3758 = vld [vmem:[#allocation10 + $0x540] sm:$0xff]
        %v3759 = vld [vmem:[#allocation10 + $0x548] sm:$0xff]
        %v3760 = vld [vmem:[#allocation10 + $0x550] sm:$0xff]
        %v3761 = vld [vmem:[#allocation10 + $0x558] sm:$0xf]
        %v3762 = vld [vmem:[#allocation10 + $0x55c] sm:$0xff]
        %v3763 = vld [vmem:[#allocation10 + $0x564] sm:$0xff]
        %v3764 = vld [vmem:[#allocation10 + $0x56c] sm:$0xff]
        %v3765 = vld [vmem:[#allocation10 + $0x574] sm:$0xf]
        %v3766 = vld [vmem:[#allocation10 + $0x578] sm:$0xff]
        %v3767 = vld [vmem:[#allocation10 + $0x580] sm:$0xff]
        %v3768 = vld [vmem:[#allocation10 + $0x588] sm:$0xff]
        %v3769 = vld [vmem:[#allocation10 + $0x590] sm:$0xf]
        %v3770 = vld [vmem:[#allocation10 + $0x594] sm:$0xff]
        %v3771 = vld [vmem:[#allocation10 + $0x59c] sm:$0xff]
        %v3772 = vld [vmem:[#allocation10 + $0x5a4] sm:$0xff]
        %v3773 = vld [vmem:[#allocation10 + $0x5ac] sm:$0xf]
        %v3774 = vld [vmem:[#allocation10 + $0x5b0] sm:$0xff]
        %v3775 = vld [vmem:[#allocation10 + $0x5b8] sm:$0xff]
        %v3776 = vld [vmem:[#allocation10 + $0x5c0] sm:$0xff]
        %v3777 = vld [vmem:[#allocation10 + $0x5c8] sm:$0xf]
        %v3778 = vld [vmem:[#allocation10 + $0x5cc] sm:$0xff]
        %v3779 = vld [vmem:[#allocation10 + $0x5d4] sm:$0xff]
        %v3780 = vld [vmem:[#allocation10 + $0x5dc] sm:$0xff]
        %v3781 = vld [vmem:[#allocation10 + $0x5e4] sm:$0xf]
        %v3782 = vld [vmem:[#allocation10 + $0x5e8] sm:$0xff]
        %v3783 = vld [vmem:[#allocation10 + $0x5f0] sm:$0xff]
        %v3784 = vld [vmem:[#allocation10 + $0x5f8] sm:$0xff]
        %v3785 = vld [vmem:[#allocation10 + $0x600] sm:$0xf]
        %v3786 = vld [vmem:[#allocation10 + $0x604] sm:$0xff]
        %v3787 = vld [vmem:[#allocation10 + $0x60c] sm:$0xff]
        %v3788 = vld [vmem:[#allocation10 + $0x614] sm:$0xff]
        %v3789 = vld [vmem:[#allocation10 + $0x61c] sm:$0xf]
        %v3790 = vld [vmem:[#allocation10 + $0x620] sm:$0xff]
        %v3791 = vld [vmem:[#allocation10 + $0x628] sm:$0xff]
        %v3792 = vld [vmem:[#allocation10 + $0x630] sm:$0xff]
        %v3793 = vld [vmem:[#allocation10 + $0x638] sm:$0xf]
        %v3794 = vld [vmem:[#allocation10 + $0x63c] sm:$0xff]
        %v3795 = vld [vmem:[#allocation10 + $0x644] sm:$0xff]
        %v3796 = vld [vmem:[#allocation10 + $0x64c] sm:$0xff]
        %v3797 = vld [vmem:[#allocation10 + $0x654] sm:$0xf]
        %v3798 = vld [vmem:[#allocation10 + $0x658] sm:$0xff]
        %v3799 = vld [vmem:[#allocation10 + $0x660] sm:$0xff]
        %v3800 = vld [vmem:[#allocation10 + $0x668] sm:$0xff]
        %v3801 = vld [vmem:[#allocation10 + $0x670] sm:$0xf]
        %v3802 = vld [vmem:[#allocation10 + $0x674] sm:$0xff]
        %v3803 = vld [vmem:[#allocation10 + $0x67c] sm:$0xff]
        %v3804 = vld [vmem:[#allocation10 + $0x684] sm:$0xff]
        %v3805 = vld [vmem:[#allocation10 + $0x68c] sm:$0xf]
        %v3806 = vld [vmem:[#allocation10 + $0x690] sm:$0xff]
        %v3807 = vld [vmem:[#allocation10 + $0x698] sm:$0xff]
        %v3808 = vld [vmem:[#allocation10 + $0x6a0] sm:$0xff]
        %v3809 = vld [vmem:[#allocation10 + $0x6a8] sm:$0xf]
        %v3810 = vld [vmem:[#allocation10 + $0x6ac] sm:$0xff]
        %v3811 = vld [vmem:[#allocation10 + $0x6b4] sm:$0xff]
        %v3812 = vld [vmem:[#allocation10 + $0x6bc] sm:$0xff]
        %v3813 = vld [vmem:[#allocation10 + $0x6c4] sm:$0xf]
        %v3814 = vld [vmem:[#allocation10 + $0x6c8] sm:$0xff]
        %v3815 = vld [vmem:[#allocation10 + $0x6d0] sm:$0xff]
        %v3816 = vld [vmem:[#allocation10 + $0x6d8] sm:$0xff]
        %v3817 = vld [vmem:[#allocation10 + $0x6e0] sm:$0xf]
        %v3818 = vld [vmem:[#allocation10 + $0x6e4] sm:$0xff]
        %v3819 = vld [vmem:[#allocation10 + $0x6ec] sm:$0xff]
        %v3820 = vld [vmem:[#allocation10 + $0x6f4] sm:$0xff]
        %v3821 = vld [vmem:[#allocation10 + $0x6fc] sm:$0xf]
        %v3822 = vld [vmem:[#allocation11 + $0xe] sm:$0xff]
        %v3824 = vlaneseq
        %v3825 = vshrl.u32 %v3824, 7
        %v3826 = vsub.s32 0, %v3825
        %v3827 = vrot.slane %v3822, %v3826
        %v3828 = vlaneseq
        %v3829 = vshrl.u32 %v3828, 7
        %v3830 = vsub.s32 1, %v3829
        %v3831 = vrot.slane %v3822, %v3830
        %v3832 = vlaneseq
        %v3833 = vshrl.u32 %v3832, 7
        %v3834 = vsub.s32 2, %v3833
        %v3835 = vrot.slane %v3822, %v3834
        %v3836 = vlaneseq
        %v3837 = vshrl.u32 %v3836, 7
        %v3838 = vsub.s32 3, %v3837
        %v3839 = vrot.slane %v3822, %v3838
        %v3840 = vlaneseq
        %v3841 = vshrl.u32 %v3840, 7
        %v3842 = vsub.s32 4, %v3841
        %v3843 = vrot.slane %v3822, %v3842
        %v3844 = vlaneseq
        %v3845 = vshrl.u32 %v3844, 7
        %v3846 = vsub.s32 5, %v3845
        %v3847 = vrot.slane %v3822, %v3846
        %v3848 = vlaneseq
        %v3849 = vshrl.u32 %v3848, 7
        %v3850 = vsub.s32 6, %v3849
        %v3851 = vrot.slane %v3822, %v3850
        %v4115 = vunpack.c.l.b16 %v3566
        %v4116 = vunpack.c.h.b16 %v3566
        %v4117 = vunpack.c.l.b16 %v3567
        %v4118 = vunpack.c.h.b16 %v3567
        %v4119 = vunpack.c.l.b16 %v3568
        %v4120 = vunpack.c.h.b16 %v3568
        %v4121 = vunpack.c.l.b16 %v3569
        %v4122 = vunpack.c.l.b16 %v3570
        %v4123 = vunpack.c.h.b16 %v3570
        %v4124 = vunpack.c.l.b16 %v3571
        %v4125 = vunpack.c.h.b16 %v3571
        %v4126 = vunpack.c.l.b16 %v3572
        %v4127 = vunpack.c.h.b16 %v3572
        %v4128 = vunpack.c.l.b16 %v3573
        %v4129 = vunpack.c.l.b16 %v3574
        %v4130 = vunpack.c.h.b16 %v3574
        %v4131 = vunpack.c.l.b16 %v3575
        %v4132 = vunpack.c.h.b16 %v3575
        %v4133 = vunpack.c.l.b16 %v3576
        %v4134 = vunpack.c.h.b16 %v3576
        %v4135 = vunpack.c.l.b16 %v3577
        %v4136 = vunpack.c.l.b16 %v3578
        %v4137 = vunpack.c.h.b16 %v3578
        %v4138 = vunpack.c.l.b16 %v3579
        %v4139 = vunpack.c.h.b16 %v3579
        %v4140 = vunpack.c.l.b16 %v3580
        %v4141 = vunpack.c.h.b16 %v3580
        %v4142 = vunpack.c.l.b16 %v3581
        %v4143 = vunpack.c.l.b16 %v3582
        %v4144 = vunpack.c.h.b16 %v3582
        %v4145 = vunpack.c.l.b16 %v3583
        %v4146 = vunpack.c.h.b16 %v3583
        %v4147 = vunpack.c.l.b16 %v3584
        %v4148 = vunpack.c.h.b16 %v3584
        %v4149 = vunpack.c.l.b16 %v3585
        %v4150 = vunpack.c.l.b16 %v3586
        %v4151 = vunpack.c.h.b16 %v3586
        %v4152 = vunpack.c.l.b16 %v3587
        %v4153 = vunpack.c.h.b16 %v3587
        %v4154 = vunpack.c.l.b16 %v3588
        %v4155 = vunpack.c.h.b16 %v3588
        %v4156 = vunpack.c.l.b16 %v3589
        %v4157 = vunpack.c.l.b16 %v3590
        %v4158 = vunpack.c.h.b16 %v3590
        %v4159 = vunpack.c.l.b16 %v3591
        %v4160 = vunpack.c.h.b16 %v3591
        %v4161 = vunpack.c.l.b16 %v3592
        %v4162 = vunpack.c.h.b16 %v3592
        %v4163 = vunpack.c.l.b16 %v3593
        %v4164 = vunpack.c.l.b16 %v3594
        %v4165 = vunpack.c.h.b16 %v3594
        %v4166 = vunpack.c.l.b16 %v3595
        %v4167 = vunpack.c.h.b16 %v3595
        %v4168 = vunpack.c.l.b16 %v3596
        %v4169 = vunpack.c.h.b16 %v3596
        %v4170 = vunpack.c.l.b16 %v3597
        %v4171 = vunpack.c.l.b16 %v3598
        %v4172 = vunpack.c.h.b16 %v3598
        %v4173 = vunpack.c.l.b16 %v3599
        %v4174 = vunpack.c.h.b16 %v3599
        %v4175 = vunpack.c.l.b16 %v3600
        %v4176 = vunpack.c.h.b16 %v3600
        %v4177 = vunpack.c.l.b16 %v3601
        %v4178 = vunpack.c.l.b16 %v3602
        %v4179 = vunpack.c.h.b16 %v3602
        %v4180 = vunpack.c.l.b16 %v3603
        %v4181 = vunpack.c.h.b16 %v3603
        %v4182 = vunpack.c.l.b16 %v3604
        %v4183 = vunpack.c.h.b16 %v3604
        %v4184 = vunpack.c.l.b16 %v3605
        %v4185 = vunpack.c.l.b16 %v3606
        %v4186 = vunpack.c.h.b16 %v3606
        %v4187 = vunpack.c.l.b16 %v3607
        %v4188 = vunpack.c.h.b16 %v3607
        %v4189 = vunpack.c.l.b16 %v3608
        %v4190 = vunpack.c.h.b16 %v3608
        %v4191 = vunpack.c.l.b16 %v3609
        %v4192 = vunpack.c.l.b16 %v3610
        %v4193 = vunpack.c.h.b16 %v3610
        %v4194 = vunpack.c.l.b16 %v3611
        %v4195 = vunpack.c.h.b16 %v3611
        %v4196 = vunpack.c.l.b16 %v3612
        %v4197 = vunpack.c.h.b16 %v3612
        %v4198 = vunpack.c.l.b16 %v3613
        %v4199 = vunpack.c.l.b16 %v3614
        %v4200 = vunpack.c.h.b16 %v3614
        %v4201 = vunpack.c.l.b16 %v3615
        %v4202 = vunpack.c.h.b16 %v3615
        %v4203 = vunpack.c.l.b16 %v3616
        %v4204 = vunpack.c.h.b16 %v3616
        %v4205 = vunpack.c.l.b16 %v3617
        %v4206 = vunpack.c.l.b16 %v3618
        %v4207 = vunpack.c.h.b16 %v3618
        %v4208 = vunpack.c.l.b16 %v3619
        %v4209 = vunpack.c.h.b16 %v3619
        %v4210 = vunpack.c.l.b16 %v3620
        %v4211 = vunpack.c.h.b16 %v3620
        %v4212 = vunpack.c.l.b16 %v3621
        %v4213 = vunpack.c.l.b16 %v3622
        %v4214 = vunpack.c.h.b16 %v3622
        %v4215 = vunpack.c.l.b16 %v3623
        %v4216 = vunpack.c.h.b16 %v3623
        %v4217 = vunpack.c.l.b16 %v3624
        %v4218 = vunpack.c.h.b16 %v3624
        %v4219 = vunpack.c.l.b16 %v3625
        %v4220 = vunpack.c.l.b16 %v3626
        %v4221 = vunpack.c.h.b16 %v3626
        %v4222 = vunpack.c.l.b16 %v3627
        %v4223 = vunpack.c.h.b16 %v3627
        %v4224 = vunpack.c.l.b16 %v3628
        %v4225 = vunpack.c.h.b16 %v3628
        %v4226 = vunpack.c.l.b16 %v3629
        %v4227 = vunpack.c.l.b16 %v3630
        %v4228 = vunpack.c.h.b16 %v3630
        %v4229 = vunpack.c.l.b16 %v3631
        %v4230 = vunpack.c.h.b16 %v3631
        %v4231 = vunpack.c.l.b16 %v3632
        %v4232 = vunpack.c.h.b16 %v3632
        %v4233 = vunpack.c.l.b16 %v3633
        %v4234 = vunpack.c.l.b16 %v3634
        %v4235 = vunpack.c.h.b16 %v3634
        %v4236 = vunpack.c.l.b16 %v3635
        %v4237 = vunpack.c.h.b16 %v3635
        %v4238 = vunpack.c.l.b16 %v3636
        %v4239 = vunpack.c.h.b16 %v3636
        %v4240 = vunpack.c.l.b16 %v3637
        %v4241 = vunpack.c.l.b16 %v3638
        %v4242 = vunpack.c.h.b16 %v3638
        %v4243 = vunpack.c.l.b16 %v3639
        %v4244 = vunpack.c.h.b16 %v3639
        %v4245 = vunpack.c.l.b16 %v3640
        %v4246 = vunpack.c.h.b16 %v3640
        %v4247 = vunpack.c.l.b16 %v3641
        %v4248 = vunpack.c.l.b16 %v3642
        %v4249 = vunpack.c.h.b16 %v3642
        %v4250 = vunpack.c.l.b16 %v3643
        %v4251 = vunpack.c.h.b16 %v3643
        %v4252 = vunpack.c.l.b16 %v3644
        %v4253 = vunpack.c.h.b16 %v3644
        %v4254 = vunpack.c.l.b16 %v3645
        %v4255 = vunpack.c.l.b16 %v3646
        %v4256 = vunpack.c.h.b16 %v3646
        %v4257 = vunpack.c.l.b16 %v3647
        %v4258 = vunpack.c.h.b16 %v3647
        %v4259 = vunpack.c.l.b16 %v3648
        %v4260 = vunpack.c.h.b16 %v3648
        %v4261 = vunpack.c.l.b16 %v3649
        %v4262 = vunpack.c.l.b16 %v3650
        %v4263 = vunpack.c.h.b16 %v3650
        %v4264 = vunpack.c.l.b16 %v3651
        %v4265 = vunpack.c.h.b16 %v3651
        %v4266 = vunpack.c.l.b16 %v3652
        %v4267 = vunpack.c.h.b16 %v3652
        %v4268 = vunpack.c.l.b16 %v3653
        %v4269 = vunpack.c.l.b16 %v3654
        %v4270 = vunpack.c.h.b16 %v3654
        %v4271 = vunpack.c.l.b16 %v3655
        %v4272 = vunpack.c.h.b16 %v3655
        %v4273 = vunpack.c.l.b16 %v3656
        %v4274 = vunpack.c.h.b16 %v3656
        %v4275 = vunpack.c.l.b16 %v3657
        %v4276 = vunpack.c.l.b16 %v3658
        %v4277 = vunpack.c.h.b16 %v3658
        %v4278 = vunpack.c.l.b16 %v3659
        %v4279 = vunpack.c.h.b16 %v3659
        %v4280 = vunpack.c.l.b16 %v3660
        %v4281 = vunpack.c.h.b16 %v3660
        %v4282 = vunpack.c.l.b16 %v3661
        %v4283 = vunpack.c.l.b16 %v3662
        %v4284 = vunpack.c.h.b16 %v3662
        %v4285 = vunpack.c.l.b16 %v3663
        %v4286 = vunpack.c.h.b16 %v3663
        %v4287 = vunpack.c.l.b16 %v3664
        %v4288 = vunpack.c.h.b16 %v3664
        %v4289 = vunpack.c.l.b16 %v3665
        %v4290 = vunpack.c.l.b16 %v3666
        %v4291 = vunpack.c.h.b16 %v3666
        %v4292 = vunpack.c.l.b16 %v3667
        %v4293 = vunpack.c.h.b16 %v3667
        %v4294 = vunpack.c.l.b16 %v3668
        %v4295 = vunpack.c.h.b16 %v3668
        %v4296 = vunpack.c.l.b16 %v3669
        %v4297 = vunpack.c.l.b16 %v3670
        %v4298 = vunpack.c.h.b16 %v3670
        %v4299 = vunpack.c.l.b16 %v3671
        %v4300 = vunpack.c.h.b16 %v3671
        %v4301 = vunpack.c.l.b16 %v3672
        %v4302 = vunpack.c.h.b16 %v3672
        %v4303 = vunpack.c.l.b16 %v3673
        %v4304 = vunpack.c.l.b16 %v3674
        %v4305 = vunpack.c.h.b16 %v3674
        %v4306 = vunpack.c.l.b16 %v3675
        %v4307 = vunpack.c.h.b16 %v3675
        %v4308 = vunpack.c.l.b16 %v3676
        %v4309 = vunpack.c.h.b16 %v3676
        %v4310 = vunpack.c.l.b16 %v3677
        %v4311 = vunpack.c.l.b16 %v3678
        %v4312 = vunpack.c.h.b16 %v3678
        %v4313 = vunpack.c.l.b16 %v3679
        %v4314 = vunpack.c.h.b16 %v3679
        %v4315 = vunpack.c.l.b16 %v3680
        %v4316 = vunpack.c.h.b16 %v3680
        %v4317 = vunpack.c.l.b16 %v3681
        %v4318 = vunpack.c.l.b16 %v3682
        %v4319 = vunpack.c.h.b16 %v3682
        %v4320 = vunpack.c.l.b16 %v3683
        %v4321 = vunpack.c.h.b16 %v3683
        %v4322 = vunpack.c.l.b16 %v3684
        %v4323 = vunpack.c.h.b16 %v3684
        %v4324 = vunpack.c.l.b16 %v3685
        %v4325 = vunpack.c.l.b16 %v3686
        %v4326 = vunpack.c.h.b16 %v3686
        %v4327 = vunpack.c.l.b16 %v3687
        %v4328 = vunpack.c.h.b16 %v3687
        %v4329 = vunpack.c.l.b16 %v3688
        %v4330 = vunpack.c.h.b16 %v3688
        %v4331 = vunpack.c.l.b16 %v3689
        %v4332 = vunpack.c.l.b16 %v3690
        %v4333 = vunpack.c.h.b16 %v3690
        %v4334 = vunpack.c.l.b16 %v3691
        %v4335 = vunpack.c.h.b16 %v3691
        %v4336 = vunpack.c.l.b16 %v3692
        %v4337 = vunpack.c.h.b16 %v3692
        %v4338 = vunpack.c.l.b16 %v3693
        %v4339 = vunpack.c.l.b16 %v3694
        %v4340 = vunpack.c.h.b16 %v3694
        %v4341 = vunpack.c.l.b16 %v3695
        %v4342 = vunpack.c.h.b16 %v3695
        %v4343 = vunpack.c.l.b16 %v3696
        %v4344 = vunpack.c.h.b16 %v3696
        %v4345 = vunpack.c.l.b16 %v3697
        %v4346 = vunpack.c.l.b16 %v3698
        %v4347 = vunpack.c.h.b16 %v3698
        %v4348 = vunpack.c.l.b16 %v3699
        %v4349 = vunpack.c.h.b16 %v3699
        %v4350 = vunpack.c.l.b16 %v3700
        %v4351 = vunpack.c.h.b16 %v3700
        %v4352 = vunpack.c.l.b16 %v3701
        %v4353 = vunpack.c.l.b16 %v3702
        %v4354 = vunpack.c.h.b16 %v3702
        %v4355 = vunpack.c.l.b16 %v3703
        %v4356 = vunpack.c.h.b16 %v3703
        %v4357 = vunpack.c.l.b16 %v3704
        %v4358 = vunpack.c.h.b16 %v3704
        %v4359 = vunpack.c.l.b16 %v3705
        %v4360 = vunpack.c.l.b16 %v3706
        %v4361 = vunpack.c.h.b16 %v3706
        %v4362 = vunpack.c.l.b16 %v3707
        %v4363 = vunpack.c.h.b16 %v3707
        %v4364 = vunpack.c.l.b16 %v3708
        %v4365 = vunpack.c.h.b16 %v3708
        %v4366 = vunpack.c.l.b16 %v3709
        %v4367 = vunpack.c.l.b16 %v3710
        %v4368 = vunpack.c.h.b16 %v3710
        %v4369 = vunpack.c.l.b16 %v3711
        %v4370 = vunpack.c.h.b16 %v3711
        %v4371 = vunpack.c.l.b16 %v3712
        %v4372 = vunpack.c.h.b16 %v3712
        %v4373 = vunpack.c.l.b16 %v3713
        %v4374 = vunpack.c.l.b16 %v3714
        %v4375 = vunpack.c.h.b16 %v3714
        %v4376 = vunpack.c.l.b16 %v3715
        %v4377 = vunpack.c.h.b16 %v3715
        %v4378 = vunpack.c.l.b16 %v3716
        %v4379 = vunpack.c.h.b16 %v3716
        %v4380 = vunpack.c.l.b16 %v3717
        %v4381 = vunpack.c.l.b16 %v3718
        %v4382 = vunpack.c.h.b16 %v3718
        %v4383 = vunpack.c.l.b16 %v3719
        %v4384 = vunpack.c.h.b16 %v3719
        %v4385 = vunpack.c.l.b16 %v3720
        %v4386 = vunpack.c.h.b16 %v3720
        %v4387 = vunpack.c.l.b16 %v3721
        %v4388 = vunpack.c.l.b16 %v3722
        %v4389 = vunpack.c.h.b16 %v3722
        %v4390 = vunpack.c.l.b16 %v3723
        %v4391 = vunpack.c.h.b16 %v3723
        %v4392 = vunpack.c.l.b16 %v3724
        %v4393 = vunpack.c.h.b16 %v3724
        %v4394 = vunpack.c.l.b16 %v3725
        %v4395 = vunpack.c.l.b16 %v3726
        %v4396 = vunpack.c.h.b16 %v3726
        %v4397 = vunpack.c.l.b16 %v3727
        %v4398 = vunpack.c.h.b16 %v3727
        %v4399 = vunpack.c.l.b16 %v3728
        %v4400 = vunpack.c.h.b16 %v3728
        %v4401 = vunpack.c.l.b16 %v3729
        %v4402 = vunpack.c.l.b16 %v3730
        %v4403 = vunpack.c.h.b16 %v3730
        %v4404 = vunpack.c.l.b16 %v3731
        %v4405 = vunpack.c.h.b16 %v3731
        %v4406 = vunpack.c.l.b16 %v3732
        %v4407 = vunpack.c.h.b16 %v3732
        %v4408 = vunpack.c.l.b16 %v3733
        %v4409 = vunpack.c.l.b16 %v3734
        %v4410 = vunpack.c.h.b16 %v3734
        %v4411 = vunpack.c.l.b16 %v3735
        %v4412 = vunpack.c.h.b16 %v3735
        %v4413 = vunpack.c.l.b16 %v3736
        %v4414 = vunpack.c.h.b16 %v3736
        %v4415 = vunpack.c.l.b16 %v3737
        %v4416 = vunpack.c.l.b16 %v3738
        %v4417 = vunpack.c.h.b16 %v3738
        %v4418 = vunpack.c.l.b16 %v3739
        %v4419 = vunpack.c.h.b16 %v3739
        %v4420 = vunpack.c.l.b16 %v3740
        %v4421 = vunpack.c.h.b16 %v3740
        %v4422 = vunpack.c.l.b16 %v3741
        %v4423 = vunpack.c.l.b16 %v3742
        %v4424 = vunpack.c.h.b16 %v3742
        %v4425 = vunpack.c.l.b16 %v3743
        %v4426 = vunpack.c.h.b16 %v3743
        %v4427 = vunpack.c.l.b16 %v3744
        %v4428 = vunpack.c.h.b16 %v3744
        %v4429 = vunpack.c.l.b16 %v3745
        %v4430 = vunpack.c.l.b16 %v3746
        %v4431 = vunpack.c.h.b16 %v3746
        %v4432 = vunpack.c.l.b16 %v3747
        %v4433 = vunpack.c.h.b16 %v3747
        %v4434 = vunpack.c.l.b16 %v3748
        %v4435 = vunpack.c.h.b16 %v3748
        %v4436 = vunpack.c.l.b16 %v3749
        %v4437 = vunpack.c.l.b16 %v3750
        %v4438 = vunpack.c.h.b16 %v3750
        %v4439 = vunpack.c.l.b16 %v3751
        %v4440 = vunpack.c.h.b16 %v3751
        %v4441 = vunpack.c.l.b16 %v3752
        %v4442 = vunpack.c.h.b16 %v3752
        %v4443 = vunpack.c.l.b16 %v3753
        %v4444 = vunpack.c.l.b16 %v3754
        %v4445 = vunpack.c.h.b16 %v3754
        %v4446 = vunpack.c.l.b16 %v3755
        %v4447 = vunpack.c.h.b16 %v3755
        %v4448 = vunpack.c.l.b16 %v3756
        %v4449 = vunpack.c.h.b16 %v3756
        %v4450 = vunpack.c.l.b16 %v3757
        %v4451 = vunpack.c.l.b16 %v3758
        %v4452 = vunpack.c.h.b16 %v3758
        %v4453 = vunpack.c.l.b16 %v3759
        %v4454 = vunpack.c.h.b16 %v3759
        %v4455 = vunpack.c.l.b16 %v3760
        %v4456 = vunpack.c.h.b16 %v3760
        %v4457 = vunpack.c.l.b16 %v3761
        %v4458 = vunpack.c.l.b16 %v3762
        %v4459 = vunpack.c.h.b16 %v3762
        %v4460 = vunpack.c.l.b16 %v3763
        %v4461 = vunpack.c.h.b16 %v3763
        %v4462 = vunpack.c.l.b16 %v3764
        %v4463 = vunpack.c.h.b16 %v3764
        %v4464 = vunpack.c.l.b16 %v3765
        %v4465 = vunpack.c.l.b16 %v3766
        %v4466 = vunpack.c.h.b16 %v3766
        %v4467 = vunpack.c.l.b16 %v3767
        %v4468 = vunpack.c.h.b16 %v3767
        %v4469 = vunpack.c.l.b16 %v3768
        %v4470 = vunpack.c.h.b16 %v3768
        %v4471 = vunpack.c.l.b16 %v3769
        %v4472 = vunpack.c.l.b16 %v3770
        %v4473 = vunpack.c.h.b16 %v3770
        %v4474 = vunpack.c.l.b16 %v3771
        %v4475 = vunpack.c.h.b16 %v3771
        %v4476 = vunpack.c.l.b16 %v3772
        %v4477 = vunpack.c.h.b16 %v3772
        %v4478 = vunpack.c.l.b16 %v3773
        %v4479 = vunpack.c.l.b16 %v3774
        %v4480 = vunpack.c.h.b16 %v3774
        %v4481 = vunpack.c.l.b16 %v3775
        %v4482 = vunpack.c.h.b16 %v3775
        %v4483 = vunpack.c.l.b16 %v3776
        %v4484 = vunpack.c.h.b16 %v3776
        %v4485 = vunpack.c.l.b16 %v3777
        %v4486 = vunpack.c.l.b16 %v3778
        %v4487 = vunpack.c.h.b16 %v3778
        %v4488 = vunpack.c.l.b16 %v3779
        %v4489 = vunpack.c.h.b16 %v3779
        %v4490 = vunpack.c.l.b16 %v3780
        %v4491 = vunpack.c.h.b16 %v3780
        %v4492 = vunpack.c.l.b16 %v3781
        %v4493 = vunpack.c.l.b16 %v3782
        %v4494 = vunpack.c.h.b16 %v3782
        %v4495 = vunpack.c.l.b16 %v3783
        %v4496 = vunpack.c.h.b16 %v3783
        %v4497 = vunpack.c.l.b16 %v3784
        %v4498 = vunpack.c.h.b16 %v3784
        %v4499 = vunpack.c.l.b16 %v3785
        %v4500 = vunpack.c.l.b16 %v3786
        %v4501 = vunpack.c.h.b16 %v3786
        %v4502 = vunpack.c.l.b16 %v3787
        %v4503 = vunpack.c.h.b16 %v3787
        %v4504 = vunpack.c.l.b16 %v3788
        %v4505 = vunpack.c.h.b16 %v3788
        %v4506 = vunpack.c.l.b16 %v3789
        %v4507 = vunpack.c.l.b16 %v3790
        %v4508 = vunpack.c.h.b16 %v3790
        %v4509 = vunpack.c.l.b16 %v3791
        %v4510 = vunpack.c.h.b16 %v3791
        %v4511 = vunpack.c.l.b16 %v3792
        %v4512 = vunpack.c.h.b16 %v3792
        %v4513 = vunpack.c.l.b16 %v3793
        %v4514 = vunpack.c.l.b16 %v3794
        %v4515 = vunpack.c.h.b16 %v3794
        %v4516 = vunpack.c.l.b16 %v3795
        %v4517 = vunpack.c.h.b16 %v3795
        %v4518 = vunpack.c.l.b16 %v3796
        %v4519 = vunpack.c.h.b16 %v3796
        %v4520 = vunpack.c.l.b16 %v3797
        %v4521 = vunpack.c.l.b16 %v3798
        %v4522 = vunpack.c.h.b16 %v3798
        %v4523 = vunpack.c.l.b16 %v3799
        %v4524 = vunpack.c.h.b16 %v3799
        %v4525 = vunpack.c.l.b16 %v3800
        %v4526 = vunpack.c.h.b16 %v3800
        %v4527 = vunpack.c.l.b16 %v3801
        %v4528 = vunpack.c.l.b16 %v3802
        %v4529 = vunpack.c.h.b16 %v3802
        %v4530 = vunpack.c.l.b16 %v3803
        %v4531 = vunpack.c.h.b16 %v3803
        %v4532 = vunpack.c.l.b16 %v3804
        %v4533 = vunpack.c.h.b16 %v3804
        %v4534 = vunpack.c.l.b16 %v3805
        %v4535 = vunpack.c.l.b16 %v3806
        %v4536 = vunpack.c.h.b16 %v3806
        %v4537 = vunpack.c.l.b16 %v3807
        %v4538 = vunpack.c.h.b16 %v3807
        %v4539 = vunpack.c.l.b16 %v3808
        %v4540 = vunpack.c.h.b16 %v3808
        %v4541 = vunpack.c.l.b16 %v3809
        %v4542 = vunpack.c.l.b16 %v3810
        %v4543 = vunpack.c.h.b16 %v3810
        %v4544 = vunpack.c.l.b16 %v3811
        %v4545 = vunpack.c.h.b16 %v3811
        %v4546 = vunpack.c.l.b16 %v3812
        %v4547 = vunpack.c.h.b16 %v3812
        %v4548 = vunpack.c.l.b16 %v3813
        %v4549 = vunpack.c.l.b16 %v3814
        %v4550 = vunpack.c.h.b16 %v3814
        %v4551 = vunpack.c.l.b16 %v3815
        %v4552 = vunpack.c.h.b16 %v3815
        %v4553 = vunpack.c.l.b16 %v3816
        %v4554 = vunpack.c.h.b16 %v3816
        %v4555 = vunpack.c.l.b16 %v3817
        %v4556 = vunpack.c.l.b16 %v3818
        %v4557 = vunpack.c.h.b16 %v3818
        %v4558 = vunpack.c.l.b16 %v3819
        %v4559 = vunpack.c.h.b16 %v3819
        %v4560 = vunpack.c.l.b16 %v3820
        %v4561 = vunpack.c.h.b16 %v3820
        %v4562 = vunpack.c.l.b16 %v3821
        %v4563 = vpack.c.b16 %v4122, %v4115
        %v4564 = vpack.c.b16 %v4123, %v4116
        %v4565 = vpack.c.b16 %v4124, %v4117
        %v4566 = vpack.c.b16 %v4125, %v4118
        %v4567 = vpack.c.b16 %v4126, %v4119
        %v4568 = vpack.c.b16 %v4127, %v4120
        %v4569 = vpack.c.b16 %v4128, %v4121
        %v4570 = vpack.c.b16 %v4136, %v4129
        %v4571 = vpack.c.b16 %v4137, %v4130
        %v4572 = vpack.c.b16 %v4138, %v4131
        %v4573 = vpack.c.b16 %v4139, %v4132
        %v4574 = vpack.c.b16 %v4140, %v4133
        %v4575 = vpack.c.b16 %v4141, %v4134
        %v4576 = vpack.c.b16 %v4142, %v4135
        %v4577 = vpack.c.b16 %v4150, %v4143
        %v4578 = vpack.c.b16 %v4151, %v4144
        %v4579 = vpack.c.b16 %v4152, %v4145
        %v4580 = vpack.c.b16 %v4153, %v4146
        %v4581 = vpack.c.b16 %v4154, %v4147
        %v4582 = vpack.c.b16 %v4155, %v4148
        %v4583 = vpack.c.b16 %v4156, %v4149
        %v4584 = vpack.c.b16 %v4164, %v4157
        %v4585 = vpack.c.b16 %v4165, %v4158
        %v4586 = vpack.c.b16 %v4166, %v4159
        %v4587 = vpack.c.b16 %v4167, %v4160
        %v4588 = vpack.c.b16 %v4168, %v4161
        %v4589 = vpack.c.b16 %v4169, %v4162
        %v4590 = vpack.c.b16 %v4170, %v4163
        %v4591 = vpack.c.b16 %v4178, %v4171
        %v4592 = vpack.c.b16 %v4179, %v4172
        %v4593 = vpack.c.b16 %v4180, %v4173
        %v4594 = vpack.c.b16 %v4181, %v4174
        %v4595 = vpack.c.b16 %v4182, %v4175
        %v4596 = vpack.c.b16 %v4183, %v4176
        %v4597 = vpack.c.b16 %v4184, %v4177
        %v4598 = vpack.c.b16 %v4192, %v4185
        %v4599 = vpack.c.b16 %v4193, %v4186
        %v4600 = vpack.c.b16 %v4194, %v4187
        %v4601 = vpack.c.b16 %v4195, %v4188
        %v4602 = vpack.c.b16 %v4196, %v4189
        %v4603 = vpack.c.b16 %v4197, %v4190
        %v4604 = vpack.c.b16 %v4198, %v4191
        %v4605 = vpack.c.b16 %v4206, %v4199
        %v4606 = vpack.c.b16 %v4207, %v4200
        %v4607 = vpack.c.b16 %v4208, %v4201
        %v4608 = vpack.c.b16 %v4209, %v4202
        %v4609 = vpack.c.b16 %v4210, %v4203
        %v4610 = vpack.c.b16 %v4211, %v4204
        %v4611 = vpack.c.b16 %v4212, %v4205
        %v4612 = vpack.c.b16 %v4220, %v4213
        %v4613 = vpack.c.b16 %v4221, %v4214
        %v4614 = vpack.c.b16 %v4222, %v4215
        %v4615 = vpack.c.b16 %v4223, %v4216
        %v4616 = vpack.c.b16 %v4224, %v4217
        %v4617 = vpack.c.b16 %v4225, %v4218
        %v4618 = vpack.c.b16 %v4226, %v4219
        %v4619 = vpack.c.b16 %v4234, %v4227
        %v4620 = vpack.c.b16 %v4235, %v4228
        %v4621 = vpack.c.b16 %v4236, %v4229
        %v4622 = vpack.c.b16 %v4237, %v4230
        %v4623 = vpack.c.b16 %v4238, %v4231
        %v4624 = vpack.c.b16 %v4239, %v4232
        %v4625 = vpack.c.b16 %v4240, %v4233
        %v4626 = vpack.c.b16 %v4248, %v4241
        %v4627 = vpack.c.b16 %v4249, %v4242
        %v4628 = vpack.c.b16 %v4250, %v4243
        %v4629 = vpack.c.b16 %v4251, %v4244
        %v4630 = vpack.c.b16 %v4252, %v4245
        %v4631 = vpack.c.b16 %v4253, %v4246
        %v4632 = vpack.c.b16 %v4254, %v4247
        %v4633 = vpack.c.b16 %v4262, %v4255
        %v4634 = vpack.c.b16 %v4263, %v4256
        %v4635 = vpack.c.b16 %v4264, %v4257
        %v4636 = vpack.c.b16 %v4265, %v4258
        %v4637 = vpack.c.b16 %v4266, %v4259
        %v4638 = vpack.c.b16 %v4267, %v4260
        %v4639 = vpack.c.b16 %v4268, %v4261
        %v4640 = vpack.c.b16 %v4276, %v4269
        %v4641 = vpack.c.b16 %v4277, %v4270
        %v4642 = vpack.c.b16 %v4278, %v4271
        %v4643 = vpack.c.b16 %v4279, %v4272
        %v4644 = vpack.c.b16 %v4280, %v4273
        %v4645 = vpack.c.b16 %v4281, %v4274
        %v4646 = vpack.c.b16 %v4282, %v4275
        %v4647 = vpack.c.b16 %v4290, %v4283
        %v4648 = vpack.c.b16 %v4291, %v4284
        %v4649 = vpack.c.b16 %v4292, %v4285
        %v4650 = vpack.c.b16 %v4293, %v4286
        %v4651 = vpack.c.b16 %v4294, %v4287
        %v4652 = vpack.c.b16 %v4295, %v4288
        %v4653 = vpack.c.b16 %v4296, %v4289
        %v4654 = vpack.c.b16 %v4304, %v4297
        %v4655 = vpack.c.b16 %v4305, %v4298
        %v4656 = vpack.c.b16 %v4306, %v4299
        %v4657 = vpack.c.b16 %v4307, %v4300
        %v4658 = vpack.c.b16 %v4308, %v4301
        %v4659 = vpack.c.b16 %v4309, %v4302
        %v4660 = vpack.c.b16 %v4310, %v4303
        %v4661 = vpack.c.b16 %v4318, %v4311
        %v4662 = vpack.c.b16 %v4319, %v4312
        %v4663 = vpack.c.b16 %v4320, %v4313
        %v4664 = vpack.c.b16 %v4321, %v4314
        %v4665 = vpack.c.b16 %v4322, %v4315
        %v4666 = vpack.c.b16 %v4323, %v4316
        %v4667 = vpack.c.b16 %v4324, %v4317
        %v4668 = vpack.c.b16 %v4332, %v4325
        %v4669 = vpack.c.b16 %v4333, %v4326
        %v4670 = vpack.c.b16 %v4334, %v4327
        %v4671 = vpack.c.b16 %v4335, %v4328
        %v4672 = vpack.c.b16 %v4336, %v4329
        %v4673 = vpack.c.b16 %v4337, %v4330
        %v4674 = vpack.c.b16 %v4338, %v4331
        %v4675 = vpack.c.b16 %v4346, %v4339
        %v4676 = vpack.c.b16 %v4347, %v4340
        %v4677 = vpack.c.b16 %v4348, %v4341
        %v4678 = vpack.c.b16 %v4349, %v4342
        %v4679 = vpack.c.b16 %v4350, %v4343
        %v4680 = vpack.c.b16 %v4351, %v4344
        %v4681 = vpack.c.b16 %v4352, %v4345
        %v4682 = vpack.c.b16 %v4360, %v4353
        %v4683 = vpack.c.b16 %v4361, %v4354
        %v4684 = vpack.c.b16 %v4362, %v4355
        %v4685 = vpack.c.b16 %v4363, %v4356
        %v4686 = vpack.c.b16 %v4364, %v4357
        %v4687 = vpack.c.b16 %v4365, %v4358
        %v4688 = vpack.c.b16 %v4366, %v4359
        %v4689 = vpack.c.b16 %v4374, %v4367
        %v4690 = vpack.c.b16 %v4375, %v4368
        %v4691 = vpack.c.b16 %v4376, %v4369
        %v4692 = vpack.c.b16 %v4377, %v4370
        %v4693 = vpack.c.b16 %v4378, %v4371
        %v4694 = vpack.c.b16 %v4379, %v4372
        %v4695 = vpack.c.b16 %v4380, %v4373
        %v4696 = vpack.c.b16 %v4388, %v4381
        %v4697 = vpack.c.b16 %v4389, %v4382
        %v4698 = vpack.c.b16 %v4390, %v4383
        %v4699 = vpack.c.b16 %v4391, %v4384
        %v4700 = vpack.c.b16 %v4392, %v4385
        %v4701 = vpack.c.b16 %v4393, %v4386
        %v4702 = vpack.c.b16 %v4394, %v4387
        %v4703 = vpack.c.b16 %v4402, %v4395
        %v4704 = vpack.c.b16 %v4403, %v4396
        %v4705 = vpack.c.b16 %v4404, %v4397
        %v4706 = vpack.c.b16 %v4405, %v4398
        %v4707 = vpack.c.b16 %v4406, %v4399
        %v4708 = vpack.c.b16 %v4407, %v4400
        %v4709 = vpack.c.b16 %v4408, %v4401
        %v4710 = vpack.c.b16 %v4416, %v4409
        %v4711 = vpack.c.b16 %v4417, %v4410
        %v4712 = vpack.c.b16 %v4418, %v4411
        %v4713 = vpack.c.b16 %v4419, %v4412
        %v4714 = vpack.c.b16 %v4420, %v4413
        %v4715 = vpack.c.b16 %v4421, %v4414
        %v4716 = vpack.c.b16 %v4422, %v4415
        %v4717 = vpack.c.b16 %v4430, %v4423
        %v4718 = vpack.c.b16 %v4431, %v4424
        %v4719 = vpack.c.b16 %v4432, %v4425
        %v4720 = vpack.c.b16 %v4433, %v4426
        %v4721 = vpack.c.b16 %v4434, %v4427
        %v4722 = vpack.c.b16 %v4435, %v4428
        %v4723 = vpack.c.b16 %v4436, %v4429
        %v4724 = vpack.c.b16 %v4444, %v4437
        %v4725 = vpack.c.b16 %v4445, %v4438
        %v4726 = vpack.c.b16 %v4446, %v4439
        %v4727 = vpack.c.b16 %v4447, %v4440
        %v4728 = vpack.c.b16 %v4448, %v4441
        %v4729 = vpack.c.b16 %v4449, %v4442
        %v4730 = vpack.c.b16 %v4450, %v4443
        %v4731 = vpack.c.b16 %v4458, %v4451
        %v4732 = vpack.c.b16 %v4459, %v4452
        %v4733 = vpack.c.b16 %v4460, %v4453
        %v4734 = vpack.c.b16 %v4461, %v4454
        %v4735 = vpack.c.b16 %v4462, %v4455
        %v4736 = vpack.c.b16 %v4463, %v4456
        %v4737 = vpack.c.b16 %v4464, %v4457
        %v4738 = vpack.c.b16 %v4472, %v4465
        %v4739 = vpack.c.b16 %v4473, %v4466
        %v4740 = vpack.c.b16 %v4474, %v4467
        %v4741 = vpack.c.b16 %v4475, %v4468
        %v4742 = vpack.c.b16 %v4476, %v4469
        %v4743 = vpack.c.b16 %v4477, %v4470
        %v4744 = vpack.c.b16 %v4478, %v4471
        %v4745 = vpack.c.b16 %v4486, %v4479
        %v4746 = vpack.c.b16 %v4487, %v4480
        %v4747 = vpack.c.b16 %v4488, %v4481
        %v4748 = vpack.c.b16 %v4489, %v4482
        %v4749 = vpack.c.b16 %v4490, %v4483
        %v4750 = vpack.c.b16 %v4491, %v4484
        %v4751 = vpack.c.b16 %v4492, %v4485
        %v4752 = vpack.c.b16 %v4500, %v4493
        %v4753 = vpack.c.b16 %v4501, %v4494
        %v4754 = vpack.c.b16 %v4502, %v4495
        %v4755 = vpack.c.b16 %v4503, %v4496
        %v4756 = vpack.c.b16 %v4504, %v4497
        %v4757 = vpack.c.b16 %v4505, %v4498
        %v4758 = vpack.c.b16 %v4506, %v4499
        %v4759 = vpack.c.b16 %v4514, %v4507
        %v4760 = vpack.c.b16 %v4515, %v4508
        %v4761 = vpack.c.b16 %v4516, %v4509
        %v4762 = vpack.c.b16 %v4517, %v4510
        %v4763 = vpack.c.b16 %v4518, %v4511
        %v4764 = vpack.c.b16 %v4519, %v4512
        %v4765 = vpack.c.b16 %v4520, %v4513
        %v4766 = vpack.c.b16 %v4528, %v4521
        %v4767 = vpack.c.b16 %v4529, %v4522
        %v4768 = vpack.c.b16 %v4530, %v4523
        %v4769 = vpack.c.b16 %v4531, %v4524
        %v4770 = vpack.c.b16 %v4532, %v4525
        %v4771 = vpack.c.b16 %v4533, %v4526
        %v4772 = vpack.c.b16 %v4534, %v4527
        %v4773 = vpack.c.b16 %v4542, %v4535
        %v4774 = vpack.c.b16 %v4543, %v4536
        %v4775 = vpack.c.b16 %v4544, %v4537
        %v4776 = vpack.c.b16 %v4545, %v4538
        %v4777 = vpack.c.b16 %v4546, %v4539
        %v4778 = vpack.c.b16 %v4547, %v4540
        %v4779 = vpack.c.b16 %v4548, %v4541
        %v4780 = vpack.c.b16 %v4556, %v4549
        %v4781 = vpack.c.b16 %v4557, %v4550
        %v4782 = vpack.c.b16 %v4558, %v4551
        %v4783 = vpack.c.b16 %v4559, %v4552
        %v4784 = vpack.c.b16 %v4560, %v4553
        %v4785 = vpack.c.b16 %v4561, %v4554
        %v4786 = vpack.c.b16 %v4562, %v4555
        %5011 = vmatprep.subr.bf16.mxu0 %v4613
        %5012 = vmatpush1.bf16.msra.mxu0 %v4612
        %5013 = vmatprep.subr.bf16.mxu0 %v4606
        %5014 = vmatpush1.bf16.msra.mxu0 %v4605
        %5015 = vmatprep.subr.bf16.mxu0 %v4599
        %5016 = vmatpush1.bf16.msra.mxu0 %v4598
        %5017 = vmatprep.subr.bf16.mxu0 %v4592
        %5018 = vmatpush1.bf16.msra.mxu0 %v4591
        %5019 = vmatprep.subr.bf16.mxu0 %v4585
        %5020 = vmatpush1.bf16.msra.mxu0 %v4584
        %5021 = vmatprep.subr.bf16.mxu0 %v4578
        %5022 = vmatpush1.bf16.msra.mxu0 %v4577
        %5023 = vmatprep.subr.bf16.mxu0 %v4571
        %5024 = vmatpush1.bf16.msra.mxu0 %v4570
        %5025 = vmatprep.subr.bf16.mxu0 %v4564
        %5026 = vmatpush1.bf16.msra.mxu0 %v4563
        %5027 = vmatprep.subr.bf16.mxu0 %v4669
        %5028 = vmatpush2.bf16.msra.mxu0 %v4668
        %5029 = vmatprep.subr.bf16.mxu0 %v4662
        %5030 = vmatpush2.bf16.msra.mxu0 %v4661
        %5031 = vmatprep.subr.bf16.mxu0 %v4655
        %5032 = vmatpush2.bf16.msra.mxu0 %v4654
        %5033 = vmatprep.subr.bf16.mxu0 %v4648
        %5034 = vmatpush2.bf16.msra.mxu0 %v4647
        %5035 = vmatprep.subr.bf16.mxu0 %v4641
        %5036 = vmatpush2.bf16.msra.mxu0 %v4640
        %5037 = vmatprep.subr.bf16.mxu0 %v4634
        %5038 = vmatpush2.bf16.msra.mxu0 %v4633
        %5039 = vmatprep.subr.bf16.mxu0 %v4627
        %5040 = vmatpush2.bf16.msra.mxu0 %v4626
        %5041 = vmatprep.subr.bf16.mxu0 %v4620
        %5042 = vmatpush2.bf16.msra.mxu0 %v4619
        %5043 = vmatprep.mubr.bf16.mxu0 %v3563
        %5044 = vmatmul.mubr.bf16.gmra.mxu0 %v3562
        %v5045 = vpop.f32.mrf.mxu0
        %v5046 = vadd.f32 %v3827, %v5045
        %v5047 = vpop.f32.mrf.mxu0
        %v5048 = vadd.f32 %v3831, %v5047
        %v5049 = vpop.f32.mrf.mxu0
        %v5050 = vpop.f32.mrf.mxu0
        %5051 = vdwg.mxu0
        %5052 = vmatprep.subr.bf16.mxu0 %v4725
        %5053 = vmatpush1.bf16.msra.mxu0 %v4724
        %5054 = vmatprep.subr.bf16.mxu0 %v4718
        %5055 = vmatpush1.bf16.msra.mxu0 %v4717
        %5056 = vmatprep.subr.bf16.mxu0 %v4711
        %5057 = vmatpush1.bf16.msra.mxu0 %v4710
        %5058 = vmatprep.subr.bf16.mxu0 %v4704
        %5059 = vmatpush1.bf16.msra.mxu0 %v4703
        %5060 = vmatprep.subr.bf16.mxu0 %v4697
        %5061 = vmatpush1.bf16.msra.mxu0 %v4696
        %5062 = vmatprep.subr.bf16.mxu0 %v4690
        %5063 = vmatpush1.bf16.msra.mxu0 %v4689
        %5064 = vmatprep.subr.bf16.mxu0 %v4683
        %5065 = vmatpush1.bf16.msra.mxu0 %v4682
        %5066 = vmatprep.subr.bf16.mxu0 %v4676
        %5067 = vmatpush1.bf16.msra.mxu0 %v4675
        %5068 = vmatprep.subr.bf16.mxu0 %v4781
        %5069 = vmatpush2.bf16.msra.mxu0 %v4780
        %5070 = vmatprep.subr.bf16.mxu0 %v4774
        %5071 = vmatpush2.bf16.msra.mxu0 %v4773
        %5072 = vmatprep.subr.bf16.mxu0 %v4767
        %5073 = vmatpush2.bf16.msra.mxu0 %v4766
        %5074 = vmatprep.subr.bf16.mxu0 %v4760
        %5075 = vmatpush2.bf16.msra.mxu0 %v4759
        %5076 = vmatprep.subr.bf16.mxu0 %v4753
        %5077 = vmatpush2.bf16.msra.mxu0 %v4752
        %5078 = vmatprep.subr.bf16.mxu0 %v4746
        %5079 = vmatpush2.bf16.msra.mxu0 %v4745
        %5080 = vmatprep.subr.bf16.mxu0 %v4739
        %5081 = vmatpush2.bf16.msra.mxu0 %v4738
        %5082 = vmatprep.subr.bf16.mxu0 %v4732
        %5083 = vmatpush2.bf16.msra.mxu0 %v4731
        %5084 = vmatprep.mubr.bf16.mxu0 %v3565
        %5085 = vmatmul.mubr.bf16.gmra.mxu0 %v3564
        %v5086 = vpop.f32.mrf.mxu0
        %v5087 = vadd.f32 %v5046, %v5086
        %v5088 = vpop.f32.mrf.mxu0
        %v5089 = vadd.f32 %v5048, %v5088
        %v5090 = vpop.f32.mrf.mxu0
        %v5091 = vpop.f32.mrf.mxu0
        %5092 = vdwg.mxu0
        %5093 = vmatprep.subr.bf16.mxu0 %v4615
        %5094 = vmatpush1.bf16.msra.mxu0 %v4614
        %5095 = vmatprep.subr.bf16.mxu0 %v4608
        %5096 = vmatpush1.bf16.msra.mxu0 %v4607
        %5097 = vmatprep.subr.bf16.mxu0 %v4601
        %5098 = vmatpush1.bf16.msra.mxu0 %v4600
        %5099 = vmatprep.subr.bf16.mxu0 %v4594
        %5100 = vmatpush1.bf16.msra.mxu0 %v4593
        %5101 = vmatprep.subr.bf16.mxu0 %v4587
        %5102 = vmatpush1.bf16.msra.mxu0 %v4586
        %5103 = vmatprep.subr.bf16.mxu0 %v4580
        %5104 = vmatpush1.bf16.msra.mxu0 %v4579
        %5105 = vmatprep.subr.bf16.mxu0 %v4573
        %5106 = vmatpush1.bf16.msra.mxu0 %v4572
        %5107 = vmatprep.subr.bf16.mxu0 %v4566
        %5108 = vmatpush1.bf16.msra.mxu0 %v4565
        %5109 = vmatprep.subr.bf16.mxu0 %v4671
        %5110 = vmatpush2.bf16.msra.mxu0 %v4670
        %5111 = vmatprep.subr.bf16.mxu0 %v4664
        %5112 = vmatpush2.bf16.msra.mxu0 %v4663
        %5113 = vmatprep.subr.bf16.mxu0 %v4657
        %5114 = vmatpush2.bf16.msra.mxu0 %v4656
        %5115 = vmatprep.subr.bf16.mxu0 %v4650
        %5116 = vmatpush2.bf16.msra.mxu0 %v4649
        %5117 = vmatprep.subr.bf16.mxu0 %v4643
        %5118 = vmatpush2.bf16.msra.mxu0 %v4642
        %5119 = vmatprep.subr.bf16.mxu0 %v4636
        %5120 = vmatpush2.bf16.msra.mxu0 %v4635
        %5121 = vmatprep.subr.bf16.mxu0 %v4629
        %5122 = vmatpush2.bf16.msra.mxu0 %v4628
        %5123 = vmatprep.subr.bf16.mxu0 %v4622
        %5124 = vmatpush2.bf16.msra.mxu0 %v4621
        %5125 = vmatprep.mubr.bf16.mxu0 %v3563
        %5126 = vmatmul.mubr.bf16.gmra.mxu0 %v3562
        %v5127 = vpop.f32.mrf.mxu0
        %v5128 = vadd.f32 %v3835, %v5127
        %v5129 = vpop.f32.mrf.mxu0
        %v5130 = vadd.f32 %v3839, %v5129
        %v5131 = vpop.f32.mrf.mxu0
        %v5132 = vpop.f32.mrf.mxu0
        %5133 = vdwg.mxu0
        %5134 = vmatprep.subr.bf16.mxu0 %v4727
        %5135 = vmatpush1.bf16.msra.mxu0 %v4726
        %5136 = vmatprep.subr.bf16.mxu0 %v4720
        %5137 = vmatpush1.bf16.msra.mxu0 %v4719
        %5138 = vmatprep.subr.bf16.mxu0 %v4713
        %5139 = vmatpush1.bf16.msra.mxu0 %v4712
        %5140 = vmatprep.subr.bf16.mxu0 %v4706
        %5141 = vmatpush1.bf16.msra.mxu0 %v4705
        %5142 = vmatprep.subr.bf16.mxu0 %v4699
        %5143 = vmatpush1.bf16.msra.mxu0 %v4698
        %5144 = vmatprep.subr.bf16.mxu0 %v4692
        %5145 = vmatpush1.bf16.msra.mxu0 %v4691
        %5146 = vmatprep.subr.bf16.mxu0 %v4685
        %5147 = vmatpush1.bf16.msra.mxu0 %v4684
        %5148 = vmatprep.subr.bf16.mxu0 %v4678
        %5149 = vmatpush1.bf16.msra.mxu0 %v4677
        %5150 = vmatprep.subr.bf16.mxu0 %v4783
        %5151 = vmatpush2.bf16.msra.mxu0 %v4782
        %5152 = vmatprep.subr.bf16.mxu0 %v4776
        %5153 = vmatpush2.bf16.msra.mxu0 %v4775
        %5154 = vmatprep.subr.bf16.mxu0 %v4769
        %5155 = vmatpush2.bf16.msra.mxu0 %v4768
        %5156 = vmatprep.subr.bf16.mxu0 %v4762
        %5157 = vmatpush2.bf16.msra.mxu0 %v4761
        %5158 = vmatprep.subr.bf16.mxu0 %v4755
        %5159 = vmatpush2.bf16.msra.mxu0 %v4754
        %5160 = vmatprep.subr.bf16.mxu0 %v4748
        %5161 = vmatpush2.bf16.msra.mxu0 %v4747
        %5162 = vmatprep.subr.bf16.mxu0 %v4741
        %5163 = vmatpush2.bf16.msra.mxu0 %v4740
        %5164 = vmatprep.subr.bf16.mxu0 %v4734
        %5165 = vmatpush2.bf16.msra.mxu0 %v4733
        %5166 = vmatprep.mubr.bf16.mxu0 %v3565
        %5167 = vmatmul.mubr.bf16.gmra.mxu0 %v3564
        %v5168 = vpop.f32.mrf.mxu0
        %v5169 = vadd.f32 %v5128, %v5168
        %v5170 = vpop.f32.mrf.mxu0
        %v5171 = vadd.f32 %v5130, %v5170
        %v5172 = vpop.f32.mrf.mxu0
        %v5173 = vpop.f32.mrf.mxu0
        %5174 = vdwg.mxu0
        %5175 = vmatprep.subr.bf16.mxu0 %v4617
        %5176 = vmatpush1.bf16.msra.mxu0 %v4616
        %5177 = vmatprep.subr.bf16.mxu0 %v4610
        %5178 = vmatpush1.bf16.msra.mxu0 %v4609
        %5179 = vmatprep.subr.bf16.mxu0 %v4603
        %5180 = vmatpush1.bf16.msra.mxu0 %v4602
        %5181 = vmatprep.subr.bf16.mxu0 %v4596
        %5182 = vmatpush1.bf16.msra.mxu0 %v4595
        %5183 = vmatprep.subr.bf16.mxu0 %v4589
        %5184 = vmatpush1.bf16.msra.mxu0 %v4588
        %5185 = vmatprep.subr.bf16.mxu0 %v4582
        %5186 = vmatpush1.bf16.msra.mxu0 %v4581
        %5187 = vmatprep.subr.bf16.mxu0 %v4575
        %5188 = vmatpush1.bf16.msra.mxu0 %v4574
        %5189 = vmatprep.subr.bf16.mxu0 %v4568
        %5190 = vmatpush1.bf16.msra.mxu0 %v4567
        %5191 = vmatprep.subr.bf16.mxu0 %v4673
        %5192 = vmatpush2.bf16.msra.mxu0 %v4672
        %5193 = vmatprep.subr.bf16.mxu0 %v4666
        %5194 = vmatpush2.bf16.msra.mxu0 %v4665
        %5195 = vmatprep.subr.bf16.mxu0 %v4659
        %5196 = vmatpush2.bf16.msra.mxu0 %v4658
        %5197 = vmatprep.subr.bf16.mxu0 %v4652
        %5198 = vmatpush2.bf16.msra.mxu0 %v4651
        %5199 = vmatprep.subr.bf16.mxu0 %v4645
        %5200 = vmatpush2.bf16.msra.mxu0 %v4644
        %5201 = vmatprep.subr.bf16.mxu0 %v4638
        %5202 = vmatpush2.bf16.msra.mxu0 %v4637
        %5203 = vmatprep.subr.bf16.mxu0 %v4631
        %5204 = vmatpush2.bf16.msra.mxu0 %v4630
        %5205 = vmatprep.subr.bf16.mxu0 %v4624
        %5206 = vmatpush2.bf16.msra.mxu0 %v4623
        %5207 = vmatprep.mubr.bf16.mxu0 %v3563
        %5208 = vmatmul.mubr.bf16.gmra.mxu0 %v3562
        %v5209 = vpop.f32.mrf.mxu0
        %v5210 = vadd.f32 %v3843, %v5209
        %v5211 = vpop.f32.mrf.mxu0
        %v5212 = vadd.f32 %v3847, %v5211
        %v5213 = vpop.f32.mrf.mxu0
        %v5214 = vpop.f32.mrf.mxu0
        %5215 = vdwg.mxu0
        %5216 = vmatprep.subr.bf16.mxu0 %v4729
        %5217 = vmatpush1.bf16.msra.mxu0 %v4728
        %5218 = vmatprep.subr.bf16.mxu0 %v4722
        %5219 = vmatpush1.bf16.msra.mxu0 %v4721
        %5220 = vmatprep.subr.bf16.mxu0 %v4715
        %5221 = vmatpush1.bf16.msra.mxu0 %v4714
        %5222 = vmatprep.subr.bf16.mxu0 %v4708
        %5223 = vmatpush1.bf16.msra.mxu0 %v4707
        %5224 = vmatprep.subr.bf16.mxu0 %v4701
        %5225 = vmatpush1.bf16.msra.mxu0 %v4700
        %5226 = vmatprep.subr.bf16.mxu0 %v4694
        %5227 = vmatpush1.bf16.msra.mxu0 %v4693
        %5228 = vmatprep.subr.bf16.mxu0 %v4687
        %5229 = vmatpush1.bf16.msra.mxu0 %v4686
        %5230 = vmatprep.subr.bf16.mxu0 %v4680
        %5231 = vmatpush1.bf16.msra.mxu0 %v4679
        %5232 = vmatprep.subr.bf16.mxu0 %v4785
        %5233 = vmatpush2.bf16.msra.mxu0 %v4784
        %5234 = vmatprep.subr.bf16.mxu0 %v4778
        %5235 = vmatpush2.bf16.msra.mxu0 %v4777
        %5236 = vmatprep.subr.bf16.mxu0 %v4771
        %5237 = vmatpush2.bf16.msra.mxu0 %v4770
        %5238 = vmatprep.subr.bf16.mxu0 %v4764
        %5239 = vmatpush2.bf16.msra.mxu0 %v4763
        %5240 = vmatprep.subr.bf16.mxu0 %v4757
        %5241 = vmatpush2.bf16.msra.mxu0 %v4756
        %5242 = vmatprep.subr.bf16.mxu0 %v4750
        %5243 = vmatpush2.bf16.msra.mxu0 %v4749
        %5244 = vmatprep.subr.bf16.mxu0 %v4743
        %5245 = vmatpush2.bf16.msra.mxu0 %v4742
        %5246 = vmatprep.subr.bf16.mxu0 %v4736
        %5247 = vmatpush2.bf16.msra.mxu0 %v4735
        %5248 = vmatprep.mubr.bf16.mxu0 %v3565
        %5249 = vmatmul.mubr.bf16.gmra.mxu0 %v3564
        %v5250 = vpop.f32.mrf.mxu0
        %v5251 = vadd.f32 %v5210, %v5250
        %v5252 = vpop.f32.mrf.mxu0
        %v5253 = vadd.f32 %v5212, %v5252
        %v5254 = vpop.f32.mrf.mxu0
        %v5255 = vpop.f32.mrf.mxu0
        %5256 = vdwg.mxu0
        %5257 = vmatprep.subr.bf16.mxu0 0
        %5258 = vmatpush1.bf16.msra.mxu0 %v4618
        %5259 = vmatprep.subr.bf16.mxu0 0
        %5260 = vmatpush1.bf16.msra.mxu0 %v4611
        %5261 = vmatprep.subr.bf16.mxu0 0
        %5262 = vmatpush1.bf16.msra.mxu0 %v4604
        %5263 = vmatprep.subr.bf16.mxu0 0
        %5264 = vmatpush1.bf16.msra.mxu0 %v4597
        %5265 = vmatprep.subr.bf16.mxu0 0
        %5266 = vmatpush1.bf16.msra.mxu0 %v4590
        %5267 = vmatprep.subr.bf16.mxu0 0
        %5268 = vmatpush1.bf16.msra.mxu0 %v4583
        %5269 = vmatprep.subr.bf16.mxu0 0
        %5270 = vmatpush1.bf16.msra.mxu0 %v4576
        %5271 = vmatprep.subr.bf16.mxu0 0
        %5272 = vmatpush1.bf16.msra.mxu0 %v4569
        %5273 = vmatprep.subr.bf16.mxu0 0
        %5274 = vmatpush2.bf16.msra.mxu0 %v4674
        %5275 = vmatprep.subr.bf16.mxu0 0
        %5276 = vmatpush2.bf16.msra.mxu0 %v4667
        %5277 = vmatprep.subr.bf16.mxu0 0
        %5278 = vmatpush2.bf16.msra.mxu0 %v4660
        %5279 = vmatprep.subr.bf16.mxu0 0
        %5280 = vmatpush2.bf16.msra.mxu0 %v4653
        %5281 = vmatprep.subr.bf16.mxu0 0
        %5282 = vmatpush2.bf16.msra.mxu0 %v4646
        %5283 = vmatprep.subr.bf16.mxu0 0
        %5284 = vmatpush2.bf16.msra.mxu0 %v4639
        %5285 = vmatprep.subr.bf16.mxu0 0
        %5286 = vmatpush2.bf16.msra.mxu0 %v4632
        %5287 = vmatprep.subr.bf16.mxu0 0
        %5288 = vmatpush2.bf16.msra.mxu0 %v4625
        %5289 = vmatprep.mubr.bf16.mxu0 %v3563
        %5290 = vmatmul.mubr.bf16.gmra.mxu0 %v3562
        %v5291 = vpop.f32.mrf.mxu0
        %v5292 = vadd.f32 %v3851, %v5291
        %v5293 = vpop.f32.mrf.mxu0
        %v5294 = vpop.f32.mrf.mxu0
        %v5295 = vpop.f32.mrf.mxu0
        %5296 = vdwg.mxu0
        %5297 = vmatprep.subr.bf16.mxu0 0
        %5298 = vmatpush1.bf16.msra.mxu0 %v4730
        %5299 = vmatprep.subr.bf16.mxu0 0
        %5300 = vmatpush1.bf16.msra.mxu0 %v4723
        %5301 = vmatprep.subr.bf16.mxu0 0
        %5302 = vmatpush1.bf16.msra.mxu0 %v4716
        %5303 = vmatprep.subr.bf16.mxu0 0
        %5304 = vmatpush1.bf16.msra.mxu0 %v4709
        %5305 = vmatprep.subr.bf16.mxu0 0
        %5306 = vmatpush1.bf16.msra.mxu0 %v4702
        %5307 = vmatprep.subr.bf16.mxu0 0
        %5308 = vmatpush1.bf16.msra.mxu0 %v4695
        %5309 = vmatprep.subr.bf16.mxu0 0
        %5310 = vmatpush1.bf16.msra.mxu0 %v4688
        %5311 = vmatprep.subr.bf16.mxu0 0
        %5312 = vmatpush1.bf16.msra.mxu0 %v4681
        %5313 = vmatprep.subr.bf16.mxu0 0
        %5314 = vmatpush2.bf16.msra.mxu0 %v4786
        %5315 = vmatprep.subr.bf16.mxu0 0
        %5316 = vmatpush2.bf16.msra.mxu0 %v4779
        %5317 = vmatprep.subr.bf16.mxu0 0
        %5318 = vmatpush2.bf16.msra.mxu0 %v4772
        %5319 = vmatprep.subr.bf16.mxu0 0
        %5320 = vmatpush2.bf16.msra.mxu0 %v4765
        %5321 = vmatprep.subr.bf16.mxu0 0
        %5322 = vmatpush2.bf16.msra.mxu0 %v4758
        %5323 = vmatprep.subr.bf16.mxu0 0
        %5324 = vmatpush2.bf16.msra.mxu0 %v4751
        %5325 = vmatprep.subr.bf16.mxu0 0
        %5326 = vmatpush2.bf16.msra.mxu0 %v4744
        %5327 = vmatprep.subr.bf16.mxu0 0
        %5328 = vmatpush2.bf16.msra.mxu0 %v4737
        %5329 = vmatprep.mubr.bf16.mxu0 %v3565
        %5330 = vmatmul.mubr.bf16.gmra.mxu0 %v3564
        %v5331 = vpop.f32.mrf.mxu0
        %v5332 = vadd.f32 %v5292, %v5331
        %v5333 = vpop.f32.mrf.mxu0
        %v5334 = vpop.f32.mrf.mxu0
        %v5335 = vpop.f32.mrf.mxu0
        %5336 = vdwg.mxu0
        %v5337 = vxor.u32 %v5087, 2147483648
        %v5338 = vxor.u32 %v5089, 2147483648
        %v5339 = vxor.u32 %v5169, 2147483648
        %v5340 = vxor.u32 %v5171, 2147483648
        %v5341 = vxor.u32 %v5251, 2147483648
        %v5342 = vxor.u32 %v5253, 2147483648
        %v5343 = vxor.u32 %v5332, 2147483648
        %v5344 = vmul.f32 %v5337, 1.442695
        %v5345 = vpow.pop %v5344
        %v5346 = vmul.f32 %v5338, 1.442695
        %v5347 = vpow.pop %v5346
        %v5348 = vmul.f32 %v5339, 1.442695
        %v5349 = vpow.pop %v5348
        %v5350 = vmul.f32 %v5340, 1.442695
        %v5351 = vpow.pop %v5350
        %v5352 = vmul.f32 %v5341, 1.442695
        %v5353 = vpow.pop %v5352
        %v5354 = vmul.f32 %v5342, 1.442695
        %v5355 = vpow.pop %v5354
        %v5356 = vmul.f32 %v5343, 1.442695
        %v5357 = vpow.pop %v5356
        %v5358 = vadd.f32 %v5345, 1.0
        %v5359 = vadd.f32 %v5347, 1.0
        %v5360 = vadd.f32 %v5349, 1.0
        %v5361 = vadd.f32 %v5351, 1.0
        %v5362 = vadd.f32 %v5353, 1.0
        %v5363 = vadd.f32 %v5355, 1.0
        %v5364 = vadd.f32 %v5357, 1.0
        %v5365 = vrcp.pop %v5358
        %v5366 = vmul.f32 1.0, %v5365
        %v5367 = vrcp.pop %v5359
        %v5368 = vmul.f32 1.0, %v5367
        %v5369 = vrcp.pop %v5360
        %v5370 = vmul.f32 1.0, %v5369
        %v5371 = vrcp.pop %v5361
        %v5372 = vmul.f32 1.0, %v5371
        %v5373 = vrcp.pop %v5362
        %v5374 = vmul.f32 1.0, %v5373
        %v5375 = vrcp.pop %v5363
        %v5376 = vmul.f32 1.0, %v5375
        %v5377 = vrcp.pop %v5364
        %v5378 = vmul.f32 1.0, %v5377
        %5379 = vst [vmem:[%s474] sm:$0xff] %v5366
        %5380 = vst [vmem:[%s474 + $0x8] sm:$0xff] %v5368
        %5381 = vst [vmem:[%s474 + $0x10] sm:$0xff] %v5370
        %5382 = vst [vmem:[%s474 + $0x18] sm:$0xff] %v5372
        %5383 = vst [vmem:[%s474 + $0x20] sm:$0xff] %v5374
        %5384 = vst [vmem:[%s474 + $0x28] sm:$0xff] %v5376
        %5385 = vst [vmem:[%s474 + $0x30] sm:$0xff] %v5378
        %vm5386 = vcmask 31744
        %5387 = vst.msk [vmem:[%s484] sm:$0xff] %vm5386, %v2854
        %5388 = vrot.lane.b32.xlu0 %v2871, 4
        %v5389 = vpop.permute.xlu0 %5388
        %vm5391 = vcmask 48160
        %5392 = vst.msk [vmem:[%s484] sm:$0xff] %vm5391, %v5389
        %vm5393 = vcmask 64560
        %5394 = vst.msk [vmem:[%s484] sm:$0xff] %vm5393, 0.0
        %s5395 = sand.u32 %s255, 1
        %s5396 = scalar_lea.sflag [#allocation4], %s5395
        %s5397 = sand.u32 %s255, 1
        %s5398 = smul.addr %s5397, 56
        %s5399 = scalar_lea.vmem [#allocation13], %s5398
        %p5400 = scmp.lt.s32.totalorder %s32, 1
        %s5401 = scalar_select %p5400, %s32, 1
        %s5402 = smul.addr %s5401, 8
        %s5403 = scalar_lea.vmem %s11, %s5402
        // Predicated region
        $region85: #{tpu_custom_call.1} parent=59 // pred_check
          %p5404 = pneg %p265
        $region86: #{tpu_custom_call.1} parent=59 // pred_check_branch
          %5406 = sbr.rel (%p5404) target = $region88
        $region87: #{tpu_custom_call.1} parent=59 // pred_region
          %s5408 = ssub.s32 896, 896
          %5409 = vsyncadd %s5396, %s5408
          %s5410 = smul.addr %s32, 7
          %s5411 = smul.addr %s5410, 128
          %s5412 = scalar_lea.hbm %s10, %s5411
          %s5414 = sshll.u32 %s5399, 4
          %s5415 = int_to_ptr.vmem [resolvable:$true] %s5414
          %5417 = dma.vmem_to_hbm [thread:$0]  %s5415, 896, %s5412, %s5396
        $region88: #{tpu_custom_call.1} parent=59 // pred_fallthru
          _
        // Predicated region
        $region89: #{tpu_custom_call.1} parent=59 // pred_check
          %p5418 = pneg %p291
        $region90: #{tpu_custom_call.1} parent=59 // pred_check_branch
          %5420 = sbr.rel (%p5418) target = $region92
        $region91: #{tpu_custom_call.1} parent=59 // pred_region
          _
        $region92: #{tpu_custom_call.1} parent=59 // pred_fallthru
          _
      $region60: #{tpu_custom_call.1} parent=5 // pred_fallthru
        _
      %p5421 = scmp.le.s32.totalorder 2, %s27
      // Predicated region
      $region93: #{tpu_custom_call.1} parent=5 // pred_check
        %p5422 = pneg %p5421
      $region94: #{tpu_custom_call.1} parent=5 // pred_check_branch
        %5424 = sbr.rel (%p5422) target = $region96
      $region95: #{tpu_custom_call.1} parent=5 // pred_region
        %s5425 = ssub.s32 %s27, 2
        // Predicated region
        $region97: #{tpu_custom_call.1} parent=95 // pred_check
          %p5426 = pneg %p271
        $region98: #{tpu_custom_call.1} parent=95 // pred_check_branch
          %5428 = sbr.rel (%p5426) target = $region100
        $region99: #{tpu_custom_call.1} parent=95 // pred_region
          %s5429 = sand.u32 %s256, 1
          %s5430 = scalar_lea.sflag [#allocation4], %s5429
          %s5431 = sand.u32 %s256, 1
          %s5432 = smul.addr %s5431, 56
          %s5433 = scalar_lea.vmem [#allocation13], %s5432
          %5434 = dma.done %s5430, 896
        $region100: #{tpu_custom_call.1} parent=95 // pred_fallthru
          _
        // Predicated region
        $region101: #{tpu_custom_call.1} parent=95 // pred_check
          %p5435 = pneg %p297
        $region102: #{tpu_custom_call.1} parent=95 // pred_check_branch
          %5437 = sbr.rel (%p5435) target = $region104
        $region103: #{tpu_custom_call.1} parent=95 // pred_region
          %p5438 = scmp.lt.s32.totalorder %s33, 1
          %s5439 = scalar_select %p5438, %s33, 1
          %s5440 = smul.addr %s5439, 8
          %s5441 = scalar_lea.vmem %s11, %s5440
        $region104: #{tpu_custom_call.1} parent=95 // pred_fallthru
          _
      $region96: #{tpu_custom_call.1} parent=5 // pred_fallthru
        _
    $region6: #{tpu_custom_call.1} parent=1 // loop_footer
      %s31 = sadd.s32 1, %s27
    $region7: #{tpu_custom_call.1} parent=1 // loop_footer_branch
      %26 = sbr.rel target = $region3
    $region8: #{tpu_custom_call.1} parent=1 // loop_exit
      _
    %5442 = vsyncpa [#allocation3], 1
    %s5443 = scalar_lea.sflag [#allocation3], 1
    %5444 = vsyncpa %s5443, 1
    %5445 = vsyncpa [#allocation6], 1
    %5446 = vsyncpa [#allocation9], 1
    %5447 = vsyncpa [#allocation12], 1
    %5448 = vsyncpa [#allocation4], 1
    %s5449 = scalar_lea.sflag [#allocation4], 1
    %5450 = vsyncpa %s5449, 1

</llo_original>
